<compile_context>
chip_gen: v7x
topology: tpu7x:2x2x1
jax: 0.10.0
libtpu: 0.0.40
codegen_flags: <defaults>
</compile_context>

<pallas_src>
import jax
import jax.numpy as jnp
from jax import lax
from jax.experimental import pallas as pl
from jax.experimental.pallas import tpu as pltpu

IN_FEATURES = 28 * 28   # 784
OUT_FEATURES = 10


def linear_kernel(x_ref, w_ref, b_ref, o_ref):
    # x_ref: (TILE_B, 784)   w_ref: (10, 784)   b_ref: (1, 10)   o_ref: (TILE_B, 10)
    # y = x @ W^T  (contract dim 1 of x with dim 1 of W), f32 accumulation on MXU.
    acc = lax.dot_general(
        x_ref[...], w_ref[...],
        dimension_numbers=(((1,), (1,)), ((), ())),
        preferred_element_type=jnp.float32,
    )
    o_ref[...] = (acc + b_ref[...].astype(jnp.float32)).astype(o_ref.dtype)


def simple_classifier_forward(x, weight, bias, *, tile_b=1024, min_pallas_batch=256):
    """Forward pass of SimpleClassifier.

    Args:
      x: any shape with 784 trailing elements per row (e.g. NCHW (B, 1, 28, 28)).
      weight: (10, 784)  -- PyTorch nn.Linear layout (out_features, in_features).
      bias:   (10,)
    Returns:
      logits: (B, 10) float32
    """
    x_flat = x.reshape(-1, IN_FEATURES)          # keep native dtype (f32 / bf16 / ...)
    batch = x_flat.shape[0]
    b2d = bias.reshape(1, OUT_FEATURES).astype(jnp.float32)

    # Tiny batches: plain XLA is faster than pallas_call fixed costs.
    if batch < min_pallas_batch:
        acc = lax.dot_general(
            x_flat, weight,
            dimension_numbers=(((1,), (1,)), ((), ())),
            preferred_element_type=jnp.float32,
        )
        return acc + b2d

    # Pad the batch to a multiple of the tile so every grid step is full.
    tile_b = min(tile_b, batch)
    padded_batch = pl.cdiv(batch, tile_b) * tile_b
    if padded_batch != batch:
        x_flat = jnp.pad(x_flat, ((0, padded_batch - batch), (0, 0)))

    grid = (padded_batch // tile_b,)

    out = pl.pallas_call(
        linear_kernel,
        out_shape=jax.ShapeDtypeStruct((padded_batch, OUT_FEATURES), jnp.float32),
        grid=grid,
        in_specs=[
            # x: one batch tile per grid step (double-buffered by the pipeline).
            pl.BlockSpec((tile_b, IN_FEATURES), lambda i: (i, 0)),
            # weight / bias: same block every step -> DMA'd once, stays resident.
            pl.BlockSpec((OUT_FEATURES, IN_FEATURES), lambda i: (0, 0)),
            pl.BlockSpec((1, OUT_FEATURES), lambda i: (0, 0)),
        ],
        out_specs=pl.BlockSpec((tile_b, OUT_FEATURES), lambda i: (i, 0)),
        compiler_params=pltpu.CompilerParams(
            # Batch tiles are independent -> shard across TensorCores on v7x.
            dimension_semantics=("parallel",),
        ),
    )(x_flat, weight, b2d)

    if padded_batch != batch:
        out = out[:batch]
    return out


if __name__ == "__main__":
    key = jax.random.PRNGKey(0)
    kx1, kx2, kx3, kw, kb = jax.random.split(key, 5)

    # Deterministic "parameters" (shapes match nn.Linear(784, 10)).
    bound = 1.0 / (IN_FEATURES ** 0.5)
    weight = jax.random.uniform(
        kw, (OUT_FEATURES, IN_FEATURES), jnp.float32, minval=-bound, maxval=bound
    )
    bias = jax.random.uniform(
        kb, (OUT_FEATURES,), jnp.float32, minval=-bound, maxval=bound
    )

    def reference(x):
        return x.reshape(-1, IN_FEATURES).astype(jnp.float32) @ weight.T + bias

    # 1) Small MNIST-like batch: NCHW (2, 1, 28, 28) -> fast fused XLA fallback.
    x_small = jax.random.normal(kx1, (2, 1, 28, 28), jnp.float32)
    out_small = simple_classifier_forward(x_small, weight, bias)
    jax.block_until_ready(out_small)
    assert out_small.shape == (2, OUT_FEATURES)
    assert jnp.allclose(out_small, reference(x_small), atol=1e-4, rtol=1e-4)

    # 2) Larger batch that exercises the tiled Pallas path (grid of 2 full tiles).
    x_big = jax.random.normal(kx2, (2048, 1, 28, 28), jnp.float32)
    out_big = simple_classifier_forward(x_big, weight, bias)
    jax.block_until_ready(out_big)
    assert out_big.shape == (2048, OUT_FEATURES)
    assert jnp.allclose(out_big, reference(x_big), atol=1e-4, rtol=1e-4)

    # 3) Non-divisible batch -> exercises the pad-and-slice path.
    x_odd = jax.random.normal(kx3, (1100, 1, 28, 28), jnp.float32)
    out_odd = simple_classifier_forward(x_odd, weight, bias)
    jax.block_until_ready(out_odd)
    assert out_odd.shape == (1100, OUT_FEATURES)
    assert jnp.allclose(out_odd, reference(x_odd), atol=1e-4, rtol=1e-4)

    print("KERNEL_OK")
</pallas_src>

<mosaic_0001>
module attributes {stable_mosaic.version = 11 : i64} {
  func.func @linear_kernel(%arg0: i32, %arg1: memref<1024x784xf32, #tpu.memory_space<vmem>>, %arg2: memref<10x784xf32, #tpu.memory_space<vmem>>, %arg3: memref<1x10xf32, #tpu.memory_space<vmem>>, %arg4: memref<1024x10xf32, #tpu.memory_space<vmem>>) attributes {dimension_semantics = [#tpu.dimension_semantics<parallel>], iteration_bounds = array<i64: 2>, scalar_prefetch = 0 : i64, scratch_operands = 0 : i64, tpu.core_type = #tpu.core_type<tc>, window_params = [{transform_indices = @transform_0, window_bounds = array<i64: 1024, 784>}, {pipeline_mode = #tpu.pipeline_mode<synchronous>, transform_indices = @transform_1, window_bounds = array<i64: 10, 784>}, {pipeline_mode = #tpu.pipeline_mode<synchronous>, transform_indices = @transform_2, window_bounds = array<i64: 1, 10>}, {transform_indices = @transform_3, window_bounds = array<i64: 1024, 10>}]} {
    %c0 = arith.constant 0 : index
    %c0_0 = arith.constant 0 : index
    %0 = vector.load %arg1[%c0, %c0_0] : memref<1024x784xf32, #tpu.memory_space<vmem>>, vector<1024x784xf32>
    %c0_1 = arith.constant 0 : index
    %c0_2 = arith.constant 0 : index
    %1 = vector.load %arg2[%c0_1, %c0_2] : memref<10x784xf32, #tpu.memory_space<vmem>>, vector<10x784xf32>
    %cst = arith.constant dense<0.000000e+00> : vector<1024x10xf32>
    %2 = tpu.matmul %0, %1, %cst {dimension_numbers = #tpu.dot_dimension_numbers<[1], [1], [0], [0], [0, 0, 1, 0], [], []>} : vector<1024x784xf32>, vector<10x784xf32>, vector<1024x10xf32> -> vector<1024x10xf32>
    %c0_3 = arith.constant 0 : index
    %c0_4 = arith.constant 0 : index
    %3 = vector.load %arg3[%c0_3, %c0_4] : memref<1x10xf32, #tpu.memory_space<vmem>>, vector<1x10xf32>
    %4 = vector.broadcast %3 : vector<1x10xf32> to vector<1024x10xf32>
    %5 = arith.addf %2, %4 : vector<1024x10xf32>
    %c0_5 = arith.constant 0 : index
    %c0_6 = arith.constant 0 : index
    %6 = vector.load %arg4[%c0_5, %c0_6] : memref<1024x10xf32, #tpu.memory_space<vmem>>, vector<1024x10xf32>
    tpu.vector_store %arg4[%c0_5, %c0_6], %5 {strides = array<i32>} : memref<1024x10xf32, #tpu.memory_space<vmem>>, vector<1024x10xf32>,
    return
  }
  func.func @transform_0(%arg0: i32) -> (i32, i32) {
    %c0_i32 = arith.constant 0 : i32
    %c0_i32_0 = arith.constant 0 : i32
    return %arg0, %c0_i32 : i32, i32
  }
  func.func @transform_1(%arg0: i32) -> (i32, i32) {
    %c0_i32 = arith.constant 0 : i32
    %c0_i32_0 = arith.constant 0 : i32
    %c0_i32_1 = arith.constant 0 : i32
    return %c0_i32, %c0_i32_0 : i32, i32
  }
  func.func @transform_2(%arg0: i32) -> (i32, i32) {
    %c0_i32 = arith.constant 0 : i32
    %c0_i32_0 = arith.constant 0 : i32
    %c0_i32_1 = arith.constant 0 : i32
    return %c0_i32, %c0_i32_0 : i32, i32
  }
  func.func @transform_3(%arg0: i32) -> (i32, i32) {
    %c0_i32 = arith.constant 0 : i32
    %c0_i32_0 = arith.constant 0 : i32
    return %arg0, %c0_i32 : i32, i32
  }
}

</mosaic_0001>

<llo_original>
// kernel: tpu_custom_call.1
$region0: #{tpu_custom_call.1}
  #allocation0 [shape = 'u32[]', space=smem, size = 0x4, offset = 0x4, fixed_abs, tag = 'smem constant byte address 0x4 - core index']
  #allocation1 [shape = 'u32[144,128]{1,0:T(1,128)}', space=vmem, size = 0x12000, scoped, tag = 'internal scratch']
  %s0 = inlined_call_operand.vmem [shape: f32[2048,784], index: 0, kind: input, shape index: {}]
  %s1 = inlined_call_operand.vmem [shape: f32[10,784], index: 1, kind: input, shape index: {}]
  %s2 = inlined_call_operand.vmem [shape: f32[1,10], index: 2, kind: input, shape index: {}]
  %s3 = inlined_call_operand.vmem [shape: f32[2048,10], index: 3, kind: output, shape index: {}]
  %s4 = sld [smem:[#allocation0]]
  $region45: #{tpu_custom_call.1} parent=0
    _
  %s6 = ssub.s32 1, %s4
  %s7 = scalar_select 0, %s6, %s4
  loop: start=0, step=1, limit=4
  $region2: #{tpu_custom_call.1} parent=0 // loop_pre_header
    _
  $region3: #{tpu_custom_call.1} parent=0 // loop_header
    %s9 = sphi 0, %s13
    %p10 = scmp.ge.s32.totalorder %s9, 4
    %s19 = sphi 0, %s21
    %s22 = sphi 0, %s19
    %s23 = sphi 0, %s22
    %s39 = sphi 0, %s23
    %s43 = sphi 0, %s43
    %s45 = sphi 0, %s43
    %s46 = sphi 0, %s45
    %s60 = sphi 0, %s46
    %s64 = sphi 0, %s64
    %s66 = sphi 0, %s64
    %s67 = sphi 0, %s66
    %s81 = sphi 0, %s67
    %s87 = sphi 0, %s89
    %s90 = sphi 0, %s87
    %s91 = sphi 0, %s90
    %s107 = sphi 0, %s91
  $region4: #{tpu_custom_call.1} parent=0 // loop_header_branch
    %12 = sbr.rel (%p10) target = $region8
  $region5: #{tpu_custom_call.1} parent=0 // loop_body
    %s14 = ssub.s32 %s9, 1
    %s15 = ssub.s32 %s9, 2
    %s16 = sadd.s32 %s9, 1
    %s17 = ssub.s32 %s9, %s16
    %p18 = scmp.eq.s32.totalorder %s17, 0
    %s20 = sadd.s32 %s19, 1
    %s21 = scalar_select %p18, %s19, %s20
    %p24 = pneg %p18
    %p25 = scmp.eq.s32.totalorder %s9, 1
    %p26 = por %p24, %p25
    %p27 = scmp.ne.s32.totalorder %s19, %s22
    %p28 = scmp.eq.s32.totalorder %s9, 0
    %p29 = por %p27, %p28
    %p30 = scmp.ne.s32.totalorder %s19, %s22
    %p31 = scmp.eq.s32.totalorder %s14, 1
    %p32 = por %p30, %p31
    %p33 = scmp.ne.s32.totalorder %s22, %s23
    %p34 = scmp.eq.s32.totalorder %s14, 0
    %p35 = por %p33, %p34
    %p36 = scmp.ne.s32.totalorder %s22, %s23
    %p37 = scmp.eq.s32.totalorder %s15, 1
    %p38 = por %p36, %p37
    %p40 = scmp.ne.s32.totalorder %s23, %s39
    %p41 = scmp.eq.s32.totalorder %s15, 0
    %p42 = por %p40, %p41
    %s44 = sadd.s32 %s43, 1
    %p47 = scmp.eq.s32.totalorder %s9, 1
    %p48 = scmp.ne.s32.totalorder %s43, %s45
    %p49 = scmp.eq.s32.totalorder %s9, 0
    %p50 = por %p48, %p49
    %p51 = scmp.ne.s32.totalorder %s43, %s45
    %p52 = scmp.eq.s32.totalorder %s14, 1
    %p53 = por %p51, %p52
    %p54 = scmp.ne.s32.totalorder %s45, %s46
    %p55 = scmp.eq.s32.totalorder %s14, 0
    %p56 = por %p54, %p55
    %p57 = scmp.ne.s32.totalorder %s45, %s46
    %p58 = scmp.eq.s32.totalorder %s15, 1
    %p59 = por %p57, %p58
    %p61 = scmp.ne.s32.totalorder %s46, %s60
    %p62 = scmp.eq.s32.totalorder %s15, 0
    %p63 = por %p61, %p62
    %s65 = sadd.s32 %s64, 1
    %p68 = scmp.eq.s32.totalorder %s9, 1
    %p69 = scmp.ne.s32.totalorder %s64, %s66
    %p70 = scmp.eq.s32.totalorder %s9, 0
    %p71 = por %p69, %p70
    %p72 = scmp.ne.s32.totalorder %s64, %s66
    %p73 = scmp.eq.s32.totalorder %s14, 1
    %p74 = por %p72, %p73
    %p75 = scmp.ne.s32.totalorder %s66, %s67
    %p76 = scmp.eq.s32.totalorder %s14, 0
    %p77 = por %p75, %p76
    %p78 = scmp.ne.s32.totalorder %s66, %s67
    %p79 = scmp.eq.s32.totalorder %s15, 1
    %p80 = por %p78, %p79
    %p82 = scmp.ne.s32.totalorder %s67, %s81
    %p83 = scmp.eq.s32.totalorder %s15, 0
    %p84 = por %p82, %p83
    %s85 = ssub.s32 %s9, %s16
    %p86 = scmp.eq.s32.totalorder %s85, 0
    %s88 = sadd.s32 %s87, 1
    %s89 = scalar_select %p86, %s87, %s88
    %p92 = pneg %p86
    %p93 = scmp.eq.s32.totalorder %s9, 1
    %p94 = por %p92, %p93
    %p95 = scmp.ne.s32.totalorder %s87, %s90
    %p96 = scmp.eq.s32.totalorder %s9, 0
    %p97 = por %p95, %p96
    %p98 = scmp.ne.s32.totalorder %s87, %s90
    %p99 = scmp.eq.s32.totalorder %s14, 1
    %p100 = por %p98, %p99
    %p101 = scmp.ne.s32.totalorder %s90, %s91
    %p102 = scmp.eq.s32.totalorder %s14, 0
    %p103 = por %p101, %p102
    %p104 = scmp.ne.s32.totalorder %s90, %s91
    %p105 = scmp.eq.s32.totalorder %s15, 1
    %p106 = por %p104, %p105
    %p108 = scmp.ne.s32.totalorder %s91, %s107
    %p109 = scmp.eq.s32.totalorder %s15, 0
    %p110 = por %p108, %p109
    %p111 = scmp.le.s32.totalorder 1, %s9
    %p112 = scmp.lt.s32.totalorder %s9, 3
    %p113 = pnand %p111, %p112
    %p114 = pneg %p113
    // Predicated region
    $region9: #{tpu_custom_call.1} parent=5 // pred_check
      _
    $region10: #{tpu_custom_call.1} parent=5 // pred_check_branch
      %116 = sbr.rel (%p113) target = $region12
    $region11: #{tpu_custom_call.1} parent=5 // pred_region
      %s117 = ssub.s32 %s9, 1
      // Predicated region
      $region13: #{tpu_custom_call.1} parent=11 // pred_check
        %p118 = pneg %p56
      $region14: #{tpu_custom_call.1} parent=11 // pred_check_branch
        %120 = sbr.rel (%p118) target = $region16
      $region15: #{tpu_custom_call.1} parent=11 // pred_region
        _
      $region16: #{tpu_custom_call.1} parent=11 // pred_fallthru
        _
      // Predicated region
      $region17: #{tpu_custom_call.1} parent=11 // pred_check
        %p121 = pneg %p77
      $region18: #{tpu_custom_call.1} parent=11 // pred_check_branch
        %123 = sbr.rel (%p121) target = $region20
      $region19: #{tpu_custom_call.1} parent=11 // pred_region
        _
      $region20: #{tpu_custom_call.1} parent=11 // pred_fallthru
        _
    $region12: #{tpu_custom_call.1} parent=5 // pred_fallthru
      _
    %p124 = scmp.lt.s32.totalorder %s9, 2
    // Predicated region
    $region21: #{tpu_custom_call.1} parent=5 // pred_check
      %p125 = pneg %p124
    $region22: #{tpu_custom_call.1} parent=5 // pred_check_branch
      %127 = sbr.rel (%p125) target = $region24
    $region23: #{tpu_custom_call.1} parent=5 // pred_region
      // Predicated region
      $region25: #{tpu_custom_call.1} parent=23 // pred_check
        %p128 = pneg %p29
      $region26: #{tpu_custom_call.1} parent=23 // pred_check_branch
        %130 = sbr.rel (%p128) target = $region28
      $region27: #{tpu_custom_call.1} parent=23 // pred_region
        %s131 = smul.u32 128, %s9
        %p132 = scmp.lt.s32.totalorder %s131, 255
        %s133 = scalar_select %p132, %s131, 255
        %s134 = smul.addr %s133, 7
        %s135 = smul.addr %s134, 8
        %s136 = scalar_lea.vmem %s0, %s135
        %s137 = smul.u32 128, %s9
      $region28: #{tpu_custom_call.1} parent=23 // pred_fallthru
        _
    $region24: #{tpu_custom_call.1} parent=5 // pred_fallthru
      _
    %p138 = scmp.le.s32.totalorder 1, %s9
    %p139 = scmp.lt.s32.totalorder %s9, 3
    %p140 = pnand %p138, %p139
    %p141 = pneg %p140
    // Predicated region
    $region29: #{tpu_custom_call.1} parent=5 // pred_check
      _
    $region30: #{tpu_custom_call.1} parent=5 // pred_check_branch
      %143 = sbr.rel (%p140) target = $region32
    $region31: #{tpu_custom_call.1} parent=5 // pred_region
      %s144 = ssub.s32 %s9, 1
      %s145 = smul.u32 128, %s14
      %p146 = scmp.lt.s32.totalorder %s145, 255
      %s147 = scalar_select %p146, %s145, 255
      %s148 = smul.addr %s147, 7
      %s149 = smul.addr %s148, 8
      %s150 = scalar_lea.vmem %s0, %s149
      %p151 = pneg %p35
      %p152 = pneg %p32
      %p153 = pneg %p56
      %p154 = pneg %p53
      %p155 = pneg %p77
      %p156 = pneg %p74
      %p157 = pneg %p103
      %p158 = pneg %p100
      %s159 = smul.u32 128, %s14
      %p160 = scmp.lt.s32.totalorder %s159, 255
      %s161 = scalar_select %p160, %s159, 255
      %s162 = smul.addr %s161, 8
      %s163 = scalar_lea.vmem %s3, %s162
      %s164 = smul.u32 128, %s14
      %p165 = scmp.lt.s32.totalorder %s164, 255
      %s166 = scalar_select %p165, %s164, 255
      %s167 = smul.addr %s166, 7
      %s168 = smul.addr %s167, 8
      %s169 = scalar_lea.vmem %s0, %s168
      %s170 = smul.u32 128, %s14
      %s171 = smul.u32 128, %s14
      %p172 = scmp.lt.s32.totalorder %s171, 255
      %s173 = scalar_select %p172, %s171, 255
      %s174 = smul.addr %s173, 8
      %s175 = scalar_lea.vmem %s3, %s174
      %s176 = smul.u32 128, %s14
      %v177 = vld [vmem:[%s169] sm:$0xff]
      %v178 = vld [vmem:[%s169 + $0x8] sm:$0xff]
      %v179 = vld [vmem:[%s169 + $0x10] sm:$0xff]
      %v180 = vld [vmem:[%s169 + $0x18] sm:$0xff]
      %v181 = vld [vmem:[%s169 + $0x20] sm:$0xff]
      %v182 = vld [vmem:[%s169 + $0x28] sm:$0xff]
      %v183 = vld [vmem:[%s169 + $0x30] sm:$0xff]
      %v184 = vld [vmem:[%s169 + $0x38] sm:$0xff]
      %v185 = vld [vmem:[%s169 + $0x40] sm:$0xff]
      %v186 = vld [vmem:[%s169 + $0x48] sm:$0xff]
      %v187 = vld [vmem:[%s169 + $0x50] sm:$0xff]
      %v188 = vld [vmem:[%s169 + $0x58] sm:$0xff]
      %v189 = vld [vmem:[%s169 + $0x60] sm:$0xff]
      %v190 = vld [vmem:[%s169 + $0x68] sm:$0xff]
      %v191 = vld [vmem:[%s169 + $0x70] sm:$0xff]
      %v192 = vld [vmem:[%s169 + $0x78] sm:$0xff]
      %v193 = vld [vmem:[%s169 + $0x80] sm:$0xff]
      %v194 = vld [vmem:[%s169 + $0x88] sm:$0xff]
      %v195 = vld [vmem:[%s169 + $0x90] sm:$0xff]
      %v196 = vld [vmem:[%s169 + $0x98] sm:$0xff]
      %v197 = vld [vmem:[%s169 + $0xa0] sm:$0xff]
      %v198 = vld [vmem:[%s169 + $0xa8] sm:$0xff]
      %v199 = vld [vmem:[%s169 + $0xb0] sm:$0xff]
      %v200 = vld [vmem:[%s169 + $0xb8] sm:$0xff]
      %v201 = vld [vmem:[%s169 + $0xc0] sm:$0xff]
      %v202 = vld [vmem:[%s169 + $0xc8] sm:$0xff]
      %v203 = vld [vmem:[%s169 + $0xd0] sm:$0xff]
      %v204 = vld [vmem:[%s169 + $0xd8] sm:$0xff]
      %v205 = vld [vmem:[%s169 + $0xe0] sm:$0xff]
      %v206 = vld [vmem:[%s169 + $0xe8] sm:$0xff]
      %v207 = vld [vmem:[%s169 + $0xf0] sm:$0xff]
      %v208 = vld [vmem:[%s169 + $0xf8] sm:$0xff]
      %v209 = vld [vmem:[%s169 + $0x100] sm:$0xff]
      %v210 = vld [vmem:[%s169 + $0x108] sm:$0xff]
      %v211 = vld [vmem:[%s169 + $0x110] sm:$0xff]
      %v212 = vld [vmem:[%s169 + $0x118] sm:$0xff]
      %v213 = vld [vmem:[%s169 + $0x120] sm:$0xff]
      %v214 = vld [vmem:[%s169 + $0x128] sm:$0xff]
      %v215 = vld [vmem:[%s169 + $0x130] sm:$0xff]
      %v216 = vld [vmem:[%s169 + $0x138] sm:$0xff]
      %v217 = vld [vmem:[%s169 + $0x140] sm:$0xff]
      %v218 = vld [vmem:[%s169 + $0x148] sm:$0xff]
      %v219 = vld [vmem:[%s169 + $0x150] sm:$0xff]
      %v220 = vld [vmem:[%s169 + $0x158] sm:$0xff]
      %v221 = vld [vmem:[%s169 + $0x160] sm:$0xff]
      %v222 = vld [vmem:[%s169 + $0x168] sm:$0xff]
      %v223 = vld [vmem:[%s169 + $0x170] sm:$0xff]
      %v224 = vld [vmem:[%s169 + $0x178] sm:$0xff]
      %v225 = vld [vmem:[%s169 + $0x180] sm:$0xff]
      %v226 = vld [vmem:[%s169 + $0x188] sm:$0xff]
      %v227 = vld [vmem:[%s169 + $0x190] sm:$0xff]
      %v228 = vld [vmem:[%s169 + $0x198] sm:$0xff]
      %v229 = vld [vmem:[%s169 + $0x1a0] sm:$0xff]
      %v230 = vld [vmem:[%s169 + $0x1a8] sm:$0xff]
      %v231 = vld [vmem:[%s169 + $0x1b0] sm:$0xff]
      %v232 = vld [vmem:[%s169 + $0x1b8] sm:$0xff]
      %v233 = vld [vmem:[%s169 + $0x1c0] sm:$0xff]
      %v234 = vld [vmem:[%s169 + $0x1c8] sm:$0xff]
      %v235 = vld [vmem:[%s169 + $0x1d0] sm:$0xff]
      %v236 = vld [vmem:[%s169 + $0x1d8] sm:$0xff]
      %v237 = vld [vmem:[%s169 + $0x1e0] sm:$0xff]
      %v238 = vld [vmem:[%s169 + $0x1e8] sm:$0xff]
      %v239 = vld [vmem:[%s169 + $0x1f0] sm:$0xff]
      %v240 = vld [vmem:[%s169 + $0x1f8] sm:$0xff]
      %v241 = vld [vmem:[%s169 + $0x200] sm:$0xff]
      %v242 = vld [vmem:[%s169 + $0x208] sm:$0xff]
      %v243 = vld [vmem:[%s169 + $0x210] sm:$0xff]
      %v244 = vld [vmem:[%s169 + $0x218] sm:$0xff]
      %v245 = vld [vmem:[%s169 + $0x220] sm:$0xff]
      %v246 = vld [vmem:[%s169 + $0x228] sm:$0xff]
      %v247 = vld [vmem:[%s169 + $0x230] sm:$0xff]
      %v248 = vld [vmem:[%s169 + $0x238] sm:$0xff]
      %v249 = vld [vmem:[%s169 + $0x240] sm:$0xff]
      %v250 = vld [vmem:[%s169 + $0x248] sm:$0xff]
      %v251 = vld [vmem:[%s169 + $0x250] sm:$0xff]
      %v252 = vld [vmem:[%s169 + $0x258] sm:$0xff]
      %v253 = vld [vmem:[%s169 + $0x260] sm:$0xff]
      %v254 = vld [vmem:[%s169 + $0x268] sm:$0xff]
      %v255 = vld [vmem:[%s169 + $0x270] sm:$0xff]
      %v256 = vld [vmem:[%s169 + $0x278] sm:$0xff]
      %v257 = vld [vmem:[%s169 + $0x280] sm:$0xff]
      %v258 = vld [vmem:[%s169 + $0x288] sm:$0xff]
      %v259 = vld [vmem:[%s169 + $0x290] sm:$0xff]
      %v260 = vld [vmem:[%s169 + $0x298] sm:$0xff]
      %v261 = vld [vmem:[%s169 + $0x2a0] sm:$0xff]
      %v262 = vld [vmem:[%s169 + $0x2a8] sm:$0xff]
      %v263 = vld [vmem:[%s169 + $0x2b0] sm:$0xff]
      %v264 = vld [vmem:[%s169 + $0x2b8] sm:$0xff]
      %v265 = vld [vmem:[%s169 + $0x2c0] sm:$0xff]
      %v266 = vld [vmem:[%s169 + $0x2c8] sm:$0xff]
      %v267 = vld [vmem:[%s169 + $0x2d0] sm:$0xff]
      %v268 = vld [vmem:[%s169 + $0x2d8] sm:$0xff]
      %v269 = vld [vmem:[%s169 + $0x2e0] sm:$0xff]
      %v270 = vld [vmem:[%s169 + $0x2e8] sm:$0xff]
      %v271 = vld [vmem:[%s169 + $0x2f0] sm:$0xff]
      %v272 = vld [vmem:[%s169 + $0x2f8] sm:$0xff]
      %v273 = vld [vmem:[%s169 + $0x300] sm:$0xff]
      %v274 = vld [vmem:[%s169 + $0x308] sm:$0xff]
      %v275 = vld [vmem:[%s169 + $0x310] sm:$0xff]
      %v276 = vld [vmem:[%s169 + $0x318] sm:$0xff]
      %v277 = vld [vmem:[%s169 + $0x320] sm:$0xff]
      %v278 = vld [vmem:[%s169 + $0x328] sm:$0xff]
      %v279 = vld [vmem:[%s169 + $0x330] sm:$0xff]
      %v280 = vld [vmem:[%s169 + $0x338] sm:$0xff]
      %v281 = vld [vmem:[%s169 + $0x340] sm:$0xff]
      %v282 = vld [vmem:[%s169 + $0x348] sm:$0xff]
      %v283 = vld [vmem:[%s169 + $0x350] sm:$0xff]
      %v284 = vld [vmem:[%s169 + $0x358] sm:$0xff]
      %v285 = vld [vmem:[%s169 + $0x360] sm:$0xff]
      %v286 = vld [vmem:[%s169 + $0x368] sm:$0xff]
      %v287 = vld [vmem:[%s169 + $0x370] sm:$0xff]
      %v288 = vld [vmem:[%s169 + $0x378] sm:$0xff]
      %v289 = vld [vmem:[%s169 + $0x380] sm:$0xff]
      %v290 = vld [vmem:[%s169 + $0x388] sm:$0xff]
      %v291 = vld [vmem:[%s169 + $0x390] sm:$0xff]
      %v292 = vld [vmem:[%s169 + $0x398] sm:$0xff]
      %v293 = vld [vmem:[%s169 + $0x3a0] sm:$0xff]
      %v294 = vld [vmem:[%s169 + $0x3a8] sm:$0xff]
      %v295 = vld [vmem:[%s169 + $0x3b0] sm:$0xff]
      %v296 = vld [vmem:[%s169 + $0x3b8] sm:$0xff]
      %v297 = vld [vmem:[%s169 + $0x3c0] sm:$0xff]
      %v298 = vld [vmem:[%s169 + $0x3c8] sm:$0xff]
      %v299 = vld [vmem:[%s169 + $0x3d0] sm:$0xff]
      %v300 = vld [vmem:[%s169 + $0x3d8] sm:$0xff]
      %v301 = vld [vmem:[%s169 + $0x3e0] sm:$0xff]
      %v302 = vld [vmem:[%s169 + $0x3e8] sm:$0xff]
      %v303 = vld [vmem:[%s169 + $0x3f0] sm:$0xff]
      %v304 = vld [vmem:[%s169 + $0x3f8] sm:$0xff]
      %v305 = vld [vmem:[%s169 + $0x400] sm:$0xff]
      %v306 = vld [vmem:[%s169 + $0x408] sm:$0xff]
      %v307 = vld [vmem:[%s169 + $0x410] sm:$0xff]
      %v308 = vld [vmem:[%s169 + $0x418] sm:$0xff]
      %v309 = vld [vmem:[%s169 + $0x420] sm:$0xff]
      %v310 = vld [vmem:[%s169 + $0x428] sm:$0xff]
      %v311 = vld [vmem:[%s169 + $0x430] sm:$0xff]
      %v312 = vld [vmem:[%s169 + $0x438] sm:$0xff]
      %v313 = vld [vmem:[%s169 + $0x440] sm:$0xff]
      %v314 = vld [vmem:[%s169 + $0x448] sm:$0xff]
      %v315 = vld [vmem:[%s169 + $0x450] sm:$0xff]
      %v316 = vld [vmem:[%s169 + $0x458] sm:$0xff]
      %v317 = vld [vmem:[%s169 + $0x460] sm:$0xff]
      %v318 = vld [vmem:[%s169 + $0x468] sm:$0xff]
      %v319 = vld [vmem:[%s169 + $0x470] sm:$0xff]
      %v320 = vld [vmem:[%s169 + $0x478] sm:$0xff]
      %v321 = vld [vmem:[%s169 + $0x480] sm:$0xff]
      %v322 = vld [vmem:[%s169 + $0x488] sm:$0xff]
      %v323 = vld [vmem:[%s169 + $0x490] sm:$0xff]
      %v324 = vld [vmem:[%s169 + $0x498] sm:$0xff]
      %v325 = vld [vmem:[%s169 + $0x4a0] sm:$0xff]
      %v326 = vld [vmem:[%s169 + $0x4a8] sm:$0xff]
      %v327 = vld [vmem:[%s169 + $0x4b0] sm:$0xff]
      %v328 = vld [vmem:[%s169 + $0x4b8] sm:$0xff]
      %v329 = vld [vmem:[%s169 + $0x4c0] sm:$0xff]
      %v330 = vld [vmem:[%s169 + $0x4c8] sm:$0xff]
      %v331 = vld [vmem:[%s169 + $0x4d0] sm:$0xff]
      %v332 = vld [vmem:[%s169 + $0x4d8] sm:$0xff]
      %v333 = vld [vmem:[%s169 + $0x4e0] sm:$0xff]
      %v334 = vld [vmem:[%s169 + $0x4e8] sm:$0xff]
      %v335 = vld [vmem:[%s169 + $0x4f0] sm:$0xff]
      %v336 = vld [vmem:[%s169 + $0x4f8] sm:$0xff]
      %v337 = vld [vmem:[%s169 + $0x500] sm:$0xff]
      %v338 = vld [vmem:[%s169 + $0x508] sm:$0xff]
      %v339 = vld [vmem:[%s169 + $0x510] sm:$0xff]
      %v340 = vld [vmem:[%s169 + $0x518] sm:$0xff]
      %v341 = vld [vmem:[%s169 + $0x520] sm:$0xff]
      %v342 = vld [vmem:[%s169 + $0x528] sm:$0xff]
      %v343 = vld [vmem:[%s169 + $0x530] sm:$0xff]
      %v344 = vld [vmem:[%s169 + $0x538] sm:$0xff]
      %v345 = vld [vmem:[%s169 + $0x540] sm:$0xff]
      %v346 = vld [vmem:[%s169 + $0x548] sm:$0xff]
      %v347 = vld [vmem:[%s169 + $0x550] sm:$0xff]
      %v348 = vld [vmem:[%s169 + $0x558] sm:$0xff]
      %v349 = vld [vmem:[%s169 + $0x560] sm:$0xff]
      %v350 = vld [vmem:[%s169 + $0x568] sm:$0xff]
      %v351 = vld [vmem:[%s169 + $0x570] sm:$0xff]
      %v352 = vld [vmem:[%s169 + $0x578] sm:$0xff]
      %v353 = vld [vmem:[%s169 + $0x580] sm:$0xff]
      %v354 = vld [vmem:[%s169 + $0x588] sm:$0xff]
      %v355 = vld [vmem:[%s169 + $0x590] sm:$0xff]
      %v356 = vld [vmem:[%s169 + $0x598] sm:$0xff]
      %v357 = vld [vmem:[%s169 + $0x5a0] sm:$0xff]
      %v358 = vld [vmem:[%s169 + $0x5a8] sm:$0xff]
      %v359 = vld [vmem:[%s169 + $0x5b0] sm:$0xff]
      %v360 = vld [vmem:[%s169 + $0x5b8] sm:$0xff]
      %v361 = vld [vmem:[%s169 + $0x5c0] sm:$0xff]
      %v362 = vld [vmem:[%s169 + $0x5c8] sm:$0xff]
      %v363 = vld [vmem:[%s169 + $0x5d0] sm:$0xff]
      %v364 = vld [vmem:[%s169 + $0x5d8] sm:$0xff]
      %v365 = vld [vmem:[%s169 + $0x5e0] sm:$0xff]
      %v366 = vld [vmem:[%s169 + $0x5e8] sm:$0xff]
      %v367 = vld [vmem:[%s169 + $0x5f0] sm:$0xff]
      %v368 = vld [vmem:[%s169 + $0x5f8] sm:$0xff]
      %v369 = vld [vmem:[%s169 + $0x600] sm:$0xff]
      %v370 = vld [vmem:[%s169 + $0x608] sm:$0xff]
      %v371 = vld [vmem:[%s169 + $0x610] sm:$0xff]
      %v372 = vld [vmem:[%s169 + $0x618] sm:$0xff]
      %v373 = vld [vmem:[%s169 + $0x620] sm:$0xff]
      %v374 = vld [vmem:[%s169 + $0x628] sm:$0xff]
      %v375 = vld [vmem:[%s169 + $0x630] sm:$0xff]
      %v376 = vld [vmem:[%s169 + $0x638] sm:$0xff]
      %v377 = vld [vmem:[%s169 + $0x640] sm:$0xff]
      %v378 = vld [vmem:[%s169 + $0x648] sm:$0xff]
      %v379 = vld [vmem:[%s169 + $0x650] sm:$0xff]
      %v380 = vld [vmem:[%s169 + $0x658] sm:$0xff]
      %v381 = vld [vmem:[%s169 + $0x660] sm:$0xff]
      %v382 = vld [vmem:[%s169 + $0x668] sm:$0xff]
      %v383 = vld [vmem:[%s169 + $0x670] sm:$0xff]
      %v384 = vld [vmem:[%s169 + $0x678] sm:$0xff]
      %v385 = vld [vmem:[%s169 + $0x680] sm:$0xff]
      %v386 = vld [vmem:[%s169 + $0x688] sm:$0xff]
      %v387 = vld [vmem:[%s169 + $0x690] sm:$0xff]
      %v388 = vld [vmem:[%s169 + $0x698] sm:$0xff]
      %v389 = vld [vmem:[%s169 + $0x6a0] sm:$0xff]
      %v390 = vld [vmem:[%s169 + $0x6a8] sm:$0xff]
      %v391 = vld [vmem:[%s169 + $0x6b0] sm:$0xff]
      %v392 = vld [vmem:[%s169 + $0x6b8] sm:$0xff]
      %v393 = vld [vmem:[%s169 + $0x6c0] sm:$0xff]
      %v394 = vld [vmem:[%s169 + $0x6c8] sm:$0xff]
      %v395 = vld [vmem:[%s169 + $0x6d0] sm:$0xff]
      %v396 = vld [vmem:[%s169 + $0x6d8] sm:$0xff]
      %v397 = vld [vmem:[%s169 + $0x6e0] sm:$0xff]
      %v398 = vld [vmem:[%s169 + $0x6e8] sm:$0xff]
      %v399 = vld [vmem:[%s169 + $0x6f0] sm:$0xff]
      %v400 = vld [vmem:[%s169 + $0x6f8] sm:$0xff]
      %v401 = vld [vmem:[%s169 + $0x700] sm:$0xff]
      %v402 = vld [vmem:[%s169 + $0x708] sm:$0xff]
      %v403 = vld [vmem:[%s169 + $0x710] sm:$0xff]
      %v404 = vld [vmem:[%s169 + $0x718] sm:$0xff]
      %v405 = vld [vmem:[%s169 + $0x720] sm:$0xff]
      %v406 = vld [vmem:[%s169 + $0x728] sm:$0xff]
      %v407 = vld [vmem:[%s169 + $0x730] sm:$0xff]
      %v408 = vld [vmem:[%s169 + $0x738] sm:$0xff]
      %v409 = vld [vmem:[%s169 + $0x740] sm:$0xff]
      %v410 = vld [vmem:[%s169 + $0x748] sm:$0xff]
      %v411 = vld [vmem:[%s169 + $0x750] sm:$0xff]
      %v412 = vld [vmem:[%s169 + $0x758] sm:$0xff]
      %v413 = vld [vmem:[%s169 + $0x760] sm:$0xff]
      %v414 = vld [vmem:[%s169 + $0x768] sm:$0xff]
      %v415 = vld [vmem:[%s169 + $0x770] sm:$0xff]
      %v416 = vld [vmem:[%s169 + $0x778] sm:$0xff]
      %v417 = vld [vmem:[%s169 + $0x780] sm:$0xff]
      %v418 = vld [vmem:[%s169 + $0x788] sm:$0xff]
      %v419 = vld [vmem:[%s169 + $0x790] sm:$0xff]
      %v420 = vld [vmem:[%s169 + $0x798] sm:$0xff]
      %v421 = vld [vmem:[%s169 + $0x7a0] sm:$0xff]
      %v422 = vld [vmem:[%s169 + $0x7a8] sm:$0xff]
      %v423 = vld [vmem:[%s169 + $0x7b0] sm:$0xff]
      %v424 = vld [vmem:[%s169 + $0x7b8] sm:$0xff]
      %v425 = vld [vmem:[%s169 + $0x7c0] sm:$0xff]
      %v426 = vld [vmem:[%s169 + $0x7c8] sm:$0xff]
      %v427 = vld [vmem:[%s169 + $0x7d0] sm:$0xff]
      %v428 = vld [vmem:[%s169 + $0x7d8] sm:$0xff]
      %v429 = vld [vmem:[%s169 + $0x7e0] sm:$0xff]
      %v430 = vld [vmem:[%s169 + $0x7e8] sm:$0xff]
      %v431 = vld [vmem:[%s169 + $0x7f0] sm:$0xff]
      %v432 = vld [vmem:[%s169 + $0x7f8] sm:$0xff]
      %v433 = vld [vmem:[%s169 + $0x800] sm:$0xff]
      %v434 = vld [vmem:[%s169 + $0x808] sm:$0xff]
      %v435 = vld [vmem:[%s169 + $0x810] sm:$0xff]
      %v436 = vld [vmem:[%s169 + $0x818] sm:$0xff]
      %v437 = vld [vmem:[%s169 + $0x820] sm:$0xff]
      %v438 = vld [vmem:[%s169 + $0x828] sm:$0xff]
      %v439 = vld [vmem:[%s169 + $0x830] sm:$0xff]
      %v440 = vld [vmem:[%s169 + $0x838] sm:$0xff]
      %v441 = vld [vmem:[%s169 + $0x840] sm:$0xff]
      %v442 = vld [vmem:[%s169 + $0x848] sm:$0xff]
      %v443 = vld [vmem:[%s169 + $0x850] sm:$0xff]
      %v444 = vld [vmem:[%s169 + $0x858] sm:$0xff]
      %v445 = vld [vmem:[%s169 + $0x860] sm:$0xff]
      %v446 = vld [vmem:[%s169 + $0x868] sm:$0xff]
      %v447 = vld [vmem:[%s169 + $0x870] sm:$0xff]
      %v448 = vld [vmem:[%s169 + $0x878] sm:$0xff]
      %v449 = vld [vmem:[%s169 + $0x880] sm:$0xff]
      %v450 = vld [vmem:[%s169 + $0x888] sm:$0xff]
      %v451 = vld [vmem:[%s169 + $0x890] sm:$0xff]
      %v452 = vld [vmem:[%s169 + $0x898] sm:$0xff]
      %v453 = vld [vmem:[%s169 + $0x8a0] sm:$0xff]
      %v454 = vld [vmem:[%s169 + $0x8a8] sm:$0xff]
      %v455 = vld [vmem:[%s169 + $0x8b0] sm:$0xff]
      %v456 = vld [vmem:[%s169 + $0x8b8] sm:$0xff]
      %v457 = vld [vmem:[%s169 + $0x8c0] sm:$0xff]
      %v458 = vld [vmem:[%s169 + $0x8c8] sm:$0xff]
      %v459 = vld [vmem:[%s169 + $0x8d0] sm:$0xff]
      %v460 = vld [vmem:[%s169 + $0x8d8] sm:$0xff]
      %v461 = vld [vmem:[%s169 + $0x8e0] sm:$0xff]
      %v462 = vld [vmem:[%s169 + $0x8e8] sm:$0xff]
      %v463 = vld [vmem:[%s169 + $0x8f0] sm:$0xff]
      %v464 = vld [vmem:[%s169 + $0x8f8] sm:$0xff]
      %v465 = vld [vmem:[%s169 + $0x900] sm:$0xff]
      %v466 = vld [vmem:[%s169 + $0x908] sm:$0xff]
      %v467 = vld [vmem:[%s169 + $0x910] sm:$0xff]
      %v468 = vld [vmem:[%s169 + $0x918] sm:$0xff]
      %v469 = vld [vmem:[%s169 + $0x920] sm:$0xff]
      %v470 = vld [vmem:[%s169 + $0x928] sm:$0xff]
      %v471 = vld [vmem:[%s169 + $0x930] sm:$0xff]
      %v472 = vld [vmem:[%s169 + $0x938] sm:$0xff]
      %v473 = vld [vmem:[%s169 + $0x940] sm:$0xff]
      %v474 = vld [vmem:[%s169 + $0x948] sm:$0xff]
      %v475 = vld [vmem:[%s169 + $0x950] sm:$0xff]
      %v476 = vld [vmem:[%s169 + $0x958] sm:$0xff]
      %v477 = vld [vmem:[%s169 + $0x960] sm:$0xff]
      %v478 = vld [vmem:[%s169 + $0x968] sm:$0xff]
      %v479 = vld [vmem:[%s169 + $0x970] sm:$0xff]
      %v480 = vld [vmem:[%s169 + $0x978] sm:$0xff]
      %v481 = vld [vmem:[%s169 + $0x980] sm:$0xff]
      %v482 = vld [vmem:[%s169 + $0x988] sm:$0xff]
      %v483 = vld [vmem:[%s169 + $0x990] sm:$0xff]
      %v484 = vld [vmem:[%s169 + $0x998] sm:$0xff]
      %v485 = vld [vmem:[%s169 + $0x9a0] sm:$0xff]
      %v486 = vld [vmem:[%s169 + $0x9a8] sm:$0xff]
      %v487 = vld [vmem:[%s169 + $0x9b0] sm:$0xff]
      %v488 = vld [vmem:[%s169 + $0x9b8] sm:$0xff]
      %v489 = vld [vmem:[%s169 + $0x9c0] sm:$0xff]
      %v490 = vld [vmem:[%s169 + $0x9c8] sm:$0xff]
      %v491 = vld [vmem:[%s169 + $0x9d0] sm:$0xff]
      %v492 = vld [vmem:[%s169 + $0x9d8] sm:$0xff]
      %v493 = vld [vmem:[%s169 + $0x9e0] sm:$0xff]
      %v494 = vld [vmem:[%s169 + $0x9e8] sm:$0xff]
      %v495 = vld [vmem:[%s169 + $0x9f0] sm:$0xff]
      %v496 = vld [vmem:[%s169 + $0x9f8] sm:$0xff]
      %v497 = vld [vmem:[%s169 + $0xa00] sm:$0xff]
      %v498 = vld [vmem:[%s169 + $0xa08] sm:$0xff]
      %v499 = vld [vmem:[%s169 + $0xa10] sm:$0xff]
      %v500 = vld [vmem:[%s169 + $0xa18] sm:$0xff]
      %v501 = vld [vmem:[%s169 + $0xa20] sm:$0xff]
      %v502 = vld [vmem:[%s169 + $0xa28] sm:$0xff]
      %v503 = vld [vmem:[%s169 + $0xa30] sm:$0xff]
      %v504 = vld [vmem:[%s169 + $0xa38] sm:$0xff]
      %v505 = vld [vmem:[%s169 + $0xa40] sm:$0xff]
      %v506 = vld [vmem:[%s169 + $0xa48] sm:$0xff]
      %v507 = vld [vmem:[%s169 + $0xa50] sm:$0xff]
      %v508 = vld [vmem:[%s169 + $0xa58] sm:$0xff]
      %v509 = vld [vmem:[%s169 + $0xa60] sm:$0xff]
      %v510 = vld [vmem:[%s169 + $0xa68] sm:$0xff]
      %v511 = vld [vmem:[%s169 + $0xa70] sm:$0xff]
      %v512 = vld [vmem:[%s169 + $0xa78] sm:$0xff]
      %v513 = vld [vmem:[%s169 + $0xa80] sm:$0xff]
      %v514 = vld [vmem:[%s169 + $0xa88] sm:$0xff]
      %v515 = vld [vmem:[%s169 + $0xa90] sm:$0xff]
      %v516 = vld [vmem:[%s169 + $0xa98] sm:$0xff]
      %v517 = vld [vmem:[%s169 + $0xaa0] sm:$0xff]
      %v518 = vld [vmem:[%s169 + $0xaa8] sm:$0xff]
      %v519 = vld [vmem:[%s169 + $0xab0] sm:$0xff]
      %v520 = vld [vmem:[%s169 + $0xab8] sm:$0xff]
      %v521 = vld [vmem:[%s169 + $0xac0] sm:$0xff]
      %v522 = vld [vmem:[%s169 + $0xac8] sm:$0xff]
      %v523 = vld [vmem:[%s169 + $0xad0] sm:$0xff]
      %v524 = vld [vmem:[%s169 + $0xad8] sm:$0xff]
      %v525 = vld [vmem:[%s169 + $0xae0] sm:$0xff]
      %v526 = vld [vmem:[%s169 + $0xae8] sm:$0xff]
      %v527 = vld [vmem:[%s169 + $0xaf0] sm:$0xff]
      %v528 = vld [vmem:[%s169 + $0xaf8] sm:$0xff]
      %v529 = vld [vmem:[%s169 + $0xb00] sm:$0xff]
      %v530 = vld [vmem:[%s169 + $0xb08] sm:$0xff]
      %v531 = vld [vmem:[%s169 + $0xb10] sm:$0xff]
      %v532 = vld [vmem:[%s169 + $0xb18] sm:$0xff]
      %v533 = vld [vmem:[%s169 + $0xb20] sm:$0xff]
      %v534 = vld [vmem:[%s169 + $0xb28] sm:$0xff]
      %v535 = vld [vmem:[%s169 + $0xb30] sm:$0xff]
      %v536 = vld [vmem:[%s169 + $0xb38] sm:$0xff]
      %v537 = vld [vmem:[%s169 + $0xb40] sm:$0xff]
      %v538 = vld [vmem:[%s169 + $0xb48] sm:$0xff]
      %v539 = vld [vmem:[%s169 + $0xb50] sm:$0xff]
      %v540 = vld [vmem:[%s169 + $0xb58] sm:$0xff]
      %v541 = vld [vmem:[%s169 + $0xb60] sm:$0xff]
      %v542 = vld [vmem:[%s169 + $0xb68] sm:$0xff]
      %v543 = vld [vmem:[%s169 + $0xb70] sm:$0xff]
      %v544 = vld [vmem:[%s169 + $0xb78] sm:$0xff]
      %v545 = vld [vmem:[%s169 + $0xb80] sm:$0xff]
      %v546 = vld [vmem:[%s169 + $0xb88] sm:$0xff]
      %v547 = vld [vmem:[%s169 + $0xb90] sm:$0xff]
      %v548 = vld [vmem:[%s169 + $0xb98] sm:$0xff]
      %v549 = vld [vmem:[%s169 + $0xba0] sm:$0xff]
      %v550 = vld [vmem:[%s169 + $0xba8] sm:$0xff]
      %v551 = vld [vmem:[%s169 + $0xbb0] sm:$0xff]
      %v552 = vld [vmem:[%s169 + $0xbb8] sm:$0xff]
      %v553 = vld [vmem:[%s169 + $0xbc0] sm:$0xff]
      %v554 = vld [vmem:[%s169 + $0xbc8] sm:$0xff]
      %v555 = vld [vmem:[%s169 + $0xbd0] sm:$0xff]
      %v556 = vld [vmem:[%s169 + $0xbd8] sm:$0xff]
      %v557 = vld [vmem:[%s169 + $0xbe0] sm:$0xff]
      %v558 = vld [vmem:[%s169 + $0xbe8] sm:$0xff]
      %v559 = vld [vmem:[%s169 + $0xbf0] sm:$0xff]
      %v560 = vld [vmem:[%s169 + $0xbf8] sm:$0xff]
      %v561 = vld [vmem:[%s169 + $0xc00] sm:$0xff]
      %v562 = vld [vmem:[%s169 + $0xc08] sm:$0xff]
      %v563 = vld [vmem:[%s169 + $0xc10] sm:$0xff]
      %v564 = vld [vmem:[%s169 + $0xc18] sm:$0xff]
      %v565 = vld [vmem:[%s169 + $0xc20] sm:$0xff]
      %v566 = vld [vmem:[%s169 + $0xc28] sm:$0xff]
      %v567 = vld [vmem:[%s169 + $0xc30] sm:$0xff]
      %v568 = vld [vmem:[%s169 + $0xc38] sm:$0xff]
      %v569 = vld [vmem:[%s169 + $0xc40] sm:$0xff]
      %v570 = vld [vmem:[%s169 + $0xc48] sm:$0xff]
      %v571 = vld [vmem:[%s169 + $0xc50] sm:$0xff]
      %v572 = vld [vmem:[%s169 + $0xc58] sm:$0xff]
      %v573 = vld [vmem:[%s169 + $0xc60] sm:$0xff]
      %v574 = vld [vmem:[%s169 + $0xc68] sm:$0xff]
      %v575 = vld [vmem:[%s169 + $0xc70] sm:$0xff]
      %v576 = vld [vmem:[%s169 + $0xc78] sm:$0xff]
      %v577 = vld [vmem:[%s169 + $0xc80] sm:$0xff]
      %v578 = vld [vmem:[%s169 + $0xc88] sm:$0xff]
      %v579 = vld [vmem:[%s169 + $0xc90] sm:$0xff]
      %v580 = vld [vmem:[%s169 + $0xc98] sm:$0xff]
      %v581 = vld [vmem:[%s169 + $0xca0] sm:$0xff]
      %v582 = vld [vmem:[%s169 + $0xca8] sm:$0xff]
      %v583 = vld [vmem:[%s169 + $0xcb0] sm:$0xff]
      %v584 = vld [vmem:[%s169 + $0xcb8] sm:$0xff]
      %v585 = vld [vmem:[%s169 + $0xcc0] sm:$0xff]
      %v586 = vld [vmem:[%s169 + $0xcc8] sm:$0xff]
      %v587 = vld [vmem:[%s169 + $0xcd0] sm:$0xff]
      %v588 = vld [vmem:[%s169 + $0xcd8] sm:$0xff]
      %v589 = vld [vmem:[%s169 + $0xce0] sm:$0xff]
      %v590 = vld [vmem:[%s169 + $0xce8] sm:$0xff]
      %v591 = vld [vmem:[%s169 + $0xcf0] sm:$0xff]
      %v592 = vld [vmem:[%s169 + $0xcf8] sm:$0xff]
      %v593 = vld [vmem:[%s169 + $0xd00] sm:$0xff]
      %v594 = vld [vmem:[%s169 + $0xd08] sm:$0xff]
      %v595 = vld [vmem:[%s169 + $0xd10] sm:$0xff]
      %v596 = vld [vmem:[%s169 + $0xd18] sm:$0xff]
      %v597 = vld [vmem:[%s169 + $0xd20] sm:$0xff]
      %v598 = vld [vmem:[%s169 + $0xd28] sm:$0xff]
      %v599 = vld [vmem:[%s169 + $0xd30] sm:$0xff]
      %v600 = vld [vmem:[%s169 + $0xd38] sm:$0xff]
      %v601 = vld [vmem:[%s169 + $0xd40] sm:$0xff]
      %v602 = vld [vmem:[%s169 + $0xd48] sm:$0xff]
      %v603 = vld [vmem:[%s169 + $0xd50] sm:$0xff]
      %v604 = vld [vmem:[%s169 + $0xd58] sm:$0xff]
      %v605 = vld [vmem:[%s169 + $0xd60] sm:$0xff]
      %v606 = vld [vmem:[%s169 + $0xd68] sm:$0xff]
      %v607 = vld [vmem:[%s169 + $0xd70] sm:$0xff]
      %v608 = vld [vmem:[%s169 + $0xd78] sm:$0xff]
      %v609 = vld [vmem:[%s169 + $0xd80] sm:$0xff]
      %v610 = vld [vmem:[%s169 + $0xd88] sm:$0xff]
      %v611 = vld [vmem:[%s169 + $0xd90] sm:$0xff]
      %v612 = vld [vmem:[%s169 + $0xd98] sm:$0xff]
      %v613 = vld [vmem:[%s169 + $0xda0] sm:$0xff]
      %v614 = vld [vmem:[%s169 + $0xda8] sm:$0xff]
      %v615 = vld [vmem:[%s169 + $0xdb0] sm:$0xff]
      %v616 = vld [vmem:[%s169 + $0xdb8] sm:$0xff]
      %v617 = vld [vmem:[%s169 + $0xdc0] sm:$0xff]
      %v618 = vld [vmem:[%s169 + $0xdc8] sm:$0xff]
      %v619 = vld [vmem:[%s169 + $0xdd0] sm:$0xff]
      %v620 = vld [vmem:[%s169 + $0xdd8] sm:$0xff]
      %v621 = vld [vmem:[%s169 + $0xde0] sm:$0xff]
      %v622 = vld [vmem:[%s169 + $0xde8] sm:$0xff]
      %v623 = vld [vmem:[%s169 + $0xdf0] sm:$0xff]
      %v624 = vld [vmem:[%s169 + $0xdf8] sm:$0xff]
      %v625 = vld [vmem:[%s169 + $0xe00] sm:$0xff]
      %v626 = vld [vmem:[%s169 + $0xe08] sm:$0xff]
      %v627 = vld [vmem:[%s169 + $0xe10] sm:$0xff]
      %v628 = vld [vmem:[%s169 + $0xe18] sm:$0xff]
      %v629 = vld [vmem:[%s169 + $0xe20] sm:$0xff]
      %v630 = vld [vmem:[%s169 + $0xe28] sm:$0xff]
      %v631 = vld [vmem:[%s169 + $0xe30] sm:$0xff]
      %v632 = vld [vmem:[%s169 + $0xe38] sm:$0xff]
      %v633 = vld [vmem:[%s169 + $0xe40] sm:$0xff]
      %v634 = vld [vmem:[%s169 + $0xe48] sm:$0xff]
      %v635 = vld [vmem:[%s169 + $0xe50] sm:$0xff]
      %v636 = vld [vmem:[%s169 + $0xe58] sm:$0xff]
      %v637 = vld [vmem:[%s169 + $0xe60] sm:$0xff]
      %v638 = vld [vmem:[%s169 + $0xe68] sm:$0xff]
      %v639 = vld [vmem:[%s169 + $0xe70] sm:$0xff]
      %v640 = vld [vmem:[%s169 + $0xe78] sm:$0xff]
      %v641 = vld [vmem:[%s169 + $0xe80] sm:$0xff]
      %v642 = vld [vmem:[%s169 + $0xe88] sm:$0xff]
      %v643 = vld [vmem:[%s169 + $0xe90] sm:$0xff]
      %v644 = vld [vmem:[%s169 + $0xe98] sm:$0xff]
      %v645 = vld [vmem:[%s169 + $0xea0] sm:$0xff]
      %v646 = vld [vmem:[%s169 + $0xea8] sm:$0xff]
      %v647 = vld [vmem:[%s169 + $0xeb0] sm:$0xff]
      %v648 = vld [vmem:[%s169 + $0xeb8] sm:$0xff]
      %v649 = vld [vmem:[%s169 + $0xec0] sm:$0xff]
      %v650 = vld [vmem:[%s169 + $0xec8] sm:$0xff]
      %v651 = vld [vmem:[%s169 + $0xed0] sm:$0xff]
      %v652 = vld [vmem:[%s169 + $0xed8] sm:$0xff]
      %v653 = vld [vmem:[%s169 + $0xee0] sm:$0xff]
      %v654 = vld [vmem:[%s169 + $0xee8] sm:$0xff]
      %v655 = vld [vmem:[%s169 + $0xef0] sm:$0xff]
      %v656 = vld [vmem:[%s169 + $0xef8] sm:$0xff]
      %v657 = vld [vmem:[%s169 + $0xf00] sm:$0xff]
      %v658 = vld [vmem:[%s169 + $0xf08] sm:$0xff]
      %v659 = vld [vmem:[%s169 + $0xf10] sm:$0xff]
      %v660 = vld [vmem:[%s169 + $0xf18] sm:$0xff]
      %v661 = vld [vmem:[%s169 + $0xf20] sm:$0xff]
      %v662 = vld [vmem:[%s169 + $0xf28] sm:$0xff]
      %v663 = vld [vmem:[%s169 + $0xf30] sm:$0xff]
      %v664 = vld [vmem:[%s169 + $0xf38] sm:$0xff]
      %v665 = vld [vmem:[%s169 + $0xf40] sm:$0xff]
      %v666 = vld [vmem:[%s169 + $0xf48] sm:$0xff]
      %v667 = vld [vmem:[%s169 + $0xf50] sm:$0xff]
      %v668 = vld [vmem:[%s169 + $0xf58] sm:$0xff]
      %v669 = vld [vmem:[%s169 + $0xf60] sm:$0xff]
      %v670 = vld [vmem:[%s169 + $0xf68] sm:$0xff]
      %v671 = vld [vmem:[%s169 + $0xf70] sm:$0xff]
      %v672 = vld [vmem:[%s169 + $0xf78] sm:$0xff]
      %v673 = vld [vmem:[%s169 + $0xf80] sm:$0xff]
      %v674 = vld [vmem:[%s169 + $0xf88] sm:$0xff]
      %v675 = vld [vmem:[%s169 + $0xf90] sm:$0xff]
      %v676 = vld [vmem:[%s169 + $0xf98] sm:$0xff]
      %v677 = vld [vmem:[%s169 + $0xfa0] sm:$0xff]
      %v678 = vld [vmem:[%s169 + $0xfa8] sm:$0xff]
      %v679 = vld [vmem:[%s169 + $0xfb0] sm:$0xff]
      %v680 = vld [vmem:[%s169 + $0xfb8] sm:$0xff]
      %v681 = vld [vmem:[%s169 + $0xfc0] sm:$0xff]
      %v682 = vld [vmem:[%s169 + $0xfc8] sm:$0xff]
      %v683 = vld [vmem:[%s169 + $0xfd0] sm:$0xff]
      %v684 = vld [vmem:[%s169 + $0xfd8] sm:$0xff]
      %v685 = vld [vmem:[%s169 + $0xfe0] sm:$0xff]
      %v686 = vld [vmem:[%s169 + $0xfe8] sm:$0xff]
      %v687 = vld [vmem:[%s169 + $0xff0] sm:$0xff]
      %v688 = vld [vmem:[%s169 + $0xff8] sm:$0xff]
      %v689 = vld [vmem:[%s169 + $0x1000] sm:$0xff]
      %v690 = vld [vmem:[%s169 + $0x1008] sm:$0xff]
      %v691 = vld [vmem:[%s169 + $0x1010] sm:$0xff]
      %v692 = vld [vmem:[%s169 + $0x1018] sm:$0xff]
      %v693 = vld [vmem:[%s169 + $0x1020] sm:$0xff]
      %v694 = vld [vmem:[%s169 + $0x1028] sm:$0xff]
      %v695 = vld [vmem:[%s169 + $0x1030] sm:$0xff]
      %v696 = vld [vmem:[%s169 + $0x1038] sm:$0xff]
      %v697 = vld [vmem:[%s169 + $0x1040] sm:$0xff]
      %v698 = vld [vmem:[%s169 + $0x1048] sm:$0xff]
      %v699 = vld [vmem:[%s169 + $0x1050] sm:$0xff]
      %v700 = vld [vmem:[%s169 + $0x1058] sm:$0xff]
      %v701 = vld [vmem:[%s169 + $0x1060] sm:$0xff]
      %v702 = vld [vmem:[%s169 + $0x1068] sm:$0xff]
      %v703 = vld [vmem:[%s169 + $0x1070] sm:$0xff]
      %v704 = vld [vmem:[%s169 + $0x1078] sm:$0xff]
      %v705 = vld [vmem:[%s169 + $0x1080] sm:$0xff]
      %v706 = vld [vmem:[%s169 + $0x1088] sm:$0xff]
      %v707 = vld [vmem:[%s169 + $0x1090] sm:$0xff]
      %v708 = vld [vmem:[%s169 + $0x1098] sm:$0xff]
      %v709 = vld [vmem:[%s169 + $0x10a0] sm:$0xff]
      %v710 = vld [vmem:[%s169 + $0x10a8] sm:$0xff]
      %v711 = vld [vmem:[%s169 + $0x10b0] sm:$0xff]
      %v712 = vld [vmem:[%s169 + $0x10b8] sm:$0xff]
      %v713 = vld [vmem:[%s169 + $0x10c0] sm:$0xff]
      %v714 = vld [vmem:[%s169 + $0x10c8] sm:$0xff]
      %v715 = vld [vmem:[%s169 + $0x10d0] sm:$0xff]
      %v716 = vld [vmem:[%s169 + $0x10d8] sm:$0xff]
      %v717 = vld [vmem:[%s169 + $0x10e0] sm:$0xff]
      %v718 = vld [vmem:[%s169 + $0x10e8] sm:$0xff]
      %v719 = vld [vmem:[%s169 + $0x10f0] sm:$0xff]
      %v720 = vld [vmem:[%s169 + $0x10f8] sm:$0xff]
      %v721 = vld [vmem:[%s169 + $0x1100] sm:$0xff]
      %v722 = vld [vmem:[%s169 + $0x1108] sm:$0xff]
      %v723 = vld [vmem:[%s169 + $0x1110] sm:$0xff]
      %v724 = vld [vmem:[%s169 + $0x1118] sm:$0xff]
      %v725 = vld [vmem:[%s169 + $0x1120] sm:$0xff]
      %v726 = vld [vmem:[%s169 + $0x1128] sm:$0xff]
      %v727 = vld [vmem:[%s169 + $0x1130] sm:$0xff]
      %v728 = vld [vmem:[%s169 + $0x1138] sm:$0xff]
      %v729 = vld [vmem:[%s169 + $0x1140] sm:$0xff]
      %v730 = vld [vmem:[%s169 + $0x1148] sm:$0xff]
      %v731 = vld [vmem:[%s169 + $0x1150] sm:$0xff]
      %v732 = vld [vmem:[%s169 + $0x1158] sm:$0xff]
      %v733 = vld [vmem:[%s169 + $0x1160] sm:$0xff]
      %v734 = vld [vmem:[%s169 + $0x1168] sm:$0xff]
      %v735 = vld [vmem:[%s169 + $0x1170] sm:$0xff]
      %v736 = vld [vmem:[%s169 + $0x1178] sm:$0xff]
      %v737 = vld [vmem:[%s169 + $0x1180] sm:$0xff]
      %v738 = vld [vmem:[%s169 + $0x1188] sm:$0xff]
      %v739 = vld [vmem:[%s169 + $0x1190] sm:$0xff]
      %v740 = vld [vmem:[%s169 + $0x1198] sm:$0xff]
      %v741 = vld [vmem:[%s169 + $0x11a0] sm:$0xff]
      %v742 = vld [vmem:[%s169 + $0x11a8] sm:$0xff]
      %v743 = vld [vmem:[%s169 + $0x11b0] sm:$0xff]
      %v744 = vld [vmem:[%s169 + $0x11b8] sm:$0xff]
      %v745 = vld [vmem:[%s169 + $0x11c0] sm:$0xff]
      %v746 = vld [vmem:[%s169 + $0x11c8] sm:$0xff]
      %v747 = vld [vmem:[%s169 + $0x11d0] sm:$0xff]
      %v748 = vld [vmem:[%s169 + $0x11d8] sm:$0xff]
      %v749 = vld [vmem:[%s169 + $0x11e0] sm:$0xff]
      %v750 = vld [vmem:[%s169 + $0x11e8] sm:$0xff]
      %v751 = vld [vmem:[%s169 + $0x11f0] sm:$0xff]
      %v752 = vld [vmem:[%s169 + $0x11f8] sm:$0xff]
      %v753 = vld [vmem:[%s169 + $0x1200] sm:$0xff]
      %v754 = vld [vmem:[%s169 + $0x1208] sm:$0xff]
      %v755 = vld [vmem:[%s169 + $0x1210] sm:$0xff]
      %v756 = vld [vmem:[%s169 + $0x1218] sm:$0xff]
      %v757 = vld [vmem:[%s169 + $0x1220] sm:$0xff]
      %v758 = vld [vmem:[%s169 + $0x1228] sm:$0xff]
      %v759 = vld [vmem:[%s169 + $0x1230] sm:$0xff]
      %v760 = vld [vmem:[%s169 + $0x1238] sm:$0xff]
      %v761 = vld [vmem:[%s169 + $0x1240] sm:$0xff]
      %v762 = vld [vmem:[%s169 + $0x1248] sm:$0xff]
      %v763 = vld [vmem:[%s169 + $0x1250] sm:$0xff]
      %v764 = vld [vmem:[%s169 + $0x1258] sm:$0xff]
      %v765 = vld [vmem:[%s169 + $0x1260] sm:$0xff]
      %v766 = vld [vmem:[%s169 + $0x1268] sm:$0xff]
      %v767 = vld [vmem:[%s169 + $0x1270] sm:$0xff]
      %v768 = vld [vmem:[%s169 + $0x1278] sm:$0xff]
      %v769 = vld [vmem:[%s169 + $0x1280] sm:$0xff]
      %v770 = vld [vmem:[%s169 + $0x1288] sm:$0xff]
      %v771 = vld [vmem:[%s169 + $0x1290] sm:$0xff]
      %v772 = vld [vmem:[%s169 + $0x1298] sm:$0xff]
      %v773 = vld [vmem:[%s169 + $0x12a0] sm:$0xff]
      %v774 = vld [vmem:[%s169 + $0x12a8] sm:$0xff]
      %v775 = vld [vmem:[%s169 + $0x12b0] sm:$0xff]
      %v776 = vld [vmem:[%s169 + $0x12b8] sm:$0xff]
      %v777 = vld [vmem:[%s169 + $0x12c0] sm:$0xff]
      %v778 = vld [vmem:[%s169 + $0x12c8] sm:$0xff]
      %v779 = vld [vmem:[%s169 + $0x12d0] sm:$0xff]
      %v780 = vld [vmem:[%s169 + $0x12d8] sm:$0xff]
      %v781 = vld [vmem:[%s169 + $0x12e0] sm:$0xff]
      %v782 = vld [vmem:[%s169 + $0x12e8] sm:$0xff]
      %v783 = vld [vmem:[%s169 + $0x12f0] sm:$0xff]
      %v784 = vld [vmem:[%s169 + $0x12f8] sm:$0xff]
      %v785 = vld [vmem:[%s169 + $0x1300] sm:$0xff]
      %v786 = vld [vmem:[%s169 + $0x1308] sm:$0xff]
      %v787 = vld [vmem:[%s169 + $0x1310] sm:$0xff]
      %v788 = vld [vmem:[%s169 + $0x1318] sm:$0xff]
      %v789 = vld [vmem:[%s169 + $0x1320] sm:$0xff]
      %v790 = vld [vmem:[%s169 + $0x1328] sm:$0xff]
      %v791 = vld [vmem:[%s169 + $0x1330] sm:$0xff]
      %v792 = vld [vmem:[%s169 + $0x1338] sm:$0xff]
      %v793 = vld [vmem:[%s169 + $0x1340] sm:$0xff]
      %v794 = vld [vmem:[%s169 + $0x1348] sm:$0xff]
      %v795 = vld [vmem:[%s169 + $0x1350] sm:$0xff]
      %v796 = vld [vmem:[%s169 + $0x1358] sm:$0xff]
      %v797 = vld [vmem:[%s169 + $0x1360] sm:$0xff]
      %v798 = vld [vmem:[%s169 + $0x1368] sm:$0xff]
      %v799 = vld [vmem:[%s169 + $0x1370] sm:$0xff]
      %v800 = vld [vmem:[%s169 + $0x1378] sm:$0xff]
      %v801 = vld [vmem:[%s169 + $0x1380] sm:$0xff]
      %v802 = vld [vmem:[%s169 + $0x1388] sm:$0xff]
      %v803 = vld [vmem:[%s169 + $0x1390] sm:$0xff]
      %v804 = vld [vmem:[%s169 + $0x1398] sm:$0xff]
      %v805 = vld [vmem:[%s169 + $0x13a0] sm:$0xff]
      %v806 = vld [vmem:[%s169 + $0x13a8] sm:$0xff]
      %v807 = vld [vmem:[%s169 + $0x13b0] sm:$0xff]
      %v808 = vld [vmem:[%s169 + $0x13b8] sm:$0xff]
      %v809 = vld [vmem:[%s169 + $0x13c0] sm:$0xff]
      %v810 = vld [vmem:[%s169 + $0x13c8] sm:$0xff]
      %v811 = vld [vmem:[%s169 + $0x13d0] sm:$0xff]
      %v812 = vld [vmem:[%s169 + $0x13d8] sm:$0xff]
      %v813 = vld [vmem:[%s169 + $0x13e0] sm:$0xff]
      %v814 = vld [vmem:[%s169 + $0x13e8] sm:$0xff]
      %v815 = vld [vmem:[%s169 + $0x13f0] sm:$0xff]
      %v816 = vld [vmem:[%s169 + $0x13f8] sm:$0xff]
      %v817 = vld [vmem:[%s169 + $0x1400] sm:$0xff]
      %v818 = vld [vmem:[%s169 + $0x1408] sm:$0xff]
      %v819 = vld [vmem:[%s169 + $0x1410] sm:$0xff]
      %v820 = vld [vmem:[%s169 + $0x1418] sm:$0xff]
      %v821 = vld [vmem:[%s169 + $0x1420] sm:$0xff]
      %v822 = vld [vmem:[%s169 + $0x1428] sm:$0xff]
      %v823 = vld [vmem:[%s169 + $0x1430] sm:$0xff]
      %v824 = vld [vmem:[%s169 + $0x1438] sm:$0xff]
      %v825 = vld [vmem:[%s169 + $0x1440] sm:$0xff]
      %v826 = vld [vmem:[%s169 + $0x1448] sm:$0xff]
      %v827 = vld [vmem:[%s169 + $0x1450] sm:$0xff]
      %v828 = vld [vmem:[%s169 + $0x1458] sm:$0xff]
      %v829 = vld [vmem:[%s169 + $0x1460] sm:$0xff]
      %v830 = vld [vmem:[%s169 + $0x1468] sm:$0xff]
      %v831 = vld [vmem:[%s169 + $0x1470] sm:$0xff]
      %v832 = vld [vmem:[%s169 + $0x1478] sm:$0xff]
      %v833 = vld [vmem:[%s169 + $0x1480] sm:$0xff]
      %v834 = vld [vmem:[%s169 + $0x1488] sm:$0xff]
      %v835 = vld [vmem:[%s169 + $0x1490] sm:$0xff]
      %v836 = vld [vmem:[%s169 + $0x1498] sm:$0xff]
      %v837 = vld [vmem:[%s169 + $0x14a0] sm:$0xff]
      %v838 = vld [vmem:[%s169 + $0x14a8] sm:$0xff]
      %v839 = vld [vmem:[%s169 + $0x14b0] sm:$0xff]
      %v840 = vld [vmem:[%s169 + $0x14b8] sm:$0xff]
      %v841 = vld [vmem:[%s169 + $0x14c0] sm:$0xff]
      %v842 = vld [vmem:[%s169 + $0x14c8] sm:$0xff]
      %v843 = vld [vmem:[%s169 + $0x14d0] sm:$0xff]
      %v844 = vld [vmem:[%s169 + $0x14d8] sm:$0xff]
      %v845 = vld [vmem:[%s169 + $0x14e0] sm:$0xff]
      %v846 = vld [vmem:[%s169 + $0x14e8] sm:$0xff]
      %v847 = vld [vmem:[%s169 + $0x14f0] sm:$0xff]
      %v848 = vld [vmem:[%s169 + $0x14f8] sm:$0xff]
      %v849 = vld [vmem:[%s169 + $0x1500] sm:$0xff]
      %v850 = vld [vmem:[%s169 + $0x1508] sm:$0xff]
      %v851 = vld [vmem:[%s169 + $0x1510] sm:$0xff]
      %v852 = vld [vmem:[%s169 + $0x1518] sm:$0xff]
      %v853 = vld [vmem:[%s169 + $0x1520] sm:$0xff]
      %v854 = vld [vmem:[%s169 + $0x1528] sm:$0xff]
      %v855 = vld [vmem:[%s169 + $0x1530] sm:$0xff]
      %v856 = vld [vmem:[%s169 + $0x1538] sm:$0xff]
      %v857 = vld [vmem:[%s169 + $0x1540] sm:$0xff]
      %v858 = vld [vmem:[%s169 + $0x1548] sm:$0xff]
      %v859 = vld [vmem:[%s169 + $0x1550] sm:$0xff]
      %v860 = vld [vmem:[%s169 + $0x1558] sm:$0xff]
      %v861 = vld [vmem:[%s169 + $0x1560] sm:$0xff]
      %v862 = vld [vmem:[%s169 + $0x1568] sm:$0xff]
      %v863 = vld [vmem:[%s169 + $0x1570] sm:$0xff]
      %v864 = vld [vmem:[%s169 + $0x1578] sm:$0xff]
      %v865 = vld [vmem:[%s169 + $0x1580] sm:$0xff]
      %v866 = vld [vmem:[%s169 + $0x1588] sm:$0xff]
      %v867 = vld [vmem:[%s169 + $0x1590] sm:$0xff]
      %v868 = vld [vmem:[%s169 + $0x1598] sm:$0xff]
      %v869 = vld [vmem:[%s169 + $0x15a0] sm:$0xff]
      %v870 = vld [vmem:[%s169 + $0x15a8] sm:$0xff]
      %v871 = vld [vmem:[%s169 + $0x15b0] sm:$0xff]
      %v872 = vld [vmem:[%s169 + $0x15b8] sm:$0xff]
      %v873 = vld [vmem:[%s169 + $0x15c0] sm:$0xff]
      %v874 = vld [vmem:[%s169 + $0x15c8] sm:$0xff]
      %v875 = vld [vmem:[%s169 + $0x15d0] sm:$0xff]
      %v876 = vld [vmem:[%s169 + $0x15d8] sm:$0xff]
      %v877 = vld [vmem:[%s169 + $0x15e0] sm:$0xff]
      %v878 = vld [vmem:[%s169 + $0x15e8] sm:$0xff]
      %v879 = vld [vmem:[%s169 + $0x15f0] sm:$0xff]
      %v880 = vld [vmem:[%s169 + $0x15f8] sm:$0xff]
      %v881 = vld [vmem:[%s169 + $0x1600] sm:$0xff]
      %v882 = vld [vmem:[%s169 + $0x1608] sm:$0xff]
      %v883 = vld [vmem:[%s169 + $0x1610] sm:$0xff]
      %v884 = vld [vmem:[%s169 + $0x1618] sm:$0xff]
      %v885 = vld [vmem:[%s169 + $0x1620] sm:$0xff]
      %v886 = vld [vmem:[%s169 + $0x1628] sm:$0xff]
      %v887 = vld [vmem:[%s169 + $0x1630] sm:$0xff]
      %v888 = vld [vmem:[%s169 + $0x1638] sm:$0xff]
      %v889 = vld [vmem:[%s169 + $0x1640] sm:$0xff]
      %v890 = vld [vmem:[%s169 + $0x1648] sm:$0xff]
      %v891 = vld [vmem:[%s169 + $0x1650] sm:$0xff]
      %v892 = vld [vmem:[%s169 + $0x1658] sm:$0xff]
      %v893 = vld [vmem:[%s169 + $0x1660] sm:$0xff]
      %v894 = vld [vmem:[%s169 + $0x1668] sm:$0xff]
      %v895 = vld [vmem:[%s169 + $0x1670] sm:$0xff]
      %v896 = vld [vmem:[%s169 + $0x1678] sm:$0xff]
      %v897 = vld [vmem:[%s169 + $0x1680] sm:$0xff]
      %v898 = vld [vmem:[%s169 + $0x1688] sm:$0xff]
      %v899 = vld [vmem:[%s169 + $0x1690] sm:$0xff]
      %v900 = vld [vmem:[%s169 + $0x1698] sm:$0xff]
      %v901 = vld [vmem:[%s169 + $0x16a0] sm:$0xff]
      %v902 = vld [vmem:[%s169 + $0x16a8] sm:$0xff]
      %v903 = vld [vmem:[%s169 + $0x16b0] sm:$0xff]
      %v904 = vld [vmem:[%s169 + $0x16b8] sm:$0xff]
      %v905 = vld [vmem:[%s169 + $0x16c0] sm:$0xff]
      %v906 = vld [vmem:[%s169 + $0x16c8] sm:$0xff]
      %v907 = vld [vmem:[%s169 + $0x16d0] sm:$0xff]
      %v908 = vld [vmem:[%s169 + $0x16d8] sm:$0xff]
      %v909 = vld [vmem:[%s169 + $0x16e0] sm:$0xff]
      %v910 = vld [vmem:[%s169 + $0x16e8] sm:$0xff]
      %v911 = vld [vmem:[%s169 + $0x16f0] sm:$0xff]
      %v912 = vld [vmem:[%s169 + $0x16f8] sm:$0xff]
      %v913 = vld [vmem:[%s169 + $0x1700] sm:$0xff]
      %v914 = vld [vmem:[%s169 + $0x1708] sm:$0xff]
      %v915 = vld [vmem:[%s169 + $0x1710] sm:$0xff]
      %v916 = vld [vmem:[%s169 + $0x1718] sm:$0xff]
      %v917 = vld [vmem:[%s169 + $0x1720] sm:$0xff]
      %v918 = vld [vmem:[%s169 + $0x1728] sm:$0xff]
      %v919 = vld [vmem:[%s169 + $0x1730] sm:$0xff]
      %v920 = vld [vmem:[%s169 + $0x1738] sm:$0xff]
      %v921 = vld [vmem:[%s169 + $0x1740] sm:$0xff]
      %v922 = vld [vmem:[%s169 + $0x1748] sm:$0xff]
      %v923 = vld [vmem:[%s169 + $0x1750] sm:$0xff]
      %v924 = vld [vmem:[%s169 + $0x1758] sm:$0xff]
      %v925 = vld [vmem:[%s169 + $0x1760] sm:$0xff]
      %v926 = vld [vmem:[%s169 + $0x1768] sm:$0xff]
      %v927 = vld [vmem:[%s169 + $0x1770] sm:$0xff]
      %v928 = vld [vmem:[%s169 + $0x1778] sm:$0xff]
      %v929 = vld [vmem:[%s169 + $0x1780] sm:$0xff]
      %v930 = vld [vmem:[%s169 + $0x1788] sm:$0xff]
      %v931 = vld [vmem:[%s169 + $0x1790] sm:$0xff]
      %v932 = vld [vmem:[%s169 + $0x1798] sm:$0xff]
      %v933 = vld [vmem:[%s169 + $0x17a0] sm:$0xff]
      %v934 = vld [vmem:[%s169 + $0x17a8] sm:$0xff]
      %v935 = vld [vmem:[%s169 + $0x17b0] sm:$0xff]
      %v936 = vld [vmem:[%s169 + $0x17b8] sm:$0xff]
      %v937 = vld [vmem:[%s169 + $0x17c0] sm:$0xff]
      %v938 = vld [vmem:[%s169 + $0x17c8] sm:$0xff]
      %v939 = vld [vmem:[%s169 + $0x17d0] sm:$0xff]
      %v940 = vld [vmem:[%s169 + $0x17d8] sm:$0xff]
      %v941 = vld [vmem:[%s169 + $0x17e0] sm:$0xff]
      %v942 = vld [vmem:[%s169 + $0x17e8] sm:$0xff]
      %v943 = vld [vmem:[%s169 + $0x17f0] sm:$0xff]
      %v944 = vld [vmem:[%s169 + $0x17f8] sm:$0xff]
      %v945 = vld [vmem:[%s169 + $0x1800] sm:$0xff]
      %v946 = vld [vmem:[%s169 + $0x1808] sm:$0xff]
      %v947 = vld [vmem:[%s169 + $0x1810] sm:$0xff]
      %v948 = vld [vmem:[%s169 + $0x1818] sm:$0xff]
      %v949 = vld [vmem:[%s169 + $0x1820] sm:$0xff]
      %v950 = vld [vmem:[%s169 + $0x1828] sm:$0xff]
      %v951 = vld [vmem:[%s169 + $0x1830] sm:$0xff]
      %v952 = vld [vmem:[%s169 + $0x1838] sm:$0xff]
      %v953 = vld [vmem:[%s169 + $0x1840] sm:$0xff]
      %v954 = vld [vmem:[%s169 + $0x1848] sm:$0xff]
      %v955 = vld [vmem:[%s169 + $0x1850] sm:$0xff]
      %v956 = vld [vmem:[%s169 + $0x1858] sm:$0xff]
      %v957 = vld [vmem:[%s169 + $0x1860] sm:$0xff]
      %v958 = vld [vmem:[%s169 + $0x1868] sm:$0xff]
      %v959 = vld [vmem:[%s169 + $0x1870] sm:$0xff]
      %v960 = vld [vmem:[%s169 + $0x1878] sm:$0xff]
      %v961 = vld [vmem:[%s169 + $0x1880] sm:$0xff]
      %v962 = vld [vmem:[%s169 + $0x1888] sm:$0xff]
      %v963 = vld [vmem:[%s169 + $0x1890] sm:$0xff]
      %v964 = vld [vmem:[%s169 + $0x1898] sm:$0xff]
      %v965 = vld [vmem:[%s169 + $0x18a0] sm:$0xff]
      %v966 = vld [vmem:[%s169 + $0x18a8] sm:$0xff]
      %v967 = vld [vmem:[%s169 + $0x18b0] sm:$0xff]
      %v968 = vld [vmem:[%s169 + $0x18b8] sm:$0xff]
      %v969 = vld [vmem:[%s169 + $0x18c0] sm:$0xff]
      %v970 = vld [vmem:[%s169 + $0x18c8] sm:$0xff]
      %v971 = vld [vmem:[%s169 + $0x18d0] sm:$0xff]
      %v972 = vld [vmem:[%s169 + $0x18d8] sm:$0xff]
      %v973 = vld [vmem:[%s169 + $0x18e0] sm:$0xff]
      %v974 = vld [vmem:[%s169 + $0x18e8] sm:$0xff]
      %v975 = vld [vmem:[%s169 + $0x18f0] sm:$0xff]
      %v976 = vld [vmem:[%s169 + $0x18f8] sm:$0xff]
      %v977 = vld [vmem:[%s169 + $0x1900] sm:$0xff]
      %v978 = vld [vmem:[%s169 + $0x1908] sm:$0xff]
      %v979 = vld [vmem:[%s169 + $0x1910] sm:$0xff]
      %v980 = vld [vmem:[%s169 + $0x1918] sm:$0xff]
      %v981 = vld [vmem:[%s169 + $0x1920] sm:$0xff]
      %v982 = vld [vmem:[%s169 + $0x1928] sm:$0xff]
      %v983 = vld [vmem:[%s169 + $0x1930] sm:$0xff]
      %v984 = vld [vmem:[%s169 + $0x1938] sm:$0xff]
      %v985 = vld [vmem:[%s169 + $0x1940] sm:$0xff]
      %v986 = vld [vmem:[%s169 + $0x1948] sm:$0xff]
      %v987 = vld [vmem:[%s169 + $0x1950] sm:$0xff]
      %v988 = vld [vmem:[%s169 + $0x1958] sm:$0xff]
      %v989 = vld [vmem:[%s169 + $0x1960] sm:$0xff]
      %v990 = vld [vmem:[%s169 + $0x1968] sm:$0xff]
      %v991 = vld [vmem:[%s169 + $0x1970] sm:$0xff]
      %v992 = vld [vmem:[%s169 + $0x1978] sm:$0xff]
      %v993 = vld [vmem:[%s169 + $0x1980] sm:$0xff]
      %v994 = vld [vmem:[%s169 + $0x1988] sm:$0xff]
      %v995 = vld [vmem:[%s169 + $0x1990] sm:$0xff]
      %v996 = vld [vmem:[%s169 + $0x1998] sm:$0xff]
      %v997 = vld [vmem:[%s169 + $0x19a0] sm:$0xff]
      %v998 = vld [vmem:[%s169 + $0x19a8] sm:$0xff]
      %v999 = vld [vmem:[%s169 + $0x19b0] sm:$0xff]
      %v1000 = vld [vmem:[%s169 + $0x19b8] sm:$0xff]
      %v1001 = vld [vmem:[%s169 + $0x19c0] sm:$0xff]
      %v1002 = vld [vmem:[%s169 + $0x19c8] sm:$0xff]
      %v1003 = vld [vmem:[%s169 + $0x19d0] sm:$0xff]
      %v1004 = vld [vmem:[%s169 + $0x19d8] sm:$0xff]
      %v1005 = vld [vmem:[%s169 + $0x19e0] sm:$0xff]
      %v1006 = vld [vmem:[%s169 + $0x19e8] sm:$0xff]
      %v1007 = vld [vmem:[%s169 + $0x19f0] sm:$0xff]
      %v1008 = vld [vmem:[%s169 + $0x19f8] sm:$0xff]
      %v1009 = vld [vmem:[%s169 + $0x1a00] sm:$0xff]
      %v1010 = vld [vmem:[%s169 + $0x1a08] sm:$0xff]
      %v1011 = vld [vmem:[%s169 + $0x1a10] sm:$0xff]
      %v1012 = vld [vmem:[%s169 + $0x1a18] sm:$0xff]
      %v1013 = vld [vmem:[%s169 + $0x1a20] sm:$0xff]
      %v1014 = vld [vmem:[%s169 + $0x1a28] sm:$0xff]
      %v1015 = vld [vmem:[%s169 + $0x1a30] sm:$0xff]
      %v1016 = vld [vmem:[%s169 + $0x1a38] sm:$0xff]
      %v1017 = vld [vmem:[%s169 + $0x1a40] sm:$0xff]
      %v1018 = vld [vmem:[%s169 + $0x1a48] sm:$0xff]
      %v1019 = vld [vmem:[%s169 + $0x1a50] sm:$0xff]
      %v1020 = vld [vmem:[%s169 + $0x1a58] sm:$0xff]
      %v1021 = vld [vmem:[%s169 + $0x1a60] sm:$0xff]
      %v1022 = vld [vmem:[%s169 + $0x1a68] sm:$0xff]
      %v1023 = vld [vmem:[%s169 + $0x1a70] sm:$0xff]
      %v1024 = vld [vmem:[%s169 + $0x1a78] sm:$0xff]
      %v1025 = vld [vmem:[%s169 + $0x1a80] sm:$0xff]
      %v1026 = vld [vmem:[%s169 + $0x1a88] sm:$0xff]
      %v1027 = vld [vmem:[%s169 + $0x1a90] sm:$0xff]
      %v1028 = vld [vmem:[%s169 + $0x1a98] sm:$0xff]
      %v1029 = vld [vmem:[%s169 + $0x1aa0] sm:$0xff]
      %v1030 = vld [vmem:[%s169 + $0x1aa8] sm:$0xff]
      %v1031 = vld [vmem:[%s169 + $0x1ab0] sm:$0xff]
      %v1032 = vld [vmem:[%s169 + $0x1ab8] sm:$0xff]
      %v1033 = vld [vmem:[%s169 + $0x1ac0] sm:$0xff]
      %v1034 = vld [vmem:[%s169 + $0x1ac8] sm:$0xff]
      %v1035 = vld [vmem:[%s169 + $0x1ad0] sm:$0xff]
      %v1036 = vld [vmem:[%s169 + $0x1ad8] sm:$0xff]
      %v1037 = vld [vmem:[%s169 + $0x1ae0] sm:$0xff]
      %v1038 = vld [vmem:[%s169 + $0x1ae8] sm:$0xff]
      %v1039 = vld [vmem:[%s169 + $0x1af0] sm:$0xff]
      %v1040 = vld [vmem:[%s169 + $0x1af8] sm:$0xff]
      %v1041 = vld [vmem:[%s169 + $0x1b00] sm:$0xff]
      %v1042 = vld [vmem:[%s169 + $0x1b08] sm:$0xff]
      %v1043 = vld [vmem:[%s169 + $0x1b10] sm:$0xff]
      %v1044 = vld [vmem:[%s169 + $0x1b18] sm:$0xff]
      %v1045 = vld [vmem:[%s169 + $0x1b20] sm:$0xff]
      %v1046 = vld [vmem:[%s169 + $0x1b28] sm:$0xff]
      %v1047 = vld [vmem:[%s169 + $0x1b30] sm:$0xff]
      %v1048 = vld [vmem:[%s169 + $0x1b38] sm:$0xff]
      %v1049 = vld [vmem:[%s169 + $0x1b40] sm:$0xff]
      %v1050 = vld [vmem:[%s169 + $0x1b48] sm:$0xff]
      %v1051 = vld [vmem:[%s169 + $0x1b50] sm:$0xff]
      %v1052 = vld [vmem:[%s169 + $0x1b58] sm:$0xff]
      %v1053 = vld [vmem:[%s169 + $0x1b60] sm:$0xff]
      %v1054 = vld [vmem:[%s169 + $0x1b68] sm:$0xff]
      %v1055 = vld [vmem:[%s169 + $0x1b70] sm:$0xff]
      %v1056 = vld [vmem:[%s169 + $0x1b78] sm:$0xff]
      %v1057 = vld [vmem:[%s169 + $0x1b80] sm:$0xff]
      %v1058 = vld [vmem:[%s169 + $0x1b88] sm:$0xff]
      %v1059 = vld [vmem:[%s169 + $0x1b90] sm:$0xff]
      %v1060 = vld [vmem:[%s169 + $0x1b98] sm:$0xff]
      %v1061 = vld [vmem:[%s169 + $0x1ba0] sm:$0xff]
      %v1062 = vld [vmem:[%s169 + $0x1ba8] sm:$0xff]
      %v1063 = vld [vmem:[%s169 + $0x1bb0] sm:$0xff]
      %v1064 = vld [vmem:[%s169 + $0x1bb8] sm:$0xff]
      %v1065 = vld [vmem:[%s169 + $0x1bc0] sm:$0xff]
      %v1066 = vld [vmem:[%s169 + $0x1bc8] sm:$0xff]
      %v1067 = vld [vmem:[%s169 + $0x1bd0] sm:$0xff]
      %v1068 = vld [vmem:[%s169 + $0x1bd8] sm:$0xff]
      %v1069 = vld [vmem:[%s169 + $0x1be0] sm:$0xff]
      %v1070 = vld [vmem:[%s169 + $0x1be8] sm:$0xff]
      %v1071 = vld [vmem:[%s169 + $0x1bf0] sm:$0xff]
      %v1072 = vld [vmem:[%s169 + $0x1bf8] sm:$0xff]
      %v1073 = vld [vmem:[%s1] sm:$0xff]
      %v1074 = vld [vmem:[%s1 + $0x8] sm:$0xff]
      %v1075 = vld [vmem:[%s1 + $0x10] sm:$0xff]
      %v1076 = vld [vmem:[%s1 + $0x18] sm:$0xff]
      %v1077 = vld [vmem:[%s1 + $0x20] sm:$0xff]
      %v1078 = vld [vmem:[%s1 + $0x28] sm:$0xff]
      %v1079 = vld [vmem:[%s1 + $0x30] sm:$0xff]
      %v1080 = vld [vmem:[%s1 + $0x38] sm:$0x3]
      %v1081 = vld [vmem:[%s1 + $0x40] sm:$0x3]
      %v1082 = vld [vmem:[%s1 + $0x48] sm:$0x3]
      %v1083 = vld [vmem:[%s1 + $0x50] sm:$0x3]
      %v1084 = vld [vmem:[%s1 + $0x58] sm:$0x3]
      %v1085 = vld [vmem:[%s1 + $0x60] sm:$0x3]
      %v1086 = vld [vmem:[%s1 + $0x68] sm:$0x3]
      %v1087 = vld [vmem:[%s2] sm:$0x1]
      %v1089 = vlaneseq
      %v1090 = vshrl.u32 %v1089, 7
      %v1091 = vsub.s32 0, %v1090
      %v1092 = vrot.slane %v1087, %v1091
      %vm1094 = vcmask 130048
      %v1096 = vsel %vm1094, %v183, 0
      %v1099 = vsel %vm1094, %v190, 0
      %v1102 = vsel %vm1094, %v197, 0
      %v1105 = vsel %vm1094, %v204, 0
      %v1108 = vsel %vm1094, %v211, 0
      %v1111 = vsel %vm1094, %v218, 0
      %v1114 = vsel %vm1094, %v225, 0
      %v1117 = vsel %vm1094, %v232, 0
      %v1120 = vsel %vm1094, %v239, 0
      %v1123 = vsel %vm1094, %v246, 0
      %v1126 = vsel %vm1094, %v253, 0
      %v1129 = vsel %vm1094, %v260, 0
      %v1132 = vsel %vm1094, %v267, 0
      %v1135 = vsel %vm1094, %v274, 0
      %v1138 = vsel %vm1094, %v281, 0
      %v1141 = vsel %vm1094, %v288, 0
      %v1144 = vsel %vm1094, %v295, 0
      %v1147 = vsel %vm1094, %v302, 0
      %v1150 = vsel %vm1094, %v309, 0
      %v1153 = vsel %vm1094, %v316, 0
      %v1156 = vsel %vm1094, %v323, 0
      %v1159 = vsel %vm1094, %v330, 0
      %v1162 = vsel %vm1094, %v337, 0
      %v1165 = vsel %vm1094, %v344, 0
      %v1168 = vsel %vm1094, %v351, 0
      %v1171 = vsel %vm1094, %v358, 0
      %v1174 = vsel %vm1094, %v365, 0
      %v1177 = vsel %vm1094, %v372, 0
      %v1180 = vsel %vm1094, %v379, 0
      %v1183 = vsel %vm1094, %v386, 0
      %v1186 = vsel %vm1094, %v393, 0
      %v1189 = vsel %vm1094, %v400, 0
      %v1192 = vsel %vm1094, %v407, 0
      %v1195 = vsel %vm1094, %v414, 0
      %v1198 = vsel %vm1094, %v421, 0
      %v1201 = vsel %vm1094, %v428, 0
      %v1204 = vsel %vm1094, %v435, 0
      %v1207 = vsel %vm1094, %v442, 0
      %v1210 = vsel %vm1094, %v449, 0
      %v1213 = vsel %vm1094, %v456, 0
      %v1216 = vsel %vm1094, %v463, 0
      %v1219 = vsel %vm1094, %v470, 0
      %v1222 = vsel %vm1094, %v477, 0
      %v1225 = vsel %vm1094, %v484, 0
      %v1228 = vsel %vm1094, %v491, 0
      %v1231 = vsel %vm1094, %v498, 0
      %v1234 = vsel %vm1094, %v505, 0
      %v1237 = vsel %vm1094, %v512, 0
      %v1240 = vsel %vm1094, %v519, 0
      %v1243 = vsel %vm1094, %v526, 0
      %v1246 = vsel %vm1094, %v533, 0
      %v1249 = vsel %vm1094, %v540, 0
      %v1252 = vsel %vm1094, %v547, 0
      %v1255 = vsel %vm1094, %v554, 0
      %v1258 = vsel %vm1094, %v561, 0
      %v1261 = vsel %vm1094, %v568, 0
      %v1264 = vsel %vm1094, %v575, 0
      %v1267 = vsel %vm1094, %v582, 0
      %v1270 = vsel %vm1094, %v589, 0
      %v1273 = vsel %vm1094, %v596, 0
      %v1276 = vsel %vm1094, %v603, 0
      %v1279 = vsel %vm1094, %v610, 0
      %v1282 = vsel %vm1094, %v617, 0
      %v1285 = vsel %vm1094, %v624, 0
      %v1288 = vsel %vm1094, %v631, 0
      %v1291 = vsel %vm1094, %v638, 0
      %v1294 = vsel %vm1094, %v645, 0
      %v1297 = vsel %vm1094, %v652, 0
      %v1300 = vsel %vm1094, %v659, 0
      %v1303 = vsel %vm1094, %v666, 0
      %v1306 = vsel %vm1094, %v673, 0
      %v1309 = vsel %vm1094, %v680, 0
      %v1312 = vsel %vm1094, %v687, 0
      %v1315 = vsel %vm1094, %v694, 0
      %v1318 = vsel %vm1094, %v701, 0
      %v1321 = vsel %vm1094, %v708, 0
      %v1324 = vsel %vm1094, %v715, 0
      %v1327 = vsel %vm1094, %v722, 0
      %v1330 = vsel %vm1094, %v729, 0
      %v1333 = vsel %vm1094, %v736, 0
      %v1336 = vsel %vm1094, %v743, 0
      %v1339 = vsel %vm1094, %v750, 0
      %v1342 = vsel %vm1094, %v757, 0
      %v1345 = vsel %vm1094, %v764, 0
      %v1348 = vsel %vm1094, %v771, 0
      %v1351 = vsel %vm1094, %v778, 0
      %v1354 = vsel %vm1094, %v785, 0
      %v1357 = vsel %vm1094, %v792, 0
      %v1360 = vsel %vm1094, %v799, 0
      %v1363 = vsel %vm1094, %v806, 0
      %v1366 = vsel %vm1094, %v813, 0
      %v1369 = vsel %vm1094, %v820, 0
      %v1372 = vsel %vm1094, %v827, 0
      %v1375 = vsel %vm1094, %v834, 0
      %v1378 = vsel %vm1094, %v841, 0
      %v1381 = vsel %vm1094, %v848, 0
      %v1384 = vsel %vm1094, %v855, 0
      %v1387 = vsel %vm1094, %v862, 0
      %v1390 = vsel %vm1094, %v869, 0
      %v1393 = vsel %vm1094, %v876, 0
      %v1396 = vsel %vm1094, %v883, 0
      %v1399 = vsel %vm1094, %v890, 0
      %v1402 = vsel %vm1094, %v897, 0
      %v1405 = vsel %vm1094, %v904, 0
      %v1408 = vsel %vm1094, %v911, 0
      %v1411 = vsel %vm1094, %v918, 0
      %v1414 = vsel %vm1094, %v925, 0
      %v1417 = vsel %vm1094, %v932, 0
      %v1420 = vsel %vm1094, %v939, 0
      %v1423 = vsel %vm1094, %v946, 0
      %v1426 = vsel %vm1094, %v953, 0
      %v1429 = vsel %vm1094, %v960, 0
      %v1432 = vsel %vm1094, %v967, 0
      %v1435 = vsel %vm1094, %v974, 0
      %v1438 = vsel %vm1094, %v981, 0
      %v1441 = vsel %vm1094, %v988, 0
      %v1444 = vsel %vm1094, %v995, 0
      %v1447 = vsel %vm1094, %v1002, 0
      %v1450 = vsel %vm1094, %v1009, 0
      %v1453 = vsel %vm1094, %v1016, 0
      %v1456 = vsel %vm1094, %v1023, 0
      %v1459 = vsel %vm1094, %v1030, 0
      %v1462 = vsel %vm1094, %v1037, 0
      %v1465 = vsel %vm1094, %v1044, 0
      %v1468 = vsel %vm1094, %v1051, 0
      %v1471 = vsel %vm1094, %v1058, 0
      %v1474 = vsel %vm1094, %v1065, 0
      %v1477 = vsel %vm1094, %v1072, 0
      %v1480 = vsel %vm1094, %v1079, 0
      %v1483 = vsel %vm1094, %v1086, 0
      %1485 = vmatprep.subr.mxu0 %v1074
      %1486 = vmatpush1.xpose.msra.mxu0 %v1073
      %1487 = vmatprep.subr.mxu0 %v1081
      %1488 = vmatpush1.xpose.msra.mxu0 %v1080
      %1489 = vmatprep.subr.mxu0 0.0
      %1490 = vmatpush1.xpose.msra.mxu0 0.0
      %1491 = vmatprep.subr.mxu0 0.0
      %1492 = vmatpush1.xpose.msra.mxu0 0.0
      %1493 = vmatprep.subr.mxu0 0.0
      %1494 = vmatpush1.xpose.msra.mxu0 0.0
      %1495 = vmatprep.subr.mxu0 0.0
      %1496 = vmatpush1.xpose.msra.mxu0 0.0
      %1497 = vmatprep.subr.mxu0 0.0
      %1498 = vmatpush1.xpose.msra.mxu0 0.0
      %1499 = vmatprep.subr.mxu0 0.0
      %1500 = vmatpush1.xpose.msra.mxu0 0.0
      %1501 = vmatprep.subr.mxu0 0.0
      %1502 = vmatpush1.xpose.msra.mxu0 0.0
      %1503 = vmatprep.subr.mxu0 0.0
      %1504 = vmatpush1.xpose.msra.mxu0 0.0
      %1505 = vmatprep.subr.mxu0 0.0
      %1506 = vmatpush1.xpose.msra.mxu0 0.0
      %1507 = vmatprep.subr.mxu0 0.0
      %1508 = vmatpush1.xpose.msra.mxu0 0.0
      %1509 = vmatprep.subr.mxu0 0.0
      %1510 = vmatpush1.xpose.msra.mxu0 0.0
      %1511 = vmatprep.subr.mxu0 0.0
      %1512 = vmatpush1.xpose.msra.mxu0 0.0
      %1513 = vmatprep.subr.mxu0 0.0
      %1514 = vmatpush1.xpose.msra.mxu0 0.0
      %1515 = vmatprep.subr.mxu0 0.0
      %1516 = vmatpush1.xpose.msra.mxu0 0.0
      %1517 = vmatprep.subr.mxu0 0.0
      %1518 = vmatpush1.xpose.msra.mxu0 0.0
      %1519 = vmatprep.subr.mxu0 0.0
      %1520 = vmatpush1.xpose.msra.mxu0 0.0
      %1521 = vmatprep.subr.mxu0 0.0
      %1522 = vmatpush1.xpose.msra.mxu0 0.0
      %1523 = vmatprep.subr.mxu0 0.0
      %1524 = vmatpush1.xpose.msra.mxu0 0.0
      %1525 = vmatprep.subr.mxu0 0.0
      %1526 = vmatpush1.xpose.msra.mxu0 0.0
      %1527 = vmatprep.subr.mxu0 0.0
      %1528 = vmatpush1.xpose.msra.mxu0 0.0
      %1529 = vmatprep.subr.mxu0 0.0
      %1530 = vmatpush1.xpose.msra.mxu0 0.0
      %1531 = vmatprep.subr.mxu0 0.0
      %1532 = vmatpush1.xpose.msra.mxu0 0.0
      %1533 = vmatprep.subr.mxu0 0.0
      %1534 = vmatpush1.xpose.msra.mxu0 0.0
      %1535 = vmatprep.subr.mxu0 0.0
      %1536 = vmatpush1.xpose.msra.mxu0 0.0
      %1537 = vmatprep.subr.mxu0 0.0
      %1538 = vmatpush1.xpose.msra.mxu0 0.0
      %1539 = vmatprep.subr.mxu0 0.0
      %1540 = vmatpush1.xpose.msra.mxu0 0.0
      %1541 = vmatprep.subr.mxu0 0.0
      %1542 = vmatpush1.xpose.msra.mxu0 0.0
      %1543 = vmatprep.subr.mxu0 0.0
      %1544 = vmatpush1.xpose.msra.mxu0 0.0
      %1545 = vmatprep.subr.mxu0 0.0
      %1546 = vmatpush1.xpose.msra.mxu0 0.0
      %1547 = vmatprep.subr.mxu0 0.0
      %1548 = vmatpush1.xpose.msra.mxu0 0.0
      %1549 = vmatprep.mubr.f32.mxu0 %v178
      %1550 = vmatmul.mubr.f32.gmra.mrb[0].mxu0 %v177
      %v1551 = vpop.f32.mrb[0].mxu0
      %v1552 = vadd.f32 %v1092, %v1551
      %v1553 = vpop.f32.mrb[0].mxu0
      %1554 = vmatprep.mubr.f32.mxu0 %v185
      %1555 = vmatmul.mubr.f32.gmra.mrb[0].mxu0 %v184
      %v1556 = vpop.f32.mrb[0].mxu0
      %v1557 = vadd.f32 %v1092, %v1556
      %v1558 = vpop.f32.mrb[0].mxu0
      %1559 = vmatprep.mubr.f32.mxu0 %v192
      %1560 = vmatmul.mubr.f32.gmra.mrb[0].mxu0 %v191
      %v1561 = vpop.f32.mrb[0].mxu0
      %v1562 = vadd.f32 %v1092, %v1561
      %v1563 = vpop.f32.mrb[0].mxu0
      %1564 = vmatprep.mubr.f32.mxu0 %v199
      %1565 = vmatmul.mubr.f32.gmra.mrb[0].mxu0 %v198
      %v1566 = vpop.f32.mrb[0].mxu0
      %v1567 = vadd.f32 %v1092, %v1566
      %v1568 = vpop.f32.mrb[0].mxu0
      %1569 = vmatprep.mubr.f32.mxu0 %v206
      %1570 = vmatmul.mubr.f32.gmra.mrb[0].mxu0 %v205
      %v1571 = vpop.f32.mrb[0].mxu0
      %v1572 = vadd.f32 %v1092, %v1571
      %v1573 = vpop.f32.mrb[0].mxu0
      %1574 = vmatprep.mubr.f32.mxu0 %v213
      %1575 = vmatmul.mubr.f32.gmra.mrb[0].mxu0 %v212
      %v1576 = vpop.f32.mrb[0].mxu0
      %v1577 = vadd.f32 %v1092, %v1576
      %v1578 = vpop.f32.mrb[0].mxu0
      %1579 = vmatprep.mubr.f32.mxu0 %v220
      %1580 = vmatmul.mubr.f32.gmra.mrb[0].mxu0 %v219
      %v1581 = vpop.f32.mrb[0].mxu0
      %v1582 = vadd.f32 %v1092, %v1581
      %v1583 = vpop.f32.mrb[0].mxu0
      %1584 = vmatprep.mubr.f32.mxu0 %v227
      %1585 = vmatmul.mubr.f32.gmra.mrb[0].mxu0 %v226
      %v1586 = vpop.f32.mrb[0].mxu0
      %v1587 = vadd.f32 %v1092, %v1586
      %v1588 = vpop.f32.mrb[0].mxu0
      %1589 = vmatprep.mubr.f32.mxu0 %v234
      %1590 = vmatmul.mubr.f32.gmra.mrb[0].mxu0 %v233
      %v1591 = vpop.f32.mrb[0].mxu0
      %v1592 = vadd.f32 %v1092, %v1591
      %v1593 = vpop.f32.mrb[0].mxu0
      %1594 = vmatprep.mubr.f32.mxu0 %v241
      %1595 = vmatmul.mubr.f32.gmra.mrb[0].mxu0 %v240
      %v1596 = vpop.f32.mrb[0].mxu0
      %v1597 = vadd.f32 %v1092, %v1596
      %v1598 = vpop.f32.mrb[0].mxu0
      %1599 = vmatprep.mubr.f32.mxu0 %v248
      %1600 = vmatmul.mubr.f32.gmra.mrb[0].mxu0 %v247
      %v1601 = vpop.f32.mrb[0].mxu0
      %v1602 = vadd.f32 %v1092, %v1601
      %v1603 = vpop.f32.mrb[0].mxu0
      %1604 = vmatprep.mubr.f32.mxu0 %v255
      %1605 = vmatmul.mubr.f32.gmra.mrb[0].mxu0 %v254
      %v1606 = vpop.f32.mrb[0].mxu0
      %v1607 = vadd.f32 %v1092, %v1606
      %v1608 = vpop.f32.mrb[0].mxu0
      %1609 = vmatprep.mubr.f32.mxu0 %v262
      %1610 = vmatmul.mubr.f32.gmra.mrb[0].mxu0 %v261
      %v1611 = vpop.f32.mrb[0].mxu0
      %v1612 = vadd.f32 %v1092, %v1611
      %v1613 = vpop.f32.mrb[0].mxu0
      %1614 = vmatprep.mubr.f32.mxu0 %v269
      %1615 = vmatmul.mubr.f32.gmra.mrb[0].mxu0 %v268
      %v1616 = vpop.f32.mrb[0].mxu0
      %v1617 = vadd.f32 %v1092, %v1616
      %v1618 = vpop.f32.mrb[0].mxu0
      %1619 = vmatprep.mubr.f32.mxu0 %v276
      %1620 = vmatmul.mubr.f32.gmra.mrb[0].mxu0 %v275
      %v1621 = vpop.f32.mrb[0].mxu0
      %v1622 = vadd.f32 %v1092, %v1621
      %v1623 = vpop.f32.mrb[0].mxu0
      %1624 = vmatprep.mubr.f32.mxu0 %v283
      %1625 = vmatmul.mubr.f32.gmra.mrb[0].mxu0 %v282
      %v1626 = vpop.f32.mrb[0].mxu0
      %v1627 = vadd.f32 %v1092, %v1626
      %v1628 = vpop.f32.mrb[0].mxu0
      %1629 = vmatprep.mubr.f32.mxu0 %v290
      %1630 = vmatmul.mubr.f32.gmra.mrb[0].mxu0 %v289
      %v1631 = vpop.f32.mrb[0].mxu0
      %v1632 = vadd.f32 %v1092, %v1631
      %v1633 = vpop.f32.mrb[0].mxu0
      %1634 = vmatprep.mubr.f32.mxu0 %v297
      %1635 = vmatmul.mubr.f32.gmra.mrb[0].mxu0 %v296
      %v1636 = vpop.f32.mrb[0].mxu0
      %v1637 = vadd.f32 %v1092, %v1636
      %v1638 = vpop.f32.mrb[0].mxu0
      %1639 = vmatprep.mubr.f32.mxu0 %v304
      %1640 = vmatmul.mubr.f32.gmra.mrb[0].mxu0 %v303
      %v1641 = vpop.f32.mrb[0].mxu0
      %v1642 = vadd.f32 %v1092, %v1641
      %v1643 = vpop.f32.mrb[0].mxu0
      %1644 = vmatprep.mubr.f32.mxu0 %v311
      %1645 = vmatmul.mubr.f32.gmra.mrb[0].mxu0 %v310
      %v1646 = vpop.f32.mrb[0].mxu0
      %v1647 = vadd.f32 %v1092, %v1646
      %v1648 = vpop.f32.mrb[0].mxu0
      %1649 = vmatprep.mubr.f32.mxu0 %v318
      %1650 = vmatmul.mubr.f32.gmra.mrb[0].mxu0 %v317
      %v1651 = vpop.f32.mrb[0].mxu0
      %v1652 = vadd.f32 %v1092, %v1651
      %v1653 = vpop.f32.mrb[0].mxu0
      %1654 = vmatprep.mubr.f32.mxu0 %v325
      %1655 = vmatmul.mubr.f32.gmra.mrb[0].mxu0 %v324
      %v1656 = vpop.f32.mrb[0].mxu0
      %v1657 = vadd.f32 %v1092, %v1656
      %v1658 = vpop.f32.mrb[0].mxu0
      %1659 = vmatprep.mubr.f32.mxu0 %v332
      %1660 = vmatmul.mubr.f32.gmra.mrb[0].mxu0 %v331
      %v1661 = vpop.f32.mrb[0].mxu0
      %v1662 = vadd.f32 %v1092, %v1661
      %v1663 = vpop.f32.mrb[0].mxu0
      %1664 = vmatprep.mubr.f32.mxu0 %v339
      %1665 = vmatmul.mubr.f32.gmra.mrb[0].mxu0 %v338
      %v1666 = vpop.f32.mrb[0].mxu0
      %v1667 = vadd.f32 %v1092, %v1666
      %v1668 = vpop.f32.mrb[0].mxu0
      %1669 = vmatprep.mubr.f32.mxu0 %v346
      %1670 = vmatmul.mubr.f32.gmra.mrb[0].mxu0 %v345
      %v1671 = vpop.f32.mrb[0].mxu0
      %v1672 = vadd.f32 %v1092, %v1671
      %v1673 = vpop.f32.mrb[0].mxu0
      %1674 = vmatprep.mubr.f32.mxu0 %v353
      %1675 = vmatmul.mubr.f32.gmra.mrb[0].mxu0 %v352
      %v1676 = vpop.f32.mrb[0].mxu0
      %v1677 = vadd.f32 %v1092, %v1676
      %v1678 = vpop.f32.mrb[0].mxu0
      %1679 = vmatprep.mubr.f32.mxu0 %v360
      %1680 = vmatmul.mubr.f32.gmra.mrb[0].mxu0 %v359
      %v1681 = vpop.f32.mrb[0].mxu0
      %v1682 = vadd.f32 %v1092, %v1681
      %v1683 = vpop.f32.mrb[0].mxu0
      %1684 = vmatprep.mubr.f32.mxu0 %v367
      %1685 = vmatmul.mubr.f32.gmra.mrb[0].mxu0 %v366
      %v1686 = vpop.f32.mrb[0].mxu0
      %v1687 = vadd.f32 %v1092, %v1686
      %v1688 = vpop.f32.mrb[0].mxu0
      %1689 = vmatprep.mubr.f32.mxu0 %v374
      %1690 = vmatmul.mubr.f32.gmra.mrb[0].mxu0 %v373
      %v1691 = vpop.f32.mrb[0].mxu0
      %v1692 = vadd.f32 %v1092, %v1691
      %v1693 = vpop.f32.mrb[0].mxu0
      %1694 = vmatprep.mubr.f32.mxu0 %v381
      %1695 = vmatmul.mubr.f32.gmra.mrb[0].mxu0 %v380
      %v1696 = vpop.f32.mrb[0].mxu0
      %v1697 = vadd.f32 %v1092, %v1696
      %v1698 = vpop.f32.mrb[0].mxu0
      %1699 = vmatprep.mubr.f32.mxu0 %v388
      %1700 = vmatmul.mubr.f32.gmra.mrb[0].mxu0 %v387
      %v1701 = vpop.f32.mrb[0].mxu0
      %v1702 = vadd.f32 %v1092, %v1701
      %v1703 = vpop.f32.mrb[0].mxu0
      %1704 = vmatprep.mubr.f32.mxu0 %v395
      %1705 = vmatmul.mubr.f32.gmra.mrb[0].mxu0 %v394
      %v1706 = vpop.f32.mrb[0].mxu0
      %v1707 = vadd.f32 %v1092, %v1706
      %v1708 = vpop.f32.mrb[0].mxu0
      %1709 = vmatprep.mubr.f32.mxu0 %v402
      %1710 = vmatmul.mubr.f32.gmra.mrb[0].mxu0 %v401
      %v1711 = vpop.f32.mrb[0].mxu0
      %v1712 = vadd.f32 %v1092, %v1711
      %v1713 = vpop.f32.mrb[0].mxu0
      %1714 = vmatprep.mubr.f32.mxu0 %v409
      %1715 = vmatmul.mubr.f32.gmra.mrb[0].mxu0 %v408
      %v1716 = vpop.f32.mrb[0].mxu0
      %v1717 = vadd.f32 %v1092, %v1716
      %v1718 = vpop.f32.mrb[0].mxu0
      %1719 = vmatprep.mubr.f32.mxu0 %v416
      %1720 = vmatmul.mubr.f32.gmra.mrb[0].mxu0 %v415
      %v1721 = vpop.f32.mrb[0].mxu0
      %v1722 = vadd.f32 %v1092, %v1721
      %v1723 = vpop.f32.mrb[0].mxu0
      %1724 = vmatprep.mubr.f32.mxu0 %v423
      %1725 = vmatmul.mubr.f32.gmra.mrb[0].mxu0 %v422
      %v1726 = vpop.f32.mrb[0].mxu0
      %v1727 = vadd.f32 %v1092, %v1726
      %v1728 = vpop.f32.mrb[0].mxu0
      %1729 = vmatprep.mubr.f32.mxu0 %v430
      %1730 = vmatmul.mubr.f32.gmra.mrb[0].mxu0 %v429
      %v1731 = vpop.f32.mrb[0].mxu0
      %v1732 = vadd.f32 %v1092, %v1731
      %v1733 = vpop.f32.mrb[0].mxu0
      %1734 = vmatprep.mubr.f32.mxu0 %v437
      %1735 = vmatmul.mubr.f32.gmra.mrb[0].mxu0 %v436
      %v1736 = vpop.f32.mrb[0].mxu0
      %v1737 = vadd.f32 %v1092, %v1736
      %v1738 = vpop.f32.mrb[0].mxu0
      %1739 = vmatprep.mubr.f32.mxu0 %v444
      %1740 = vmatmul.mubr.f32.gmra.mrb[0].mxu0 %v443
      %v1741 = vpop.f32.mrb[0].mxu0
      %v1742 = vadd.f32 %v1092, %v1741
      %v1743 = vpop.f32.mrb[0].mxu0
      %1744 = vmatprep.mubr.f32.mxu0 %v451
      %1745 = vmatmul.mubr.f32.gmra.mrb[0].mxu0 %v450
      %v1746 = vpop.f32.mrb[0].mxu0
      %v1747 = vadd.f32 %v1092, %v1746
      %v1748 = vpop.f32.mrb[0].mxu0
      %1749 = vmatprep.mubr.f32.mxu0 %v458
      %1750 = vmatmul.mubr.f32.gmra.mrb[0].mxu0 %v457
      %v1751 = vpop.f32.mrb[0].mxu0
      %v1752 = vadd.f32 %v1092, %v1751
      %v1753 = vpop.f32.mrb[0].mxu0
      %1754 = vmatprep.mubr.f32.mxu0 %v465
      %1755 = vmatmul.mubr.f32.gmra.mrb[0].mxu0 %v464
      %v1756 = vpop.f32.mrb[0].mxu0
      %v1757 = vadd.f32 %v1092, %v1756
      %v1758 = vpop.f32.mrb[0].mxu0
      %1759 = vmatprep.mubr.f32.mxu0 %v472
      %1760 = vmatmul.mubr.f32.gmra.mrb[0].mxu0 %v471
      %v1761 = vpop.f32.mrb[0].mxu0
      %v1762 = vadd.f32 %v1092, %v1761
      %v1763 = vpop.f32.mrb[0].mxu0
      %1764 = vmatprep.mubr.f32.mxu0 %v479
      %1765 = vmatmul.mubr.f32.gmra.mrb[0].mxu0 %v478
      %v1766 = vpop.f32.mrb[0].mxu0
      %v1767 = vadd.f32 %v1092, %v1766
      %v1768 = vpop.f32.mrb[0].mxu0
      %1769 = vmatprep.mubr.f32.mxu0 %v486
      %1770 = vmatmul.mubr.f32.gmra.mrb[0].mxu0 %v485
      %v1771 = vpop.f32.mrb[0].mxu0
      %v1772 = vadd.f32 %v1092, %v1771
      %v1773 = vpop.f32.mrb[0].mxu0
      %1774 = vmatprep.mubr.f32.mxu0 %v493
      %1775 = vmatmul.mubr.f32.gmra.mrb[0].mxu0 %v492
      %v1776 = vpop.f32.mrb[0].mxu0
      %v1777 = vadd.f32 %v1092, %v1776
      %v1778 = vpop.f32.mrb[0].mxu0
      %1779 = vmatprep.mubr.f32.mxu0 %v500
      %1780 = vmatmul.mubr.f32.gmra.mrb[0].mxu0 %v499
      %v1781 = vpop.f32.mrb[0].mxu0
      %v1782 = vadd.f32 %v1092, %v1781
      %v1783 = vpop.f32.mrb[0].mxu0
      %1784 = vmatprep.mubr.f32.mxu0 %v507
      %1785 = vmatmul.mubr.f32.gmra.mrb[0].mxu0 %v506
      %v1786 = vpop.f32.mrb[0].mxu0
      %v1787 = vadd.f32 %v1092, %v1786
      %v1788 = vpop.f32.mrb[0].mxu0
      %1789 = vmatprep.mubr.f32.mxu0 %v514
      %1790 = vmatmul.mubr.f32.gmra.mrb[0].mxu0 %v513
      %v1791 = vpop.f32.mrb[0].mxu0
      %v1792 = vadd.f32 %v1092, %v1791
      %v1793 = vpop.f32.mrb[0].mxu0
      %1794 = vmatprep.mubr.f32.mxu0 %v521
      %1795 = vmatmul.mubr.f32.gmra.mrb[0].mxu0 %v520
      %v1796 = vpop.f32.mrb[0].mxu0
      %v1797 = vadd.f32 %v1092, %v1796
      %v1798 = vpop.f32.mrb[0].mxu0
      %1799 = vmatprep.mubr.f32.mxu0 %v528
      %1800 = vmatmul.mubr.f32.gmra.mrb[0].mxu0 %v527
      %v1801 = vpop.f32.mrb[0].mxu0
      %v1802 = vadd.f32 %v1092, %v1801
      %v1803 = vpop.f32.mrb[0].mxu0
      %1804 = vmatprep.mubr.f32.mxu0 %v535
      %1805 = vmatmul.mubr.f32.gmra.mrb[0].mxu0 %v534
      %v1806 = vpop.f32.mrb[0].mxu0
      %v1807 = vadd.f32 %v1092, %v1806
      %v1808 = vpop.f32.mrb[0].mxu0
      %1809 = vmatprep.mubr.f32.mxu0 %v542
      %1810 = vmatmul.mubr.f32.gmra.mrb[0].mxu0 %v541
      %v1811 = vpop.f32.mrb[0].mxu0
      %v1812 = vadd.f32 %v1092, %v1811
      %v1813 = vpop.f32.mrb[0].mxu0
      %1814 = vmatprep.mubr.f32.mxu0 %v549
      %1815 = vmatmul.mubr.f32.gmra.mrb[0].mxu0 %v548
      %v1816 = vpop.f32.mrb[0].mxu0
      %v1817 = vadd.f32 %v1092, %v1816
      %v1818 = vpop.f32.mrb[0].mxu0
      %1819 = vmatprep.mubr.f32.mxu0 %v556
      %1820 = vmatmul.mubr.f32.gmra.mrb[0].mxu0 %v555
      %v1821 = vpop.f32.mrb[0].mxu0
      %v1822 = vadd.f32 %v1092, %v1821
      %v1823 = vpop.f32.mrb[0].mxu0
      %1824 = vmatprep.mubr.f32.mxu0 %v563
      %1825 = vmatmul.mubr.f32.gmra.mrb[0].mxu0 %v562
      %v1826 = vpop.f32.mrb[0].mxu0
      %v1827 = vadd.f32 %v1092, %v1826
      %v1828 = vpop.f32.mrb[0].mxu0
      %1829 = vmatprep.mubr.f32.mxu0 %v570
      %1830 = vmatmul.mubr.f32.gmra.mrb[0].mxu0 %v569
      %v1831 = vpop.f32.mrb[0].mxu0
      %v1832 = vadd.f32 %v1092, %v1831
      %v1833 = vpop.f32.mrb[0].mxu0
      %1834 = vmatprep.mubr.f32.mxu0 %v577
      %1835 = vmatmul.mubr.f32.gmra.mrb[0].mxu0 %v576
      %v1836 = vpop.f32.mrb[0].mxu0
      %v1837 = vadd.f32 %v1092, %v1836
      %v1838 = vpop.f32.mrb[0].mxu0
      %1839 = vmatprep.mubr.f32.mxu0 %v584
      %1840 = vmatmul.mubr.f32.gmra.mrb[0].mxu0 %v583
      %v1841 = vpop.f32.mrb[0].mxu0
      %v1842 = vadd.f32 %v1092, %v1841
      %v1843 = vpop.f32.mrb[0].mxu0
      %1844 = vmatprep.mubr.f32.mxu0 %v591
      %1845 = vmatmul.mubr.f32.gmra.mrb[0].mxu0 %v590
      %v1846 = vpop.f32.mrb[0].mxu0
      %v1847 = vadd.f32 %v1092, %v1846
      %v1848 = vpop.f32.mrb[0].mxu0
      %1849 = vmatprep.mubr.f32.mxu0 %v598
      %1850 = vmatmul.mubr.f32.gmra.mrb[0].mxu0 %v597
      %v1851 = vpop.f32.mrb[0].mxu0
      %v1852 = vadd.f32 %v1092, %v1851
      %v1853 = vpop.f32.mrb[0].mxu0
      %1854 = vmatprep.mubr.f32.mxu0 %v605
      %1855 = vmatmul.mubr.f32.gmra.mrb[0].mxu0 %v604
      %v1856 = vpop.f32.mrb[0].mxu0
      %v1857 = vadd.f32 %v1092, %v1856
      %v1858 = vpop.f32.mrb[0].mxu0
      %1859 = vmatprep.mubr.f32.mxu0 %v612
      %1860 = vmatmul.mubr.f32.gmra.mrb[0].mxu0 %v611
      %v1861 = vpop.f32.mrb[0].mxu0
      %v1862 = vadd.f32 %v1092, %v1861
      %v1863 = vpop.f32.mrb[0].mxu0
      %1864 = vmatprep.mubr.f32.mxu0 %v619
      %1865 = vmatmul.mubr.f32.gmra.mrb[0].mxu0 %v618
      %v1866 = vpop.f32.mrb[0].mxu0
      %v1867 = vadd.f32 %v1092, %v1866
      %v1868 = vpop.f32.mrb[0].mxu0
      %1869 = vmatprep.mubr.f32.mxu0 %v626
      %1870 = vmatmul.mubr.f32.gmra.mrb[0].mxu0 %v625
      %v1871 = vpop.f32.mrb[0].mxu0
      %v1872 = vadd.f32 %v1092, %v1871
      %v1873 = vpop.f32.mrb[0].mxu0
      %1874 = vmatprep.mubr.f32.mxu0 %v633
      %1875 = vmatmul.mubr.f32.gmra.mrb[0].mxu0 %v632
      %v1876 = vpop.f32.mrb[0].mxu0
      %v1877 = vadd.f32 %v1092, %v1876
      %v1878 = vpop.f32.mrb[0].mxu0
      %1879 = vmatprep.mubr.f32.mxu0 %v640
      %1880 = vmatmul.mubr.f32.gmra.mrb[0].mxu0 %v639
      %v1881 = vpop.f32.mrb[0].mxu0
      %v1882 = vadd.f32 %v1092, %v1881
      %v1883 = vpop.f32.mrb[0].mxu0
      %1884 = vmatprep.mubr.f32.mxu0 %v647
      %1885 = vmatmul.mubr.f32.gmra.mrb[0].mxu0 %v646
      %v1886 = vpop.f32.mrb[0].mxu0
      %v1887 = vadd.f32 %v1092, %v1886
      %v1888 = vpop.f32.mrb[0].mxu0
      %1889 = vmatprep.mubr.f32.mxu0 %v654
      %1890 = vmatmul.mubr.f32.gmra.mrb[0].mxu0 %v653
      %v1891 = vpop.f32.mrb[0].mxu0
      %v1892 = vadd.f32 %v1092, %v1891
      %v1893 = vpop.f32.mrb[0].mxu0
      %1894 = vmatprep.mubr.f32.mxu0 %v661
      %1895 = vmatmul.mubr.f32.gmra.mrb[0].mxu0 %v660
      %v1896 = vpop.f32.mrb[0].mxu0
      %v1897 = vadd.f32 %v1092, %v1896
      %v1898 = vpop.f32.mrb[0].mxu0
      %1899 = vmatprep.mubr.f32.mxu0 %v668
      %1900 = vmatmul.mubr.f32.gmra.mrb[0].mxu0 %v667
      %v1901 = vpop.f32.mrb[0].mxu0
      %v1902 = vadd.f32 %v1092, %v1901
      %v1903 = vpop.f32.mrb[0].mxu0
      %1904 = vmatprep.mubr.f32.mxu0 %v675
      %1905 = vmatmul.mubr.f32.gmra.mrb[0].mxu0 %v674
      %v1906 = vpop.f32.mrb[0].mxu0
      %v1907 = vadd.f32 %v1092, %v1906
      %v1908 = vpop.f32.mrb[0].mxu0
      %1909 = vmatprep.mubr.f32.mxu0 %v682
      %1910 = vmatmul.mubr.f32.gmra.mrb[0].mxu0 %v681
      %v1911 = vpop.f32.mrb[0].mxu0
      %v1912 = vadd.f32 %v1092, %v1911
      %v1913 = vpop.f32.mrb[0].mxu0
      %1914 = vmatprep.mubr.f32.mxu0 %v689
      %1915 = vmatmul.mubr.f32.gmra.mrb[0].mxu0 %v688
      %v1916 = vpop.f32.mrb[0].mxu0
      %v1917 = vadd.f32 %v1092, %v1916
      %v1918 = vpop.f32.mrb[0].mxu0
      %1919 = vmatprep.mubr.f32.mxu0 %v696
      %1920 = vmatmul.mubr.f32.gmra.mrb[0].mxu0 %v695
      %v1921 = vpop.f32.mrb[0].mxu0
      %v1922 = vadd.f32 %v1092, %v1921
      %v1923 = vpop.f32.mrb[0].mxu0
      %1924 = vmatprep.mubr.f32.mxu0 %v703
      %1925 = vmatmul.mubr.f32.gmra.mrb[0].mxu0 %v702
      %v1926 = vpop.f32.mrb[0].mxu0
      %v1927 = vadd.f32 %v1092, %v1926
      %v1928 = vpop.f32.mrb[0].mxu0
      %1929 = vmatprep.mubr.f32.mxu0 %v710
      %1930 = vmatmul.mubr.f32.gmra.mrb[0].mxu0 %v709
      %v1931 = vpop.f32.mrb[0].mxu0
      %v1932 = vadd.f32 %v1092, %v1931
      %v1933 = vpop.f32.mrb[0].mxu0
      %1934 = vmatprep.mubr.f32.mxu0 %v717
      %1935 = vmatmul.mubr.f32.gmra.mrb[0].mxu0 %v716
      %v1936 = vpop.f32.mrb[0].mxu0
      %v1937 = vadd.f32 %v1092, %v1936
      %v1938 = vpop.f32.mrb[0].mxu0
      %1939 = vmatprep.mubr.f32.mxu0 %v724
      %1940 = vmatmul.mubr.f32.gmra.mrb[0].mxu0 %v723
      %v1941 = vpop.f32.mrb[0].mxu0
      %v1942 = vadd.f32 %v1092, %v1941
      %v1943 = vpop.f32.mrb[0].mxu0
      %1944 = vmatprep.mubr.f32.mxu0 %v731
      %1945 = vmatmul.mubr.f32.gmra.mrb[0].mxu0 %v730
      %v1946 = vpop.f32.mrb[0].mxu0
      %v1947 = vadd.f32 %v1092, %v1946
      %v1948 = vpop.f32.mrb[0].mxu0
      %1949 = vmatprep.mubr.f32.mxu0 %v738
      %1950 = vmatmul.mubr.f32.gmra.mrb[0].mxu0 %v737
      %v1951 = vpop.f32.mrb[0].mxu0
      %v1952 = vadd.f32 %v1092, %v1951
      %v1953 = vpop.f32.mrb[0].mxu0
      %1954 = vmatprep.mubr.f32.mxu0 %v745
      %1955 = vmatmul.mubr.f32.gmra.mrb[0].mxu0 %v744
      %v1956 = vpop.f32.mrb[0].mxu0
      %v1957 = vadd.f32 %v1092, %v1956
      %v1958 = vpop.f32.mrb[0].mxu0
      %1959 = vmatprep.mubr.f32.mxu0 %v752
      %1960 = vmatmul.mubr.f32.gmra.mrb[0].mxu0 %v751
      %v1961 = vpop.f32.mrb[0].mxu0
      %v1962 = vadd.f32 %v1092, %v1961
      %v1963 = vpop.f32.mrb[0].mxu0
      %1964 = vmatprep.mubr.f32.mxu0 %v759
      %1965 = vmatmul.mubr.f32.gmra.mrb[0].mxu0 %v758
      %v1966 = vpop.f32.mrb[0].mxu0
      %v1967 = vadd.f32 %v1092, %v1966
      %v1968 = vpop.f32.mrb[0].mxu0
      %1969 = vmatprep.mubr.f32.mxu0 %v766
      %1970 = vmatmul.mubr.f32.gmra.mrb[0].mxu0 %v765
      %v1971 = vpop.f32.mrb[0].mxu0
      %v1972 = vadd.f32 %v1092, %v1971
      %v1973 = vpop.f32.mrb[0].mxu0
      %1974 = vmatprep.mubr.f32.mxu0 %v773
      %1975 = vmatmul.mubr.f32.gmra.mrb[0].mxu0 %v772
      %v1976 = vpop.f32.mrb[0].mxu0
      %v1977 = vadd.f32 %v1092, %v1976
      %v1978 = vpop.f32.mrb[0].mxu0
      %1979 = vmatprep.mubr.f32.mxu0 %v780
      %1980 = vmatmul.mubr.f32.gmra.mrb[0].mxu0 %v779
      %v1981 = vpop.f32.mrb[0].mxu0
      %v1982 = vadd.f32 %v1092, %v1981
      %v1983 = vpop.f32.mrb[0].mxu0
      %1984 = vmatprep.mubr.f32.mxu0 %v787
      %1985 = vmatmul.mubr.f32.gmra.mrb[0].mxu0 %v786
      %v1986 = vpop.f32.mrb[0].mxu0
      %v1987 = vadd.f32 %v1092, %v1986
      %v1988 = vpop.f32.mrb[0].mxu0
      %1989 = vmatprep.mubr.f32.mxu0 %v794
      %1990 = vmatmul.mubr.f32.gmra.mrb[0].mxu0 %v793
      %v1991 = vpop.f32.mrb[0].mxu0
      %v1992 = vadd.f32 %v1092, %v1991
      %v1993 = vpop.f32.mrb[0].mxu0
      %1994 = vmatprep.mubr.f32.mxu0 %v801
      %1995 = vmatmul.mubr.f32.gmra.mrb[0].mxu0 %v800
      %v1996 = vpop.f32.mrb[0].mxu0
      %v1997 = vadd.f32 %v1092, %v1996
      %v1998 = vpop.f32.mrb[0].mxu0
      %1999 = vmatprep.mubr.f32.mxu0 %v808
      %2000 = vmatmul.mubr.f32.gmra.mrb[0].mxu0 %v807
      %v2001 = vpop.f32.mrb[0].mxu0
      %v2002 = vadd.f32 %v1092, %v2001
      %v2003 = vpop.f32.mrb[0].mxu0
      %2004 = vmatprep.mubr.f32.mxu0 %v815
      %2005 = vmatmul.mubr.f32.gmra.mrb[0].mxu0 %v814
      %v2006 = vpop.f32.mrb[0].mxu0
      %v2007 = vadd.f32 %v1092, %v2006
      %v2008 = vpop.f32.mrb[0].mxu0
      %2009 = vmatprep.mubr.f32.mxu0 %v822
      %2010 = vmatmul.mubr.f32.gmra.mrb[0].mxu0 %v821
      %v2011 = vpop.f32.mrb[0].mxu0
      %v2012 = vadd.f32 %v1092, %v2011
      %v2013 = vpop.f32.mrb[0].mxu0
      %2014 = vmatprep.mubr.f32.mxu0 %v829
      %2015 = vmatmul.mubr.f32.gmra.mrb[0].mxu0 %v828
      %v2016 = vpop.f32.mrb[0].mxu0
      %v2017 = vadd.f32 %v1092, %v2016
      %v2018 = vpop.f32.mrb[0].mxu0
      %2019 = vmatprep.mubr.f32.mxu0 %v836
      %2020 = vmatmul.mubr.f32.gmra.mrb[0].mxu0 %v835
      %v2021 = vpop.f32.mrb[0].mxu0
      %v2022 = vadd.f32 %v1092, %v2021
      %v2023 = vpop.f32.mrb[0].mxu0
      %2024 = vmatprep.mubr.f32.mxu0 %v843
      %2025 = vmatmul.mubr.f32.gmra.mrb[0].mxu0 %v842
      %v2026 = vpop.f32.mrb[0].mxu0
      %v2027 = vadd.f32 %v1092, %v2026
      %v2028 = vpop.f32.mrb[0].mxu0
      %2029 = vmatprep.mubr.f32.mxu0 %v850
      %2030 = vmatmul.mubr.f32.gmra.mrb[0].mxu0 %v849
      %v2031 = vpop.f32.mrb[0].mxu0
      %v2032 = vadd.f32 %v1092, %v2031
      %v2033 = vpop.f32.mrb[0].mxu0
      %2034 = vmatprep.mubr.f32.mxu0 %v857
      %2035 = vmatmul.mubr.f32.gmra.mrb[0].mxu0 %v856
      %v2036 = vpop.f32.mrb[0].mxu0
      %v2037 = vadd.f32 %v1092, %v2036
      %v2038 = vpop.f32.mrb[0].mxu0
      %2039 = vmatprep.mubr.f32.mxu0 %v864
      %2040 = vmatmul.mubr.f32.gmra.mrb[0].mxu0 %v863
      %v2041 = vpop.f32.mrb[0].mxu0
      %v2042 = vadd.f32 %v1092, %v2041
      %v2043 = vpop.f32.mrb[0].mxu0
      %2044 = vmatprep.mubr.f32.mxu0 %v871
      %2045 = vmatmul.mubr.f32.gmra.mrb[0].mxu0 %v870
      %v2046 = vpop.f32.mrb[0].mxu0
      %v2047 = vadd.f32 %v1092, %v2046
      %v2048 = vpop.f32.mrb[0].mxu0
      %2049 = vmatprep.mubr.f32.mxu0 %v878
      %2050 = vmatmul.mubr.f32.gmra.mrb[0].mxu0 %v877
      %v2051 = vpop.f32.mrb[0].mxu0
      %v2052 = vadd.f32 %v1092, %v2051
      %v2053 = vpop.f32.mrb[0].mxu0
      %2054 = vmatprep.mubr.f32.mxu0 %v885
      %2055 = vmatmul.mubr.f32.gmra.mrb[0].mxu0 %v884
      %v2056 = vpop.f32.mrb[0].mxu0
      %v2057 = vadd.f32 %v1092, %v2056
      %v2058 = vpop.f32.mrb[0].mxu0
      %2059 = vmatprep.mubr.f32.mxu0 %v892
      %2060 = vmatmul.mubr.f32.gmra.mrb[0].mxu0 %v891
      %v2061 = vpop.f32.mrb[0].mxu0
      %v2062 = vadd.f32 %v1092, %v2061
      %v2063 = vpop.f32.mrb[0].mxu0
      %2064 = vmatprep.mubr.f32.mxu0 %v899
      %2065 = vmatmul.mubr.f32.gmra.mrb[0].mxu0 %v898
      %v2066 = vpop.f32.mrb[0].mxu0
      %v2067 = vadd.f32 %v1092, %v2066
      %v2068 = vpop.f32.mrb[0].mxu0
      %2069 = vmatprep.mubr.f32.mxu0 %v906
      %2070 = vmatmul.mubr.f32.gmra.mrb[0].mxu0 %v905
      %v2071 = vpop.f32.mrb[0].mxu0
      %v2072 = vadd.f32 %v1092, %v2071
      %v2073 = vpop.f32.mrb[0].mxu0
      %2074 = vmatprep.mubr.f32.mxu0 %v913
      %2075 = vmatmul.mubr.f32.gmra.mrb[0].mxu0 %v912
      %v2076 = vpop.f32.mrb[0].mxu0
      %v2077 = vadd.f32 %v1092, %v2076
      %v2078 = vpop.f32.mrb[0].mxu0
      %2079 = vmatprep.mubr.f32.mxu0 %v920
      %2080 = vmatmul.mubr.f32.gmra.mrb[0].mxu0 %v919
      %v2081 = vpop.f32.mrb[0].mxu0
      %v2082 = vadd.f32 %v1092, %v2081
      %v2083 = vpop.f32.mrb[0].mxu0
      %2084 = vmatprep.mubr.f32.mxu0 %v927
      %2085 = vmatmul.mubr.f32.gmra.mrb[0].mxu0 %v926
      %v2086 = vpop.f32.mrb[0].mxu0
      %v2087 = vadd.f32 %v1092, %v2086
      %v2088 = vpop.f32.mrb[0].mxu0
      %2089 = vmatprep.mubr.f32.mxu0 %v934
      %2090 = vmatmul.mubr.f32.gmra.mrb[0].mxu0 %v933
      %v2091 = vpop.f32.mrb[0].mxu0
      %v2092 = vadd.f32 %v1092, %v2091
      %v2093 = vpop.f32.mrb[0].mxu0
      %2094 = vmatprep.mubr.f32.mxu0 %v941
      %2095 = vmatmul.mubr.f32.gmra.mrb[0].mxu0 %v940
      %v2096 = vpop.f32.mrb[0].mxu0
      %v2097 = vadd.f32 %v1092, %v2096
      %v2098 = vpop.f32.mrb[0].mxu0
      %2099 = vmatprep.mubr.f32.mxu0 %v948
      %2100 = vmatmul.mubr.f32.gmra.mrb[0].mxu0 %v947
      %v2101 = vpop.f32.mrb[0].mxu0
      %v2102 = vadd.f32 %v1092, %v2101
      %v2103 = vpop.f32.mrb[0].mxu0
      %2104 = vmatprep.mubr.f32.mxu0 %v955
      %2105 = vmatmul.mubr.f32.gmra.mrb[0].mxu0 %v954
      %v2106 = vpop.f32.mrb[0].mxu0
      %v2107 = vadd.f32 %v1092, %v2106
      %v2108 = vpop.f32.mrb[0].mxu0
      %2109 = vmatprep.mubr.f32.mxu0 %v962
      %2110 = vmatmul.mubr.f32.gmra.mrb[0].mxu0 %v961
      %v2111 = vpop.f32.mrb[0].mxu0
      %v2112 = vadd.f32 %v1092, %v2111
      %v2113 = vpop.f32.mrb[0].mxu0
      %2114 = vmatprep.mubr.f32.mxu0 %v969
      %2115 = vmatmul.mubr.f32.gmra.mrb[0].mxu0 %v968
      %v2116 = vpop.f32.mrb[0].mxu0
      %v2117 = vadd.f32 %v1092, %v2116
      %v2118 = vpop.f32.mrb[0].mxu0
      %2119 = vmatprep.mubr.f32.mxu0 %v976
      %2120 = vmatmul.mubr.f32.gmra.mrb[0].mxu0 %v975
      %v2121 = vpop.f32.mrb[0].mxu0
      %v2122 = vadd.f32 %v1092, %v2121
      %v2123 = vpop.f32.mrb[0].mxu0
      %2124 = vmatprep.mubr.f32.mxu0 %v983
      %2125 = vmatmul.mubr.f32.gmra.mrb[0].mxu0 %v982
      %v2126 = vpop.f32.mrb[0].mxu0
      %v2127 = vadd.f32 %v1092, %v2126
      %v2128 = vpop.f32.mrb[0].mxu0
      %2129 = vmatprep.mubr.f32.mxu0 %v990
      %2130 = vmatmul.mubr.f32.gmra.mrb[0].mxu0 %v989
      %v2131 = vpop.f32.mrb[0].mxu0
      %v2132 = vadd.f32 %v1092, %v2131
      %v2133 = vpop.f32.mrb[0].mxu0
      %2134 = vmatprep.mubr.f32.mxu0 %v997
      %2135 = vmatmul.mubr.f32.gmra.mrb[0].mxu0 %v996
      %v2136 = vpop.f32.mrb[0].mxu0
      %v2137 = vadd.f32 %v1092, %v2136
      %v2138 = vpop.f32.mrb[0].mxu0
      %2139 = vmatprep.mubr.f32.mxu0 %v1004
      %2140 = vmatmul.mubr.f32.gmra.mrb[0].mxu0 %v1003
      %v2141 = vpop.f32.mrb[0].mxu0
      %v2142 = vadd.f32 %v1092, %v2141
      %v2143 = vpop.f32.mrb[0].mxu0
      %2144 = vmatprep.mubr.f32.mxu0 %v1011
      %2145 = vmatmul.mubr.f32.gmra.mrb[0].mxu0 %v1010
      %v2146 = vpop.f32.mrb[0].mxu0
      %v2147 = vadd.f32 %v1092, %v2146
      %v2148 = vpop.f32.mrb[0].mxu0
      %2149 = vmatprep.mubr.f32.mxu0 %v1018
      %2150 = vmatmul.mubr.f32.gmra.mrb[0].mxu0 %v1017
      %v2151 = vpop.f32.mrb[0].mxu0
      %v2152 = vadd.f32 %v1092, %v2151
      %v2153 = vpop.f32.mrb[0].mxu0
      %2154 = vmatprep.mubr.f32.mxu0 %v1025
      %2155 = vmatmul.mubr.f32.gmra.mrb[0].mxu0 %v1024
      %v2156 = vpop.f32.mrb[0].mxu0
      %v2157 = vadd.f32 %v1092, %v2156
      %v2158 = vpop.f32.mrb[0].mxu0
      %2159 = vmatprep.mubr.f32.mxu0 %v1032
      %2160 = vmatmul.mubr.f32.gmra.mrb[0].mxu0 %v1031
      %v2161 = vpop.f32.mrb[0].mxu0
      %v2162 = vadd.f32 %v1092, %v2161
      %v2163 = vpop.f32.mrb[0].mxu0
      %2164 = vmatprep.mubr.f32.mxu0 %v1039
      %2165 = vmatmul.mubr.f32.gmra.mrb[0].mxu0 %v1038
      %v2166 = vpop.f32.mrb[0].mxu0
      %v2167 = vadd.f32 %v1092, %v2166
      %v2168 = vpop.f32.mrb[0].mxu0
      %2169 = vmatprep.mubr.f32.mxu0 %v1046
      %2170 = vmatmul.mubr.f32.gmra.mrb[0].mxu0 %v1045
      %v2171 = vpop.f32.mrb[0].mxu0
      %v2172 = vadd.f32 %v1092, %v2171
      %v2173 = vpop.f32.mrb[0].mxu0
      %2174 = vmatprep.mubr.f32.mxu0 %v1053
      %2175 = vmatmul.mubr.f32.gmra.mrb[0].mxu0 %v1052
      %v2176 = vpop.f32.mrb[0].mxu0
      %v2177 = vadd.f32 %v1092, %v2176
      %v2178 = vpop.f32.mrb[0].mxu0
      %2179 = vmatprep.mubr.f32.mxu0 %v1060
      %2180 = vmatmul.mubr.f32.gmra.mrb[0].mxu0 %v1059
      %v2181 = vpop.f32.mrb[0].mxu0
      %v2182 = vadd.f32 %v1092, %v2181
      %v2183 = vpop.f32.mrb[0].mxu0
      %2184 = vmatprep.mubr.f32.mxu0 %v1067
      %2185 = vmatmul.mubr.f32.gmra.mrb[0].mxu0 %v1066
      %v2186 = vpop.f32.mrb[0].mxu0
      %v2187 = vadd.f32 %v1092, %v2186
      %v2188 = vpop.f32.mrb[0].mxu0
      %2189 = vdwg.mxu0
      %2190 = vmatprep.subr.mxu0 %v1076
      %2191 = vmatpush1.xpose.msra.mxu0 %v1075
      %2192 = vmatprep.subr.mxu0 %v1083
      %2193 = vmatpush1.xpose.msra.mxu0 %v1082
      %2194 = vmatprep.subr.mxu0 0.0
      %2195 = vmatpush1.xpose.msra.mxu0 0.0
      %2196 = vmatprep.subr.mxu0 0.0
      %2197 = vmatpush1.xpose.msra.mxu0 0.0
      %2198 = vmatprep.subr.mxu0 0.0
      %2199 = vmatpush1.xpose.msra.mxu0 0.0
      %2200 = vmatprep.subr.mxu0 0.0
      %2201 = vmatpush1.xpose.msra.mxu0 0.0
      %2202 = vmatprep.subr.mxu0 0.0
      %2203 = vmatpush1.xpose.msra.mxu0 0.0
      %2204 = vmatprep.subr.mxu0 0.0
      %2205 = vmatpush1.xpose.msra.mxu0 0.0
      %2206 = vmatprep.subr.mxu0 0.0
      %2207 = vmatpush1.xpose.msra.mxu0 0.0
      %2208 = vmatprep.subr.mxu0 0.0
      %2209 = vmatpush1.xpose.msra.mxu0 0.0
      %2210 = vmatprep.subr.mxu0 0.0
      %2211 = vmatpush1.xpose.msra.mxu0 0.0
      %2212 = vmatprep.subr.mxu0 0.0
      %2213 = vmatpush1.xpose.msra.mxu0 0.0
      %2214 = vmatprep.subr.mxu0 0.0
      %2215 = vmatpush1.xpose.msra.mxu0 0.0
      %2216 = vmatprep.subr.mxu0 0.0
      %2217 = vmatpush1.xpose.msra.mxu0 0.0
      %2218 = vmatprep.subr.mxu0 0.0
      %2219 = vmatpush1.xpose.msra.mxu0 0.0
      %2220 = vmatprep.subr.mxu0 0.0
      %2221 = vmatpush1.xpose.msra.mxu0 0.0
      %2222 = vmatprep.subr.mxu0 0.0
      %2223 = vmatpush1.xpose.msra.mxu0 0.0
      %2224 = vmatprep.subr.mxu0 0.0
      %2225 = vmatpush1.xpose.msra.mxu0 0.0
      %2226 = vmatprep.subr.mxu0 0.0
      %2227 = vmatpush1.xpose.msra.mxu0 0.0
      %2228 = vmatprep.subr.mxu0 0.0
      %2229 = vmatpush1.xpose.msra.mxu0 0.0
      %2230 = vmatprep.subr.mxu0 0.0
      %2231 = vmatpush1.xpose.msra.mxu0 0.0
      %2232 = vmatprep.subr.mxu0 0.0
      %2233 = vmatpush1.xpose.msra.mxu0 0.0
      %2234 = vmatprep.subr.mxu0 0.0
      %2235 = vmatpush1.xpose.msra.mxu0 0.0
      %2236 = vmatprep.subr.mxu0 0.0
      %2237 = vmatpush1.xpose.msra.mxu0 0.0
      %2238 = vmatprep.subr.mxu0 0.0
      %2239 = vmatpush1.xpose.msra.mxu0 0.0
      %2240 = vmatprep.subr.mxu0 0.0
      %2241 = vmatpush1.xpose.msra.mxu0 0.0
      %2242 = vmatprep.subr.mxu0 0.0
      %2243 = vmatpush1.xpose.msra.mxu0 0.0
      %2244 = vmatprep.subr.mxu0 0.0
      %2245 = vmatpush1.xpose.msra.mxu0 0.0
      %2246 = vmatprep.subr.mxu0 0.0
      %2247 = vmatpush1.xpose.msra.mxu0 0.0
      %2248 = vmatprep.subr.mxu0 0.0
      %2249 = vmatpush1.xpose.msra.mxu0 0.0
      %2250 = vmatprep.subr.mxu0 0.0
      %2251 = vmatpush1.xpose.msra.mxu0 0.0
      %2252 = vmatprep.subr.mxu0 0.0
      %2253 = vmatpush1.xpose.msra.mxu0 0.0
      %2254 = vmatprep.mubr.f32.mxu0 %v180
      %2255 = vmatmul.mubr.f32.gmra.mrb[0].mxu0 %v179
      %v2256 = vpop.f32.mrb[0].mxu0
      %v2257 = vadd.f32 %v1552, %v2256
      %v2258 = vpop.f32.mrb[0].mxu0
      %2259 = vmatprep.mubr.f32.mxu0 %v187
      %2260 = vmatmul.mubr.f32.gmra.mrb[0].mxu0 %v186
      %v2261 = vpop.f32.mrb[0].mxu0
      %v2262 = vadd.f32 %v1557, %v2261
      %v2263 = vpop.f32.mrb[0].mxu0
      %2264 = vmatprep.mubr.f32.mxu0 %v194
      %2265 = vmatmul.mubr.f32.gmra.mrb[0].mxu0 %v193
      %v2266 = vpop.f32.mrb[0].mxu0
      %v2267 = vadd.f32 %v1562, %v2266
      %v2268 = vpop.f32.mrb[0].mxu0
      %2269 = vmatprep.mubr.f32.mxu0 %v201
      %2270 = vmatmul.mubr.f32.gmra.mrb[0].mxu0 %v200
      %v2271 = vpop.f32.mrb[0].mxu0
      %v2272 = vadd.f32 %v1567, %v2271
      %v2273 = vpop.f32.mrb[0].mxu0
      %2274 = vmatprep.mubr.f32.mxu0 %v208
      %2275 = vmatmul.mubr.f32.gmra.mrb[0].mxu0 %v207
      %v2276 = vpop.f32.mrb[0].mxu0
      %v2277 = vadd.f32 %v1572, %v2276
      %v2278 = vpop.f32.mrb[0].mxu0
      %2279 = vmatprep.mubr.f32.mxu0 %v215
      %2280 = vmatmul.mubr.f32.gmra.mrb[0].mxu0 %v214
      %v2281 = vpop.f32.mrb[0].mxu0
      %v2282 = vadd.f32 %v1577, %v2281
      %v2283 = vpop.f32.mrb[0].mxu0
      %2284 = vmatprep.mubr.f32.mxu0 %v222
      %2285 = vmatmul.mubr.f32.gmra.mrb[0].mxu0 %v221
      %v2286 = vpop.f32.mrb[0].mxu0
      %v2287 = vadd.f32 %v1582, %v2286
      %v2288 = vpop.f32.mrb[0].mxu0
      %2289 = vmatprep.mubr.f32.mxu0 %v229
      %2290 = vmatmul.mubr.f32.gmra.mrb[0].mxu0 %v228
      %v2291 = vpop.f32.mrb[0].mxu0
      %v2292 = vadd.f32 %v1587, %v2291
      %v2293 = vpop.f32.mrb[0].mxu0
      %2294 = vmatprep.mubr.f32.mxu0 %v236
      %2295 = vmatmul.mubr.f32.gmra.mrb[0].mxu0 %v235
      %v2296 = vpop.f32.mrb[0].mxu0
      %v2297 = vadd.f32 %v1592, %v2296
      %v2298 = vpop.f32.mrb[0].mxu0
      %2299 = vmatprep.mubr.f32.mxu0 %v243
      %2300 = vmatmul.mubr.f32.gmra.mrb[0].mxu0 %v242
      %v2301 = vpop.f32.mrb[0].mxu0
      %v2302 = vadd.f32 %v1597, %v2301
      %v2303 = vpop.f32.mrb[0].mxu0
      %2304 = vmatprep.mubr.f32.mxu0 %v250
      %2305 = vmatmul.mubr.f32.gmra.mrb[0].mxu0 %v249
      %v2306 = vpop.f32.mrb[0].mxu0
      %v2307 = vadd.f32 %v1602, %v2306
      %v2308 = vpop.f32.mrb[0].mxu0
      %2309 = vmatprep.mubr.f32.mxu0 %v257
      %2310 = vmatmul.mubr.f32.gmra.mrb[0].mxu0 %v256
      %v2311 = vpop.f32.mrb[0].mxu0
      %v2312 = vadd.f32 %v1607, %v2311
      %v2313 = vpop.f32.mrb[0].mxu0
      %2314 = vmatprep.mubr.f32.mxu0 %v264
      %2315 = vmatmul.mubr.f32.gmra.mrb[0].mxu0 %v263
      %v2316 = vpop.f32.mrb[0].mxu0
      %v2317 = vadd.f32 %v1612, %v2316
      %v2318 = vpop.f32.mrb[0].mxu0
      %2319 = vmatprep.mubr.f32.mxu0 %v271
      %2320 = vmatmul.mubr.f32.gmra.mrb[0].mxu0 %v270
      %v2321 = vpop.f32.mrb[0].mxu0
      %v2322 = vadd.f32 %v1617, %v2321
      %v2323 = vpop.f32.mrb[0].mxu0
      %2324 = vmatprep.mubr.f32.mxu0 %v278
      %2325 = vmatmul.mubr.f32.gmra.mrb[0].mxu0 %v277
      %v2326 = vpop.f32.mrb[0].mxu0
      %v2327 = vadd.f32 %v1622, %v2326
      %v2328 = vpop.f32.mrb[0].mxu0
      %2329 = vmatprep.mubr.f32.mxu0 %v285
      %2330 = vmatmul.mubr.f32.gmra.mrb[0].mxu0 %v284
      %v2331 = vpop.f32.mrb[0].mxu0
      %v2332 = vadd.f32 %v1627, %v2331
      %v2333 = vpop.f32.mrb[0].mxu0
      %2334 = vmatprep.mubr.f32.mxu0 %v292
      %2335 = vmatmul.mubr.f32.gmra.mrb[0].mxu0 %v291
      %v2336 = vpop.f32.mrb[0].mxu0
      %v2337 = vadd.f32 %v1632, %v2336
      %v2338 = vpop.f32.mrb[0].mxu0
      %2339 = vmatprep.mubr.f32.mxu0 %v299
      %2340 = vmatmul.mubr.f32.gmra.mrb[0].mxu0 %v298
      %v2341 = vpop.f32.mrb[0].mxu0
      %v2342 = vadd.f32 %v1637, %v2341
      %v2343 = vpop.f32.mrb[0].mxu0
      %2344 = vmatprep.mubr.f32.mxu0 %v306
      %2345 = vmatmul.mubr.f32.gmra.mrb[0].mxu0 %v305
      %v2346 = vpop.f32.mrb[0].mxu0
      %v2347 = vadd.f32 %v1642, %v2346
      %v2348 = vpop.f32.mrb[0].mxu0
      %2349 = vmatprep.mubr.f32.mxu0 %v313
      %2350 = vmatmul.mubr.f32.gmra.mrb[0].mxu0 %v312
      %v2351 = vpop.f32.mrb[0].mxu0
      %v2352 = vadd.f32 %v1647, %v2351
      %v2353 = vpop.f32.mrb[0].mxu0
      %2354 = vmatprep.mubr.f32.mxu0 %v320
      %2355 = vmatmul.mubr.f32.gmra.mrb[0].mxu0 %v319
      %v2356 = vpop.f32.mrb[0].mxu0
      %v2357 = vadd.f32 %v1652, %v2356
      %v2358 = vpop.f32.mrb[0].mxu0
      %2359 = vmatprep.mubr.f32.mxu0 %v327
      %2360 = vmatmul.mubr.f32.gmra.mrb[0].mxu0 %v326
      %v2361 = vpop.f32.mrb[0].mxu0
      %v2362 = vadd.f32 %v1657, %v2361
      %v2363 = vpop.f32.mrb[0].mxu0
      %2364 = vmatprep.mubr.f32.mxu0 %v334
      %2365 = vmatmul.mubr.f32.gmra.mrb[0].mxu0 %v333
      %v2366 = vpop.f32.mrb[0].mxu0
      %v2367 = vadd.f32 %v1662, %v2366
      %v2368 = vpop.f32.mrb[0].mxu0
      %2369 = vmatprep.mubr.f32.mxu0 %v341
      %2370 = vmatmul.mubr.f32.gmra.mrb[0].mxu0 %v340
      %v2371 = vpop.f32.mrb[0].mxu0
      %v2372 = vadd.f32 %v1667, %v2371
      %v2373 = vpop.f32.mrb[0].mxu0
      %2374 = vmatprep.mubr.f32.mxu0 %v348
      %2375 = vmatmul.mubr.f32.gmra.mrb[0].mxu0 %v347
      %v2376 = vpop.f32.mrb[0].mxu0
      %v2377 = vadd.f32 %v1672, %v2376
      %v2378 = vpop.f32.mrb[0].mxu0
      %2379 = vmatprep.mubr.f32.mxu0 %v355
      %2380 = vmatmul.mubr.f32.gmra.mrb[0].mxu0 %v354
      %v2381 = vpop.f32.mrb[0].mxu0
      %v2382 = vadd.f32 %v1677, %v2381
      %v2383 = vpop.f32.mrb[0].mxu0
      %2384 = vmatprep.mubr.f32.mxu0 %v362
      %2385 = vmatmul.mubr.f32.gmra.mrb[0].mxu0 %v361
      %v2386 = vpop.f32.mrb[0].mxu0
      %v2387 = vadd.f32 %v1682, %v2386
      %v2388 = vpop.f32.mrb[0].mxu0
      %2389 = vmatprep.mubr.f32.mxu0 %v369
      %2390 = vmatmul.mubr.f32.gmra.mrb[0].mxu0 %v368
      %v2391 = vpop.f32.mrb[0].mxu0
      %v2392 = vadd.f32 %v1687, %v2391
      %v2393 = vpop.f32.mrb[0].mxu0
      %2394 = vmatprep.mubr.f32.mxu0 %v376
      %2395 = vmatmul.mubr.f32.gmra.mrb[0].mxu0 %v375
      %v2396 = vpop.f32.mrb[0].mxu0
      %v2397 = vadd.f32 %v1692, %v2396
      %v2398 = vpop.f32.mrb[0].mxu0
      %2399 = vmatprep.mubr.f32.mxu0 %v383
      %2400 = vmatmul.mubr.f32.gmra.mrb[0].mxu0 %v382
      %v2401 = vpop.f32.mrb[0].mxu0
      %v2402 = vadd.f32 %v1697, %v2401
      %v2403 = vpop.f32.mrb[0].mxu0
      %2404 = vmatprep.mubr.f32.mxu0 %v390
      %2405 = vmatmul.mubr.f32.gmra.mrb[0].mxu0 %v389
      %v2406 = vpop.f32.mrb[0].mxu0
      %v2407 = vadd.f32 %v1702, %v2406
      %v2408 = vpop.f32.mrb[0].mxu0
      %2409 = vmatprep.mubr.f32.mxu0 %v397
      %2410 = vmatmul.mubr.f32.gmra.mrb[0].mxu0 %v396
      %v2411 = vpop.f32.mrb[0].mxu0
      %v2412 = vadd.f32 %v1707, %v2411
      %v2413 = vpop.f32.mrb[0].mxu0
      %2414 = vmatprep.mubr.f32.mxu0 %v404
      %2415 = vmatmul.mubr.f32.gmra.mrb[0].mxu0 %v403
      %v2416 = vpop.f32.mrb[0].mxu0
      %v2417 = vadd.f32 %v1712, %v2416
      %v2418 = vpop.f32.mrb[0].mxu0
      %2419 = vmatprep.mubr.f32.mxu0 %v411
      %2420 = vmatmul.mubr.f32.gmra.mrb[0].mxu0 %v410
      %v2421 = vpop.f32.mrb[0].mxu0
      %v2422 = vadd.f32 %v1717, %v2421
      %v2423 = vpop.f32.mrb[0].mxu0
      %2424 = vmatprep.mubr.f32.mxu0 %v418
      %2425 = vmatmul.mubr.f32.gmra.mrb[0].mxu0 %v417
      %v2426 = vpop.f32.mrb[0].mxu0
      %v2427 = vadd.f32 %v1722, %v2426
      %v2428 = vpop.f32.mrb[0].mxu0
      %2429 = vmatprep.mubr.f32.mxu0 %v425
      %2430 = vmatmul.mubr.f32.gmra.mrb[0].mxu0 %v424
      %v2431 = vpop.f32.mrb[0].mxu0
      %v2432 = vadd.f32 %v1727, %v2431
      %v2433 = vpop.f32.mrb[0].mxu0
      %2434 = vmatprep.mubr.f32.mxu0 %v432
      %2435 = vmatmul.mubr.f32.gmra.mrb[0].mxu0 %v431
      %v2436 = vpop.f32.mrb[0].mxu0
      %v2437 = vadd.f32 %v1732, %v2436
      %v2438 = vpop.f32.mrb[0].mxu0
      %2439 = vmatprep.mubr.f32.mxu0 %v439
      %2440 = vmatmul.mubr.f32.gmra.mrb[0].mxu0 %v438
      %v2441 = vpop.f32.mrb[0].mxu0
      %v2442 = vadd.f32 %v1737, %v2441
      %v2443 = vpop.f32.mrb[0].mxu0
      %2444 = vmatprep.mubr.f32.mxu0 %v446
      %2445 = vmatmul.mubr.f32.gmra.mrb[0].mxu0 %v445
      %v2446 = vpop.f32.mrb[0].mxu0
      %v2447 = vadd.f32 %v1742, %v2446
      %v2448 = vpop.f32.mrb[0].mxu0
      %2449 = vmatprep.mubr.f32.mxu0 %v453
      %2450 = vmatmul.mubr.f32.gmra.mrb[0].mxu0 %v452
      %v2451 = vpop.f32.mrb[0].mxu0
      %v2452 = vadd.f32 %v1747, %v2451
      %v2453 = vpop.f32.mrb[0].mxu0
      %2454 = vmatprep.mubr.f32.mxu0 %v460
      %2455 = vmatmul.mubr.f32.gmra.mrb[0].mxu0 %v459
      %v2456 = vpop.f32.mrb[0].mxu0
      %v2457 = vadd.f32 %v1752, %v2456
      %v2458 = vpop.f32.mrb[0].mxu0
      %2459 = vmatprep.mubr.f32.mxu0 %v467
      %2460 = vmatmul.mubr.f32.gmra.mrb[0].mxu0 %v466
      %v2461 = vpop.f32.mrb[0].mxu0
      %v2462 = vadd.f32 %v1757, %v2461
      %v2463 = vpop.f32.mrb[0].mxu0
      %2464 = vmatprep.mubr.f32.mxu0 %v474
      %2465 = vmatmul.mubr.f32.gmra.mrb[0].mxu0 %v473
      %v2466 = vpop.f32.mrb[0].mxu0
      %v2467 = vadd.f32 %v1762, %v2466
      %v2468 = vpop.f32.mrb[0].mxu0
      %2469 = vmatprep.mubr.f32.mxu0 %v481
      %2470 = vmatmul.mubr.f32.gmra.mrb[0].mxu0 %v480
      %v2471 = vpop.f32.mrb[0].mxu0
      %v2472 = vadd.f32 %v1767, %v2471
      %v2473 = vpop.f32.mrb[0].mxu0
      %2474 = vmatprep.mubr.f32.mxu0 %v488
      %2475 = vmatmul.mubr.f32.gmra.mrb[0].mxu0 %v487
      %v2476 = vpop.f32.mrb[0].mxu0
      %v2477 = vadd.f32 %v1772, %v2476
      %v2478 = vpop.f32.mrb[0].mxu0
      %2479 = vmatprep.mubr.f32.mxu0 %v495
      %2480 = vmatmul.mubr.f32.gmra.mrb[0].mxu0 %v494
      %v2481 = vpop.f32.mrb[0].mxu0
      %v2482 = vadd.f32 %v1777, %v2481
      %v2483 = vpop.f32.mrb[0].mxu0
      %2484 = vmatprep.mubr.f32.mxu0 %v502
      %2485 = vmatmul.mubr.f32.gmra.mrb[0].mxu0 %v501
      %v2486 = vpop.f32.mrb[0].mxu0
      %v2487 = vadd.f32 %v1782, %v2486
      %v2488 = vpop.f32.mrb[0].mxu0
      %2489 = vmatprep.mubr.f32.mxu0 %v509
      %2490 = vmatmul.mubr.f32.gmra.mrb[0].mxu0 %v508
      %v2491 = vpop.f32.mrb[0].mxu0
      %v2492 = vadd.f32 %v1787, %v2491
      %v2493 = vpop.f32.mrb[0].mxu0
      %2494 = vmatprep.mubr.f32.mxu0 %v516
      %2495 = vmatmul.mubr.f32.gmra.mrb[0].mxu0 %v515
      %v2496 = vpop.f32.mrb[0].mxu0
      %v2497 = vadd.f32 %v1792, %v2496
      %v2498 = vpop.f32.mrb[0].mxu0
      %2499 = vmatprep.mubr.f32.mxu0 %v523
      %2500 = vmatmul.mubr.f32.gmra.mrb[0].mxu0 %v522
      %v2501 = vpop.f32.mrb[0].mxu0
      %v2502 = vadd.f32 %v1797, %v2501
      %v2503 = vpop.f32.mrb[0].mxu0
      %2504 = vmatprep.mubr.f32.mxu0 %v530
      %2505 = vmatmul.mubr.f32.gmra.mrb[0].mxu0 %v529
      %v2506 = vpop.f32.mrb[0].mxu0
      %v2507 = vadd.f32 %v1802, %v2506
      %v2508 = vpop.f32.mrb[0].mxu0
      %2509 = vmatprep.mubr.f32.mxu0 %v537
      %2510 = vmatmul.mubr.f32.gmra.mrb[0].mxu0 %v536
      %v2511 = vpop.f32.mrb[0].mxu0
      %v2512 = vadd.f32 %v1807, %v2511
      %v2513 = vpop.f32.mrb[0].mxu0
      %2514 = vmatprep.mubr.f32.mxu0 %v544
      %2515 = vmatmul.mubr.f32.gmra.mrb[0].mxu0 %v543
      %v2516 = vpop.f32.mrb[0].mxu0
      %v2517 = vadd.f32 %v1812, %v2516
      %v2518 = vpop.f32.mrb[0].mxu0
      %2519 = vmatprep.mubr.f32.mxu0 %v551
      %2520 = vmatmul.mubr.f32.gmra.mrb[0].mxu0 %v550
      %v2521 = vpop.f32.mrb[0].mxu0
      %v2522 = vadd.f32 %v1817, %v2521
      %v2523 = vpop.f32.mrb[0].mxu0
      %2524 = vmatprep.mubr.f32.mxu0 %v558
      %2525 = vmatmul.mubr.f32.gmra.mrb[0].mxu0 %v557
      %v2526 = vpop.f32.mrb[0].mxu0
      %v2527 = vadd.f32 %v1822, %v2526
      %v2528 = vpop.f32.mrb[0].mxu0
      %2529 = vmatprep.mubr.f32.mxu0 %v565
      %2530 = vmatmul.mubr.f32.gmra.mrb[0].mxu0 %v564
      %v2531 = vpop.f32.mrb[0].mxu0
      %v2532 = vadd.f32 %v1827, %v2531
      %v2533 = vpop.f32.mrb[0].mxu0
      %2534 = vmatprep.mubr.f32.mxu0 %v572
      %2535 = vmatmul.mubr.f32.gmra.mrb[0].mxu0 %v571
      %v2536 = vpop.f32.mrb[0].mxu0
      %v2537 = vadd.f32 %v1832, %v2536
      %v2538 = vpop.f32.mrb[0].mxu0
      %2539 = vmatprep.mubr.f32.mxu0 %v579
      %2540 = vmatmul.mubr.f32.gmra.mrb[0].mxu0 %v578
      %v2541 = vpop.f32.mrb[0].mxu0
      %v2542 = vadd.f32 %v1837, %v2541
      %v2543 = vpop.f32.mrb[0].mxu0
      %2544 = vmatprep.mubr.f32.mxu0 %v586
      %2545 = vmatmul.mubr.f32.gmra.mrb[0].mxu0 %v585
      %v2546 = vpop.f32.mrb[0].mxu0
      %v2547 = vadd.f32 %v1842, %v2546
      %v2548 = vpop.f32.mrb[0].mxu0
      %2549 = vmatprep.mubr.f32.mxu0 %v593
      %2550 = vmatmul.mubr.f32.gmra.mrb[0].mxu0 %v592
      %v2551 = vpop.f32.mrb[0].mxu0
      %v2552 = vadd.f32 %v1847, %v2551
      %v2553 = vpop.f32.mrb[0].mxu0
      %2554 = vmatprep.mubr.f32.mxu0 %v600
      %2555 = vmatmul.mubr.f32.gmra.mrb[0].mxu0 %v599
      %v2556 = vpop.f32.mrb[0].mxu0
      %v2557 = vadd.f32 %v1852, %v2556
      %v2558 = vpop.f32.mrb[0].mxu0
      %2559 = vmatprep.mubr.f32.mxu0 %v607
      %2560 = vmatmul.mubr.f32.gmra.mrb[0].mxu0 %v606
      %v2561 = vpop.f32.mrb[0].mxu0
      %v2562 = vadd.f32 %v1857, %v2561
      %v2563 = vpop.f32.mrb[0].mxu0
      %2564 = vmatprep.mubr.f32.mxu0 %v614
      %2565 = vmatmul.mubr.f32.gmra.mrb[0].mxu0 %v613
      %v2566 = vpop.f32.mrb[0].mxu0
      %v2567 = vadd.f32 %v1862, %v2566
      %v2568 = vpop.f32.mrb[0].mxu0
      %2569 = vmatprep.mubr.f32.mxu0 %v621
      %2570 = vmatmul.mubr.f32.gmra.mrb[0].mxu0 %v620
      %v2571 = vpop.f32.mrb[0].mxu0
      %v2572 = vadd.f32 %v1867, %v2571
      %v2573 = vpop.f32.mrb[0].mxu0
      %2574 = vmatprep.mubr.f32.mxu0 %v628
      %2575 = vmatmul.mubr.f32.gmra.mrb[0].mxu0 %v627
      %v2576 = vpop.f32.mrb[0].mxu0
      %v2577 = vadd.f32 %v1872, %v2576
      %v2578 = vpop.f32.mrb[0].mxu0
      %2579 = vmatprep.mubr.f32.mxu0 %v635
      %2580 = vmatmul.mubr.f32.gmra.mrb[0].mxu0 %v634
      %v2581 = vpop.f32.mrb[0].mxu0
      %v2582 = vadd.f32 %v1877, %v2581
      %v2583 = vpop.f32.mrb[0].mxu0
      %2584 = vmatprep.mubr.f32.mxu0 %v642
      %2585 = vmatmul.mubr.f32.gmra.mrb[0].mxu0 %v641
      %v2586 = vpop.f32.mrb[0].mxu0
      %v2587 = vadd.f32 %v1882, %v2586
      %v2588 = vpop.f32.mrb[0].mxu0
      %2589 = vmatprep.mubr.f32.mxu0 %v649
      %2590 = vmatmul.mubr.f32.gmra.mrb[0].mxu0 %v648
      %v2591 = vpop.f32.mrb[0].mxu0
      %v2592 = vadd.f32 %v1887, %v2591
      %v2593 = vpop.f32.mrb[0].mxu0
      %2594 = vmatprep.mubr.f32.mxu0 %v656
      %2595 = vmatmul.mubr.f32.gmra.mrb[0].mxu0 %v655
      %v2596 = vpop.f32.mrb[0].mxu0
      %v2597 = vadd.f32 %v1892, %v2596
      %v2598 = vpop.f32.mrb[0].mxu0
      %2599 = vmatprep.mubr.f32.mxu0 %v663
      %2600 = vmatmul.mubr.f32.gmra.mrb[0].mxu0 %v662
      %v2601 = vpop.f32.mrb[0].mxu0
      %v2602 = vadd.f32 %v1897, %v2601
      %v2603 = vpop.f32.mrb[0].mxu0
      %2604 = vmatprep.mubr.f32.mxu0 %v670
      %2605 = vmatmul.mubr.f32.gmra.mrb[0].mxu0 %v669
      %v2606 = vpop.f32.mrb[0].mxu0
      %v2607 = vadd.f32 %v1902, %v2606
      %v2608 = vpop.f32.mrb[0].mxu0
      %2609 = vmatprep.mubr.f32.mxu0 %v677
      %2610 = vmatmul.mubr.f32.gmra.mrb[0].mxu0 %v676
      %v2611 = vpop.f32.mrb[0].mxu0
      %v2612 = vadd.f32 %v1907, %v2611
      %v2613 = vpop.f32.mrb[0].mxu0
      %2614 = vmatprep.mubr.f32.mxu0 %v684
      %2615 = vmatmul.mubr.f32.gmra.mrb[0].mxu0 %v683
      %v2616 = vpop.f32.mrb[0].mxu0
      %v2617 = vadd.f32 %v1912, %v2616
      %v2618 = vpop.f32.mrb[0].mxu0
      %2619 = vmatprep.mubr.f32.mxu0 %v691
      %2620 = vmatmul.mubr.f32.gmra.mrb[0].mxu0 %v690
      %v2621 = vpop.f32.mrb[0].mxu0
      %v2622 = vadd.f32 %v1917, %v2621
      %v2623 = vpop.f32.mrb[0].mxu0
      %2624 = vmatprep.mubr.f32.mxu0 %v698
      %2625 = vmatmul.mubr.f32.gmra.mrb[0].mxu0 %v697
      %v2626 = vpop.f32.mrb[0].mxu0
      %v2627 = vadd.f32 %v1922, %v2626
      %v2628 = vpop.f32.mrb[0].mxu0
      %2629 = vmatprep.mubr.f32.mxu0 %v705
      %2630 = vmatmul.mubr.f32.gmra.mrb[0].mxu0 %v704
      %v2631 = vpop.f32.mrb[0].mxu0
      %v2632 = vadd.f32 %v1927, %v2631
      %v2633 = vpop.f32.mrb[0].mxu0
      %2634 = vmatprep.mubr.f32.mxu0 %v712
      %2635 = vmatmul.mubr.f32.gmra.mrb[0].mxu0 %v711
      %v2636 = vpop.f32.mrb[0].mxu0
      %v2637 = vadd.f32 %v1932, %v2636
      %v2638 = vpop.f32.mrb[0].mxu0
      %2639 = vmatprep.mubr.f32.mxu0 %v719
      %2640 = vmatmul.mubr.f32.gmra.mrb[0].mxu0 %v718
      %v2641 = vpop.f32.mrb[0].mxu0
      %v2642 = vadd.f32 %v1937, %v2641
      %v2643 = vpop.f32.mrb[0].mxu0
      %2644 = vmatprep.mubr.f32.mxu0 %v726
      %2645 = vmatmul.mubr.f32.gmra.mrb[0].mxu0 %v725
      %v2646 = vpop.f32.mrb[0].mxu0
      %v2647 = vadd.f32 %v1942, %v2646
      %v2648 = vpop.f32.mrb[0].mxu0
      %2649 = vmatprep.mubr.f32.mxu0 %v733
      %2650 = vmatmul.mubr.f32.gmra.mrb[0].mxu0 %v732
      %v2651 = vpop.f32.mrb[0].mxu0
      %v2652 = vadd.f32 %v1947, %v2651
      %v2653 = vpop.f32.mrb[0].mxu0
      %2654 = vmatprep.mubr.f32.mxu0 %v740
      %2655 = vmatmul.mubr.f32.gmra.mrb[0].mxu0 %v739
      %v2656 = vpop.f32.mrb[0].mxu0
      %v2657 = vadd.f32 %v1952, %v2656
      %v2658 = vpop.f32.mrb[0].mxu0
      %2659 = vmatprep.mubr.f32.mxu0 %v747
      %2660 = vmatmul.mubr.f32.gmra.mrb[0].mxu0 %v746
      %v2661 = vpop.f32.mrb[0].mxu0
      %v2662 = vadd.f32 %v1957, %v2661
      %v2663 = vpop.f32.mrb[0].mxu0
      %2664 = vmatprep.mubr.f32.mxu0 %v754
      %2665 = vmatmul.mubr.f32.gmra.mrb[0].mxu0 %v753
      %v2666 = vpop.f32.mrb[0].mxu0
      %v2667 = vadd.f32 %v1962, %v2666
      %v2668 = vpop.f32.mrb[0].mxu0
      %2669 = vmatprep.mubr.f32.mxu0 %v761
      %2670 = vmatmul.mubr.f32.gmra.mrb[0].mxu0 %v760
      %v2671 = vpop.f32.mrb[0].mxu0
      %v2672 = vadd.f32 %v1967, %v2671
      %v2673 = vpop.f32.mrb[0].mxu0
      %2674 = vmatprep.mubr.f32.mxu0 %v768
      %2675 = vmatmul.mubr.f32.gmra.mrb[0].mxu0 %v767
      %v2676 = vpop.f32.mrb[0].mxu0
      %v2677 = vadd.f32 %v1972, %v2676
      %v2678 = vpop.f32.mrb[0].mxu0
      %2679 = vmatprep.mubr.f32.mxu0 %v775
      %2680 = vmatmul.mubr.f32.gmra.mrb[0].mxu0 %v774
      %v2681 = vpop.f32.mrb[0].mxu0
      %v2682 = vadd.f32 %v1977, %v2681
      %v2683 = vpop.f32.mrb[0].mxu0
      %2684 = vmatprep.mubr.f32.mxu0 %v782
      %2685 = vmatmul.mubr.f32.gmra.mrb[0].mxu0 %v781
      %v2686 = vpop.f32.mrb[0].mxu0
      %v2687 = vadd.f32 %v1982, %v2686
      %v2688 = vpop.f32.mrb[0].mxu0
      %2689 = vmatprep.mubr.f32.mxu0 %v789
      %2690 = vmatmul.mubr.f32.gmra.mrb[0].mxu0 %v788
      %v2691 = vpop.f32.mrb[0].mxu0
      %v2692 = vadd.f32 %v1987, %v2691
      %v2693 = vpop.f32.mrb[0].mxu0
      %2694 = vmatprep.mubr.f32.mxu0 %v796
      %2695 = vmatmul.mubr.f32.gmra.mrb[0].mxu0 %v795
      %v2696 = vpop.f32.mrb[0].mxu0
      %v2697 = vadd.f32 %v1992, %v2696
      %v2698 = vpop.f32.mrb[0].mxu0
      %2699 = vmatprep.mubr.f32.mxu0 %v803
      %2700 = vmatmul.mubr.f32.gmra.mrb[0].mxu0 %v802
      %v2701 = vpop.f32.mrb[0].mxu0
      %v2702 = vadd.f32 %v1997, %v2701
      %v2703 = vpop.f32.mrb[0].mxu0
      %2704 = vmatprep.mubr.f32.mxu0 %v810
      %2705 = vmatmul.mubr.f32.gmra.mrb[0].mxu0 %v809
      %v2706 = vpop.f32.mrb[0].mxu0
      %v2707 = vadd.f32 %v2002, %v2706
      %v2708 = vpop.f32.mrb[0].mxu0
      %2709 = vmatprep.mubr.f32.mxu0 %v817
      %2710 = vmatmul.mubr.f32.gmra.mrb[0].mxu0 %v816
      %v2711 = vpop.f32.mrb[0].mxu0
      %v2712 = vadd.f32 %v2007, %v2711
      %v2713 = vpop.f32.mrb[0].mxu0
      %2714 = vmatprep.mubr.f32.mxu0 %v824
      %2715 = vmatmul.mubr.f32.gmra.mrb[0].mxu0 %v823
      %v2716 = vpop.f32.mrb[0].mxu0
      %v2717 = vadd.f32 %v2012, %v2716
      %v2718 = vpop.f32.mrb[0].mxu0
      %2719 = vmatprep.mubr.f32.mxu0 %v831
      %2720 = vmatmul.mubr.f32.gmra.mrb[0].mxu0 %v830
      %v2721 = vpop.f32.mrb[0].mxu0
      %v2722 = vadd.f32 %v2017, %v2721
      %v2723 = vpop.f32.mrb[0].mxu0
      %2724 = vmatprep.mubr.f32.mxu0 %v838
      %2725 = vmatmul.mubr.f32.gmra.mrb[0].mxu0 %v837
      %v2726 = vpop.f32.mrb[0].mxu0
      %v2727 = vadd.f32 %v2022, %v2726
      %v2728 = vpop.f32.mrb[0].mxu0
      %2729 = vmatprep.mubr.f32.mxu0 %v845
      %2730 = vmatmul.mubr.f32.gmra.mrb[0].mxu0 %v844
      %v2731 = vpop.f32.mrb[0].mxu0
      %v2732 = vadd.f32 %v2027, %v2731
      %v2733 = vpop.f32.mrb[0].mxu0
      %2734 = vmatprep.mubr.f32.mxu0 %v852
      %2735 = vmatmul.mubr.f32.gmra.mrb[0].mxu0 %v851
      %v2736 = vpop.f32.mrb[0].mxu0
      %v2737 = vadd.f32 %v2032, %v2736
      %v2738 = vpop.f32.mrb[0].mxu0
      %2739 = vmatprep.mubr.f32.mxu0 %v859
      %2740 = vmatmul.mubr.f32.gmra.mrb[0].mxu0 %v858
      %v2741 = vpop.f32.mrb[0].mxu0
      %v2742 = vadd.f32 %v2037, %v2741
      %v2743 = vpop.f32.mrb[0].mxu0
      %2744 = vmatprep.mubr.f32.mxu0 %v866
      %2745 = vmatmul.mubr.f32.gmra.mrb[0].mxu0 %v865
      %v2746 = vpop.f32.mrb[0].mxu0
      %v2747 = vadd.f32 %v2042, %v2746
      %v2748 = vpop.f32.mrb[0].mxu0
      %2749 = vmatprep.mubr.f32.mxu0 %v873
      %2750 = vmatmul.mubr.f32.gmra.mrb[0].mxu0 %v872
      %v2751 = vpop.f32.mrb[0].mxu0
      %v2752 = vadd.f32 %v2047, %v2751
      %v2753 = vpop.f32.mrb[0].mxu0
      %2754 = vmatprep.mubr.f32.mxu0 %v880
      %2755 = vmatmul.mubr.f32.gmra.mrb[0].mxu0 %v879
      %v2756 = vpop.f32.mrb[0].mxu0
      %v2757 = vadd.f32 %v2052, %v2756
      %v2758 = vpop.f32.mrb[0].mxu0
      %2759 = vmatprep.mubr.f32.mxu0 %v887
      %2760 = vmatmul.mubr.f32.gmra.mrb[0].mxu0 %v886
      %v2761 = vpop.f32.mrb[0].mxu0
      %v2762 = vadd.f32 %v2057, %v2761
      %v2763 = vpop.f32.mrb[0].mxu0
      %2764 = vmatprep.mubr.f32.mxu0 %v894
      %2765 = vmatmul.mubr.f32.gmra.mrb[0].mxu0 %v893
      %v2766 = vpop.f32.mrb[0].mxu0
      %v2767 = vadd.f32 %v2062, %v2766
      %v2768 = vpop.f32.mrb[0].mxu0
      %2769 = vmatprep.mubr.f32.mxu0 %v901
      %2770 = vmatmul.mubr.f32.gmra.mrb[0].mxu0 %v900
      %v2771 = vpop.f32.mrb[0].mxu0
      %v2772 = vadd.f32 %v2067, %v2771
      %v2773 = vpop.f32.mrb[0].mxu0
      %2774 = vmatprep.mubr.f32.mxu0 %v908
      %2775 = vmatmul.mubr.f32.gmra.mrb[0].mxu0 %v907
      %v2776 = vpop.f32.mrb[0].mxu0
      %v2777 = vadd.f32 %v2072, %v2776
      %v2778 = vpop.f32.mrb[0].mxu0
      %2779 = vmatprep.mubr.f32.mxu0 %v915
      %2780 = vmatmul.mubr.f32.gmra.mrb[0].mxu0 %v914
      %v2781 = vpop.f32.mrb[0].mxu0
      %v2782 = vadd.f32 %v2077, %v2781
      %v2783 = vpop.f32.mrb[0].mxu0
      %2784 = vmatprep.mubr.f32.mxu0 %v922
      %2785 = vmatmul.mubr.f32.gmra.mrb[0].mxu0 %v921
      %v2786 = vpop.f32.mrb[0].mxu0
      %v2787 = vadd.f32 %v2082, %v2786
      %v2788 = vpop.f32.mrb[0].mxu0
      %2789 = vmatprep.mubr.f32.mxu0 %v929
      %2790 = vmatmul.mubr.f32.gmra.mrb[0].mxu0 %v928
      %v2791 = vpop.f32.mrb[0].mxu0
      %v2792 = vadd.f32 %v2087, %v2791
      %v2793 = vpop.f32.mrb[0].mxu0
      %2794 = vmatprep.mubr.f32.mxu0 %v936
      %2795 = vmatmul.mubr.f32.gmra.mrb[0].mxu0 %v935
      %v2796 = vpop.f32.mrb[0].mxu0
      %v2797 = vadd.f32 %v2092, %v2796
      %v2798 = vpop.f32.mrb[0].mxu0
      %2799 = vmatprep.mubr.f32.mxu0 %v943
      %2800 = vmatmul.mubr.f32.gmra.mrb[0].mxu0 %v942
      %v2801 = vpop.f32.mrb[0].mxu0
      %v2802 = vadd.f32 %v2097, %v2801
      %v2803 = vpop.f32.mrb[0].mxu0
      %2804 = vmatprep.mubr.f32.mxu0 %v950
      %2805 = vmatmul.mubr.f32.gmra.mrb[0].mxu0 %v949
      %v2806 = vpop.f32.mrb[0].mxu0
      %v2807 = vadd.f32 %v2102, %v2806
      %v2808 = vpop.f32.mrb[0].mxu0
      %2809 = vmatprep.mubr.f32.mxu0 %v957
      %2810 = vmatmul.mubr.f32.gmra.mrb[0].mxu0 %v956
      %v2811 = vpop.f32.mrb[0].mxu0
      %v2812 = vadd.f32 %v2107, %v2811
      %v2813 = vpop.f32.mrb[0].mxu0
      %2814 = vmatprep.mubr.f32.mxu0 %v964
      %2815 = vmatmul.mubr.f32.gmra.mrb[0].mxu0 %v963
      %v2816 = vpop.f32.mrb[0].mxu0
      %v2817 = vadd.f32 %v2112, %v2816
      %v2818 = vpop.f32.mrb[0].mxu0
      %2819 = vmatprep.mubr.f32.mxu0 %v971
      %2820 = vmatmul.mubr.f32.gmra.mrb[0].mxu0 %v970
      %v2821 = vpop.f32.mrb[0].mxu0
      %v2822 = vadd.f32 %v2117, %v2821
      %v2823 = vpop.f32.mrb[0].mxu0
      %2824 = vmatprep.mubr.f32.mxu0 %v978
      %2825 = vmatmul.mubr.f32.gmra.mrb[0].mxu0 %v977
      %v2826 = vpop.f32.mrb[0].mxu0
      %v2827 = vadd.f32 %v2122, %v2826
      %v2828 = vpop.f32.mrb[0].mxu0
      %2829 = vmatprep.mubr.f32.mxu0 %v985
      %2830 = vmatmul.mubr.f32.gmra.mrb[0].mxu0 %v984
      %v2831 = vpop.f32.mrb[0].mxu0
      %v2832 = vadd.f32 %v2127, %v2831
      %v2833 = vpop.f32.mrb[0].mxu0
      %2834 = vmatprep.mubr.f32.mxu0 %v992
      %2835 = vmatmul.mubr.f32.gmra.mrb[0].mxu0 %v991
      %v2836 = vpop.f32.mrb[0].mxu0
      %v2837 = vadd.f32 %v2132, %v2836
      %v2838 = vpop.f32.mrb[0].mxu0
      %2839 = vmatprep.mubr.f32.mxu0 %v999
      %2840 = vmatmul.mubr.f32.gmra.mrb[0].mxu0 %v998
      %v2841 = vpop.f32.mrb[0].mxu0
      %v2842 = vadd.f32 %v2137, %v2841
      %v2843 = vpop.f32.mrb[0].mxu0
      %2844 = vmatprep.mubr.f32.mxu0 %v1006
      %2845 = vmatmul.mubr.f32.gmra.mrb[0].mxu0 %v1005
      %v2846 = vpop.f32.mrb[0].mxu0
      %v2847 = vadd.f32 %v2142, %v2846
      %v2848 = vpop.f32.mrb[0].mxu0
      %2849 = vmatprep.mubr.f32.mxu0 %v1013
      %2850 = vmatmul.mubr.f32.gmra.mrb[0].mxu0 %v1012
      %v2851 = vpop.f32.mrb[0].mxu0
      %v2852 = vadd.f32 %v2147, %v2851
      %v2853 = vpop.f32.mrb[0].mxu0
      %2854 = vmatprep.mubr.f32.mxu0 %v1020
      %2855 = vmatmul.mubr.f32.gmra.mrb[0].mxu0 %v1019
      %v2856 = vpop.f32.mrb[0].mxu0
      %v2857 = vadd.f32 %v2152, %v2856
      %v2858 = vpop.f32.mrb[0].mxu0
      %2859 = vmatprep.mubr.f32.mxu0 %v1027
      %2860 = vmatmul.mubr.f32.gmra.mrb[0].mxu0 %v1026
      %v2861 = vpop.f32.mrb[0].mxu0
      %v2862 = vadd.f32 %v2157, %v2861
      %v2863 = vpop.f32.mrb[0].mxu0
      %2864 = vmatprep.mubr.f32.mxu0 %v1034
      %2865 = vmatmul.mubr.f32.gmra.mrb[0].mxu0 %v1033
      %v2866 = vpop.f32.mrb[0].mxu0
      %v2867 = vadd.f32 %v2162, %v2866
      %v2868 = vpop.f32.mrb[0].mxu0
      %2869 = vmatprep.mubr.f32.mxu0 %v1041
      %2870 = vmatmul.mubr.f32.gmra.mrb[0].mxu0 %v1040
      %v2871 = vpop.f32.mrb[0].mxu0
      %v2872 = vadd.f32 %v2167, %v2871
      %v2873 = vpop.f32.mrb[0].mxu0
      %2874 = vmatprep.mubr.f32.mxu0 %v1048
      %2875 = vmatmul.mubr.f32.gmra.mrb[0].mxu0 %v1047
      %v2876 = vpop.f32.mrb[0].mxu0
      %v2877 = vadd.f32 %v2172, %v2876
      %v2878 = vpop.f32.mrb[0].mxu0
      %2879 = vmatprep.mubr.f32.mxu0 %v1055
      %2880 = vmatmul.mubr.f32.gmra.mrb[0].mxu0 %v1054
      %v2881 = vpop.f32.mrb[0].mxu0
      %v2882 = vadd.f32 %v2177, %v2881
      %v2883 = vpop.f32.mrb[0].mxu0
      %2884 = vmatprep.mubr.f32.mxu0 %v1062
      %2885 = vmatmul.mubr.f32.gmra.mrb[0].mxu0 %v1061
      %v2886 = vpop.f32.mrb[0].mxu0
      %v2887 = vadd.f32 %v2182, %v2886
      %v2888 = vpop.f32.mrb[0].mxu0
      %2889 = vmatprep.mubr.f32.mxu0 %v1069
      %2890 = vmatmul.mubr.f32.gmra.mrb[0].mxu0 %v1068
      %v2891 = vpop.f32.mrb[0].mxu0
      %v2892 = vadd.f32 %v2187, %v2891
      %v2893 = vpop.f32.mrb[0].mxu0
      %2894 = vdwg.mxu0
      %2895 = vmatprep.subr.mxu0 %v1078
      %2896 = vmatpush1.xpose.msra.mxu0 %v1077
      %2897 = vmatprep.subr.mxu0 %v1085
      %2898 = vmatpush1.xpose.msra.mxu0 %v1084
      %2899 = vmatprep.subr.mxu0 0.0
      %2900 = vmatpush1.xpose.msra.mxu0 0.0
      %2901 = vmatprep.subr.mxu0 0.0
      %2902 = vmatpush1.xpose.msra.mxu0 0.0
      %2903 = vmatprep.subr.mxu0 0.0
      %2904 = vmatpush1.xpose.msra.mxu0 0.0
      %2905 = vmatprep.subr.mxu0 0.0
      %2906 = vmatpush1.xpose.msra.mxu0 0.0
      %2907 = vmatprep.subr.mxu0 0.0
      %2908 = vmatpush1.xpose.msra.mxu0 0.0
      %2909 = vmatprep.subr.mxu0 0.0
      %2910 = vmatpush1.xpose.msra.mxu0 0.0
      %2911 = vmatprep.subr.mxu0 0.0
      %2912 = vmatpush1.xpose.msra.mxu0 0.0
      %2913 = vmatprep.subr.mxu0 0.0
      %2914 = vmatpush1.xpose.msra.mxu0 0.0
      %2915 = vmatprep.subr.mxu0 0.0
      %2916 = vmatpush1.xpose.msra.mxu0 0.0
      %2917 = vmatprep.subr.mxu0 0.0
      %2918 = vmatpush1.xpose.msra.mxu0 0.0
      %2919 = vmatprep.subr.mxu0 0.0
      %2920 = vmatpush1.xpose.msra.mxu0 0.0
      %2921 = vmatprep.subr.mxu0 0.0
      %2922 = vmatpush1.xpose.msra.mxu0 0.0
      %2923 = vmatprep.subr.mxu0 0.0
      %2924 = vmatpush1.xpose.msra.mxu0 0.0
      %2925 = vmatprep.subr.mxu0 0.0
      %2926 = vmatpush1.xpose.msra.mxu0 0.0
      %2927 = vmatprep.subr.mxu0 0.0
      %2928 = vmatpush1.xpose.msra.mxu0 0.0
      %2929 = vmatprep.subr.mxu0 0.0
      %2930 = vmatpush1.xpose.msra.mxu0 0.0
      %2931 = vmatprep.subr.mxu0 0.0
      %2932 = vmatpush1.xpose.msra.mxu0 0.0
      %2933 = vmatprep.subr.mxu0 0.0
      %2934 = vmatpush1.xpose.msra.mxu0 0.0
      %2935 = vmatprep.subr.mxu0 0.0
      %2936 = vmatpush1.xpose.msra.mxu0 0.0
      %2937 = vmatprep.subr.mxu0 0.0
      %2938 = vmatpush1.xpose.msra.mxu0 0.0
      %2939 = vmatprep.subr.mxu0 0.0
      %2940 = vmatpush1.xpose.msra.mxu0 0.0
      %2941 = vmatprep.subr.mxu0 0.0
      %2942 = vmatpush1.xpose.msra.mxu0 0.0
      %2943 = vmatprep.subr.mxu0 0.0
      %2944 = vmatpush1.xpose.msra.mxu0 0.0
      %2945 = vmatprep.subr.mxu0 0.0
      %2946 = vmatpush1.xpose.msra.mxu0 0.0
      %2947 = vmatprep.subr.mxu0 0.0
      %2948 = vmatpush1.xpose.msra.mxu0 0.0
      %2949 = vmatprep.subr.mxu0 0.0
      %2950 = vmatpush1.xpose.msra.mxu0 0.0
      %2951 = vmatprep.subr.mxu0 0.0
      %2952 = vmatpush1.xpose.msra.mxu0 0.0
      %2953 = vmatprep.subr.mxu0 0.0
      %2954 = vmatpush1.xpose.msra.mxu0 0.0
      %2955 = vmatprep.subr.mxu0 0.0
      %2956 = vmatpush1.xpose.msra.mxu0 0.0
      %2957 = vmatprep.subr.mxu0 0.0
      %2958 = vmatpush1.xpose.msra.mxu0 0.0
      %2959 = vmatprep.mubr.f32.mxu0 %v182
      %2960 = vmatmul.mubr.f32.gmra.mrb[0].mxu0 %v181
      %v2961 = vpop.f32.mrb[0].mxu0
      %v2962 = vadd.f32 %v2257, %v2961
      %v2963 = vpop.f32.mrb[0].mxu0
      %2964 = vmatprep.mubr.f32.mxu0 %v189
      %2965 = vmatmul.mubr.f32.gmra.mrb[0].mxu0 %v188
      %v2966 = vpop.f32.mrb[0].mxu0
      %v2967 = vadd.f32 %v2262, %v2966
      %v2968 = vpop.f32.mrb[0].mxu0
      %2969 = vmatprep.mubr.f32.mxu0 %v196
      %2970 = vmatmul.mubr.f32.gmra.mrb[0].mxu0 %v195
      %v2971 = vpop.f32.mrb[0].mxu0
      %v2972 = vadd.f32 %v2267, %v2971
      %v2973 = vpop.f32.mrb[0].mxu0
      %2974 = vmatprep.mubr.f32.mxu0 %v203
      %2975 = vmatmul.mubr.f32.gmra.mrb[0].mxu0 %v202
      %v2976 = vpop.f32.mrb[0].mxu0
      %v2977 = vadd.f32 %v2272, %v2976
      %v2978 = vpop.f32.mrb[0].mxu0
      %2979 = vmatprep.mubr.f32.mxu0 %v210
      %2980 = vmatmul.mubr.f32.gmra.mrb[0].mxu0 %v209
      %v2981 = vpop.f32.mrb[0].mxu0
      %v2982 = vadd.f32 %v2277, %v2981
      %v2983 = vpop.f32.mrb[0].mxu0
      %2984 = vmatprep.mubr.f32.mxu0 %v217
      %2985 = vmatmul.mubr.f32.gmra.mrb[0].mxu0 %v216
      %v2986 = vpop.f32.mrb[0].mxu0
      %v2987 = vadd.f32 %v2282, %v2986
      %v2988 = vpop.f32.mrb[0].mxu0
      %2989 = vmatprep.mubr.f32.mxu0 %v224
      %2990 = vmatmul.mubr.f32.gmra.mrb[0].mxu0 %v223
      %v2991 = vpop.f32.mrb[0].mxu0
      %v2992 = vadd.f32 %v2287, %v2991
      %v2993 = vpop.f32.mrb[0].mxu0
      %2994 = vmatprep.mubr.f32.mxu0 %v231
      %2995 = vmatmul.mubr.f32.gmra.mrb[0].mxu0 %v230
      %v2996 = vpop.f32.mrb[0].mxu0
      %v2997 = vadd.f32 %v2292, %v2996
      %v2998 = vpop.f32.mrb[0].mxu0
      %2999 = vmatprep.mubr.f32.mxu0 %v238
      %3000 = vmatmul.mubr.f32.gmra.mrb[0].mxu0 %v237
      %v3001 = vpop.f32.mrb[0].mxu0
      %v3002 = vadd.f32 %v2297, %v3001
      %v3003 = vpop.f32.mrb[0].mxu0
      %3004 = vmatprep.mubr.f32.mxu0 %v245
      %3005 = vmatmul.mubr.f32.gmra.mrb[0].mxu0 %v244
      %v3006 = vpop.f32.mrb[0].mxu0
      %v3007 = vadd.f32 %v2302, %v3006
      %v3008 = vpop.f32.mrb[0].mxu0
      %3009 = vmatprep.mubr.f32.mxu0 %v252
      %3010 = vmatmul.mubr.f32.gmra.mrb[0].mxu0 %v251
      %v3011 = vpop.f32.mrb[0].mxu0
      %v3012 = vadd.f32 %v2307, %v3011
      %v3013 = vpop.f32.mrb[0].mxu0
      %3014 = vmatprep.mubr.f32.mxu0 %v259
      %3015 = vmatmul.mubr.f32.gmra.mrb[0].mxu0 %v258
      %v3016 = vpop.f32.mrb[0].mxu0
      %v3017 = vadd.f32 %v2312, %v3016
      %v3018 = vpop.f32.mrb[0].mxu0
      %3019 = vmatprep.mubr.f32.mxu0 %v266
      %3020 = vmatmul.mubr.f32.gmra.mrb[0].mxu0 %v265
      %v3021 = vpop.f32.mrb[0].mxu0
      %v3022 = vadd.f32 %v2317, %v3021
      %v3023 = vpop.f32.mrb[0].mxu0
      %3024 = vmatprep.mubr.f32.mxu0 %v273
      %3025 = vmatmul.mubr.f32.gmra.mrb[0].mxu0 %v272
      %v3026 = vpop.f32.mrb[0].mxu0
      %v3027 = vadd.f32 %v2322, %v3026
      %v3028 = vpop.f32.mrb[0].mxu0
      %3029 = vmatprep.mubr.f32.mxu0 %v280
      %3030 = vmatmul.mubr.f32.gmra.mrb[0].mxu0 %v279
      %v3031 = vpop.f32.mrb[0].mxu0
      %v3032 = vadd.f32 %v2327, %v3031
      %v3033 = vpop.f32.mrb[0].mxu0
      %3034 = vmatprep.mubr.f32.mxu0 %v287
      %3035 = vmatmul.mubr.f32.gmra.mrb[0].mxu0 %v286
      %v3036 = vpop.f32.mrb[0].mxu0
      %v3037 = vadd.f32 %v2332, %v3036
      %v3038 = vpop.f32.mrb[0].mxu0
      %3039 = vmatprep.mubr.f32.mxu0 %v294
      %3040 = vmatmul.mubr.f32.gmra.mrb[0].mxu0 %v293
      %v3041 = vpop.f32.mrb[0].mxu0
      %v3042 = vadd.f32 %v2337, %v3041
      %v3043 = vpop.f32.mrb[0].mxu0
      %3044 = vmatprep.mubr.f32.mxu0 %v301
      %3045 = vmatmul.mubr.f32.gmra.mrb[0].mxu0 %v300
      %v3046 = vpop.f32.mrb[0].mxu0
      %v3047 = vadd.f32 %v2342, %v3046
      %v3048 = vpop.f32.mrb[0].mxu0
      %3049 = vmatprep.mubr.f32.mxu0 %v308
      %3050 = vmatmul.mubr.f32.gmra.mrb[0].mxu0 %v307
      %v3051 = vpop.f32.mrb[0].mxu0
      %v3052 = vadd.f32 %v2347, %v3051
      %v3053 = vpop.f32.mrb[0].mxu0
      %3054 = vmatprep.mubr.f32.mxu0 %v315
      %3055 = vmatmul.mubr.f32.gmra.mrb[0].mxu0 %v314
      %v3056 = vpop.f32.mrb[0].mxu0
      %v3057 = vadd.f32 %v2352, %v3056
      %v3058 = vpop.f32.mrb[0].mxu0
      %3059 = vmatprep.mubr.f32.mxu0 %v322
      %3060 = vmatmul.mubr.f32.gmra.mrb[0].mxu0 %v321
      %v3061 = vpop.f32.mrb[0].mxu0
      %v3062 = vadd.f32 %v2357, %v3061
      %v3063 = vpop.f32.mrb[0].mxu0
      %3064 = vmatprep.mubr.f32.mxu0 %v329
      %3065 = vmatmul.mubr.f32.gmra.mrb[0].mxu0 %v328
      %v3066 = vpop.f32.mrb[0].mxu0
      %v3067 = vadd.f32 %v2362, %v3066
      %v3068 = vpop.f32.mrb[0].mxu0
      %3069 = vmatprep.mubr.f32.mxu0 %v336
      %3070 = vmatmul.mubr.f32.gmra.mrb[0].mxu0 %v335
      %v3071 = vpop.f32.mrb[0].mxu0
      %v3072 = vadd.f32 %v2367, %v3071
      %v3073 = vpop.f32.mrb[0].mxu0
      %3074 = vmatprep.mubr.f32.mxu0 %v343
      %3075 = vmatmul.mubr.f32.gmra.mrb[0].mxu0 %v342
      %v3076 = vpop.f32.mrb[0].mxu0
      %v3077 = vadd.f32 %v2372, %v3076
      %v3078 = vpop.f32.mrb[0].mxu0
      %3079 = vmatprep.mubr.f32.mxu0 %v350
      %3080 = vmatmul.mubr.f32.gmra.mrb[0].mxu0 %v349
      %v3081 = vpop.f32.mrb[0].mxu0
      %v3082 = vadd.f32 %v2377, %v3081
      %v3083 = vpop.f32.mrb[0].mxu0
      %3084 = vmatprep.mubr.f32.mxu0 %v357
      %3085 = vmatmul.mubr.f32.gmra.mrb[0].mxu0 %v356
      %v3086 = vpop.f32.mrb[0].mxu0
      %v3087 = vadd.f32 %v2382, %v3086
      %v3088 = vpop.f32.mrb[0].mxu0
      %3089 = vmatprep.mubr.f32.mxu0 %v364
      %3090 = vmatmul.mubr.f32.gmra.mrb[0].mxu0 %v363
      %v3091 = vpop.f32.mrb[0].mxu0
      %v3092 = vadd.f32 %v2387, %v3091
      %v3093 = vpop.f32.mrb[0].mxu0
      %3094 = vmatprep.mubr.f32.mxu0 %v371
      %3095 = vmatmul.mubr.f32.gmra.mrb[0].mxu0 %v370
      %v3096 = vpop.f32.mrb[0].mxu0
      %v3097 = vadd.f32 %v2392, %v3096
      %v3098 = vpop.f32.mrb[0].mxu0
      %3099 = vmatprep.mubr.f32.mxu0 %v378
      %3100 = vmatmul.mubr.f32.gmra.mrb[0].mxu0 %v377
      %v3101 = vpop.f32.mrb[0].mxu0
      %v3102 = vadd.f32 %v2397, %v3101
      %v3103 = vpop.f32.mrb[0].mxu0
      %3104 = vmatprep.mubr.f32.mxu0 %v385
      %3105 = vmatmul.mubr.f32.gmra.mrb[0].mxu0 %v384
      %v3106 = vpop.f32.mrb[0].mxu0
      %v3107 = vadd.f32 %v2402, %v3106
      %v3108 = vpop.f32.mrb[0].mxu0
      %3109 = vmatprep.mubr.f32.mxu0 %v392
      %3110 = vmatmul.mubr.f32.gmra.mrb[0].mxu0 %v391
      %v3111 = vpop.f32.mrb[0].mxu0
      %v3112 = vadd.f32 %v2407, %v3111
      %v3113 = vpop.f32.mrb[0].mxu0
      %3114 = vmatprep.mubr.f32.mxu0 %v399
      %3115 = vmatmul.mubr.f32.gmra.mrb[0].mxu0 %v398
      %v3116 = vpop.f32.mrb[0].mxu0
      %v3117 = vadd.f32 %v2412, %v3116
      %v3118 = vpop.f32.mrb[0].mxu0
      %3119 = vmatprep.mubr.f32.mxu0 %v406
      %3120 = vmatmul.mubr.f32.gmra.mrb[0].mxu0 %v405
      %v3121 = vpop.f32.mrb[0].mxu0
      %v3122 = vadd.f32 %v2417, %v3121
      %v3123 = vpop.f32.mrb[0].mxu0
      %3124 = vmatprep.mubr.f32.mxu0 %v413
      %3125 = vmatmul.mubr.f32.gmra.mrb[0].mxu0 %v412
      %v3126 = vpop.f32.mrb[0].mxu0
      %v3127 = vadd.f32 %v2422, %v3126
      %v3128 = vpop.f32.mrb[0].mxu0
      %3129 = vmatprep.mubr.f32.mxu0 %v420
      %3130 = vmatmul.mubr.f32.gmra.mrb[0].mxu0 %v419
      %v3131 = vpop.f32.mrb[0].mxu0
      %v3132 = vadd.f32 %v2427, %v3131
      %v3133 = vpop.f32.mrb[0].mxu0
      %3134 = vmatprep.mubr.f32.mxu0 %v427
      %3135 = vmatmul.mubr.f32.gmra.mrb[0].mxu0 %v426
      %v3136 = vpop.f32.mrb[0].mxu0
      %v3137 = vadd.f32 %v2432, %v3136
      %v3138 = vpop.f32.mrb[0].mxu0
      %3139 = vmatprep.mubr.f32.mxu0 %v434
      %3140 = vmatmul.mubr.f32.gmra.mrb[0].mxu0 %v433
      %v3141 = vpop.f32.mrb[0].mxu0
      %v3142 = vadd.f32 %v2437, %v3141
      %v3143 = vpop.f32.mrb[0].mxu0
      %3144 = vmatprep.mubr.f32.mxu0 %v441
      %3145 = vmatmul.mubr.f32.gmra.mrb[0].mxu0 %v440
      %v3146 = vpop.f32.mrb[0].mxu0
      %v3147 = vadd.f32 %v2442, %v3146
      %v3148 = vpop.f32.mrb[0].mxu0
      %3149 = vmatprep.mubr.f32.mxu0 %v448
      %3150 = vmatmul.mubr.f32.gmra.mrb[0].mxu0 %v447
      %v3151 = vpop.f32.mrb[0].mxu0
      %v3152 = vadd.f32 %v2447, %v3151
      %v3153 = vpop.f32.mrb[0].mxu0
      %3154 = vmatprep.mubr.f32.mxu0 %v455
      %3155 = vmatmul.mubr.f32.gmra.mrb[0].mxu0 %v454
      %v3156 = vpop.f32.mrb[0].mxu0
      %v3157 = vadd.f32 %v2452, %v3156
      %v3158 = vpop.f32.mrb[0].mxu0
      %3159 = vmatprep.mubr.f32.mxu0 %v462
      %3160 = vmatmul.mubr.f32.gmra.mrb[0].mxu0 %v461
      %v3161 = vpop.f32.mrb[0].mxu0
      %v3162 = vadd.f32 %v2457, %v3161
      %v3163 = vpop.f32.mrb[0].mxu0
      %3164 = vmatprep.mubr.f32.mxu0 %v469
      %3165 = vmatmul.mubr.f32.gmra.mrb[0].mxu0 %v468
      %v3166 = vpop.f32.mrb[0].mxu0
      %v3167 = vadd.f32 %v2462, %v3166
      %v3168 = vpop.f32.mrb[0].mxu0
      %3169 = vmatprep.mubr.f32.mxu0 %v476
      %3170 = vmatmul.mubr.f32.gmra.mrb[0].mxu0 %v475
      %v3171 = vpop.f32.mrb[0].mxu0
      %v3172 = vadd.f32 %v2467, %v3171
      %v3173 = vpop.f32.mrb[0].mxu0
      %3174 = vmatprep.mubr.f32.mxu0 %v483
      %3175 = vmatmul.mubr.f32.gmra.mrb[0].mxu0 %v482
      %v3176 = vpop.f32.mrb[0].mxu0
      %v3177 = vadd.f32 %v2472, %v3176
      %v3178 = vpop.f32.mrb[0].mxu0
      %3179 = vmatprep.mubr.f32.mxu0 %v490
      %3180 = vmatmul.mubr.f32.gmra.mrb[0].mxu0 %v489
      %v3181 = vpop.f32.mrb[0].mxu0
      %v3182 = vadd.f32 %v2477, %v3181
      %v3183 = vpop.f32.mrb[0].mxu0
      %3184 = vmatprep.mubr.f32.mxu0 %v497
      %3185 = vmatmul.mubr.f32.gmra.mrb[0].mxu0 %v496
      %v3186 = vpop.f32.mrb[0].mxu0
      %v3187 = vadd.f32 %v2482, %v3186
      %v3188 = vpop.f32.mrb[0].mxu0
      %3189 = vmatprep.mubr.f32.mxu0 %v504
      %3190 = vmatmul.mubr.f32.gmra.mrb[0].mxu0 %v503
      %v3191 = vpop.f32.mrb[0].mxu0
      %v3192 = vadd.f32 %v2487, %v3191
      %v3193 = vpop.f32.mrb[0].mxu0
      %3194 = vmatprep.mubr.f32.mxu0 %v511
      %3195 = vmatmul.mubr.f32.gmra.mrb[0].mxu0 %v510
      %v3196 = vpop.f32.mrb[0].mxu0
      %v3197 = vadd.f32 %v2492, %v3196
      %v3198 = vpop.f32.mrb[0].mxu0
      %3199 = vmatprep.mubr.f32.mxu0 %v518
      %3200 = vmatmul.mubr.f32.gmra.mrb[0].mxu0 %v517
      %v3201 = vpop.f32.mrb[0].mxu0
      %v3202 = vadd.f32 %v2497, %v3201
      %v3203 = vpop.f32.mrb[0].mxu0
      %3204 = vmatprep.mubr.f32.mxu0 %v525
      %3205 = vmatmul.mubr.f32.gmra.mrb[0].mxu0 %v524
      %v3206 = vpop.f32.mrb[0].mxu0
      %v3207 = vadd.f32 %v2502, %v3206
      %v3208 = vpop.f32.mrb[0].mxu0
      %3209 = vmatprep.mubr.f32.mxu0 %v532
      %3210 = vmatmul.mubr.f32.gmra.mrb[0].mxu0 %v531
      %v3211 = vpop.f32.mrb[0].mxu0
      %v3212 = vadd.f32 %v2507, %v3211
      %v3213 = vpop.f32.mrb[0].mxu0
      %3214 = vmatprep.mubr.f32.mxu0 %v539
      %3215 = vmatmul.mubr.f32.gmra.mrb[0].mxu0 %v538
      %v3216 = vpop.f32.mrb[0].mxu0
      %v3217 = vadd.f32 %v2512, %v3216
      %v3218 = vpop.f32.mrb[0].mxu0
      %3219 = vmatprep.mubr.f32.mxu0 %v546
      %3220 = vmatmul.mubr.f32.gmra.mrb[0].mxu0 %v545
      %v3221 = vpop.f32.mrb[0].mxu0
      %v3222 = vadd.f32 %v2517, %v3221
      %v3223 = vpop.f32.mrb[0].mxu0
      %3224 = vmatprep.mubr.f32.mxu0 %v553
      %3225 = vmatmul.mubr.f32.gmra.mrb[0].mxu0 %v552
      %v3226 = vpop.f32.mrb[0].mxu0
      %v3227 = vadd.f32 %v2522, %v3226
      %v3228 = vpop.f32.mrb[0].mxu0
      %3229 = vmatprep.mubr.f32.mxu0 %v560
      %3230 = vmatmul.mubr.f32.gmra.mrb[0].mxu0 %v559
      %v3231 = vpop.f32.mrb[0].mxu0
      %v3232 = vadd.f32 %v2527, %v3231
      %v3233 = vpop.f32.mrb[0].mxu0
      %3234 = vmatprep.mubr.f32.mxu0 %v567
      %3235 = vmatmul.mubr.f32.gmra.mrb[0].mxu0 %v566
      %v3236 = vpop.f32.mrb[0].mxu0
      %v3237 = vadd.f32 %v2532, %v3236
      %v3238 = vpop.f32.mrb[0].mxu0
      %3239 = vmatprep.mubr.f32.mxu0 %v574
      %3240 = vmatmul.mubr.f32.gmra.mrb[0].mxu0 %v573
      %v3241 = vpop.f32.mrb[0].mxu0
      %v3242 = vadd.f32 %v2537, %v3241
      %v3243 = vpop.f32.mrb[0].mxu0
      %3244 = vmatprep.mubr.f32.mxu0 %v581
      %3245 = vmatmul.mubr.f32.gmra.mrb[0].mxu0 %v580
      %v3246 = vpop.f32.mrb[0].mxu0
      %v3247 = vadd.f32 %v2542, %v3246
      %v3248 = vpop.f32.mrb[0].mxu0
      %3249 = vmatprep.mubr.f32.mxu0 %v588
      %3250 = vmatmul.mubr.f32.gmra.mrb[0].mxu0 %v587
      %v3251 = vpop.f32.mrb[0].mxu0
      %v3252 = vadd.f32 %v2547, %v3251
      %v3253 = vpop.f32.mrb[0].mxu0
      %3254 = vmatprep.mubr.f32.mxu0 %v595
      %3255 = vmatmul.mubr.f32.gmra.mrb[0].mxu0 %v594
      %v3256 = vpop.f32.mrb[0].mxu0
      %v3257 = vadd.f32 %v2552, %v3256
      %v3258 = vpop.f32.mrb[0].mxu0
      %3259 = vmatprep.mubr.f32.mxu0 %v602
      %3260 = vmatmul.mubr.f32.gmra.mrb[0].mxu0 %v601
      %v3261 = vpop.f32.mrb[0].mxu0
      %v3262 = vadd.f32 %v2557, %v3261
      %v3263 = vpop.f32.mrb[0].mxu0
      %3264 = vmatprep.mubr.f32.mxu0 %v609
      %3265 = vmatmul.mubr.f32.gmra.mrb[0].mxu0 %v608
      %v3266 = vpop.f32.mrb[0].mxu0
      %v3267 = vadd.f32 %v2562, %v3266
      %v3268 = vpop.f32.mrb[0].mxu0
      %3269 = vmatprep.mubr.f32.mxu0 %v616
      %3270 = vmatmul.mubr.f32.gmra.mrb[0].mxu0 %v615
      %v3271 = vpop.f32.mrb[0].mxu0
      %v3272 = vadd.f32 %v2567, %v3271
      %v3273 = vpop.f32.mrb[0].mxu0
      %3274 = vmatprep.mubr.f32.mxu0 %v623
      %3275 = vmatmul.mubr.f32.gmra.mrb[0].mxu0 %v622
      %v3276 = vpop.f32.mrb[0].mxu0
      %v3277 = vadd.f32 %v2572, %v3276
      %v3278 = vpop.f32.mrb[0].mxu0
      %3279 = vmatprep.mubr.f32.mxu0 %v630
      %3280 = vmatmul.mubr.f32.gmra.mrb[0].mxu0 %v629
      %v3281 = vpop.f32.mrb[0].mxu0
      %v3282 = vadd.f32 %v2577, %v3281
      %v3283 = vpop.f32.mrb[0].mxu0
      %3284 = vmatprep.mubr.f32.mxu0 %v637
      %3285 = vmatmul.mubr.f32.gmra.mrb[0].mxu0 %v636
      %v3286 = vpop.f32.mrb[0].mxu0
      %v3287 = vadd.f32 %v2582, %v3286
      %v3288 = vpop.f32.mrb[0].mxu0
      %3289 = vmatprep.mubr.f32.mxu0 %v644
      %3290 = vmatmul.mubr.f32.gmra.mrb[0].mxu0 %v643
      %v3291 = vpop.f32.mrb[0].mxu0
      %v3292 = vadd.f32 %v2587, %v3291
      %v3293 = vpop.f32.mrb[0].mxu0
      %3294 = vmatprep.mubr.f32.mxu0 %v651
      %3295 = vmatmul.mubr.f32.gmra.mrb[0].mxu0 %v650
      %v3296 = vpop.f32.mrb[0].mxu0
      %v3297 = vadd.f32 %v2592, %v3296
      %v3298 = vpop.f32.mrb[0].mxu0
      %3299 = vmatprep.mubr.f32.mxu0 %v658
      %3300 = vmatmul.mubr.f32.gmra.mrb[0].mxu0 %v657
      %v3301 = vpop.f32.mrb[0].mxu0
      %v3302 = vadd.f32 %v2597, %v3301
      %v3303 = vpop.f32.mrb[0].mxu0
      %3304 = vmatprep.mubr.f32.mxu0 %v665
      %3305 = vmatmul.mubr.f32.gmra.mrb[0].mxu0 %v664
      %v3306 = vpop.f32.mrb[0].mxu0
      %v3307 = vadd.f32 %v2602, %v3306
      %v3308 = vpop.f32.mrb[0].mxu0
      %3309 = vmatprep.mubr.f32.mxu0 %v672
      %3310 = vmatmul.mubr.f32.gmra.mrb[0].mxu0 %v671
      %v3311 = vpop.f32.mrb[0].mxu0
      %v3312 = vadd.f32 %v2607, %v3311
      %v3313 = vpop.f32.mrb[0].mxu0
      %3314 = vmatprep.mubr.f32.mxu0 %v679
      %3315 = vmatmul.mubr.f32.gmra.mrb[0].mxu0 %v678
      %v3316 = vpop.f32.mrb[0].mxu0
      %v3317 = vadd.f32 %v2612, %v3316
      %v3318 = vpop.f32.mrb[0].mxu0
      %3319 = vmatprep.mubr.f32.mxu0 %v686
      %3320 = vmatmul.mubr.f32.gmra.mrb[0].mxu0 %v685
      %v3321 = vpop.f32.mrb[0].mxu0
      %v3322 = vadd.f32 %v2617, %v3321
      %v3323 = vpop.f32.mrb[0].mxu0
      %3324 = vmatprep.mubr.f32.mxu0 %v693
      %3325 = vmatmul.mubr.f32.gmra.mrb[0].mxu0 %v692
      %v3326 = vpop.f32.mrb[0].mxu0
      %v3327 = vadd.f32 %v2622, %v3326
      %v3328 = vpop.f32.mrb[0].mxu0
      %3329 = vmatprep.mubr.f32.mxu0 %v700
      %3330 = vmatmul.mubr.f32.gmra.mrb[0].mxu0 %v699
      %v3331 = vpop.f32.mrb[0].mxu0
      %v3332 = vadd.f32 %v2627, %v3331
      %v3333 = vpop.f32.mrb[0].mxu0
      %3334 = vmatprep.mubr.f32.mxu0 %v707
      %3335 = vmatmul.mubr.f32.gmra.mrb[0].mxu0 %v706
      %v3336 = vpop.f32.mrb[0].mxu0
      %v3337 = vadd.f32 %v2632, %v3336
      %v3338 = vpop.f32.mrb[0].mxu0
      %3339 = vmatprep.mubr.f32.mxu0 %v714
      %3340 = vmatmul.mubr.f32.gmra.mrb[0].mxu0 %v713
      %v3341 = vpop.f32.mrb[0].mxu0
      %v3342 = vadd.f32 %v2637, %v3341
      %v3343 = vpop.f32.mrb[0].mxu0
      %3344 = vmatprep.mubr.f32.mxu0 %v721
      %3345 = vmatmul.mubr.f32.gmra.mrb[0].mxu0 %v720
      %v3346 = vpop.f32.mrb[0].mxu0
      %v3347 = vadd.f32 %v2642, %v3346
      %v3348 = vpop.f32.mrb[0].mxu0
      %3349 = vmatprep.mubr.f32.mxu0 %v728
      %3350 = vmatmul.mubr.f32.gmra.mrb[0].mxu0 %v727
      %v3351 = vpop.f32.mrb[0].mxu0
      %v3352 = vadd.f32 %v2647, %v3351
      %v3353 = vpop.f32.mrb[0].mxu0
      %3354 = vmatprep.mubr.f32.mxu0 %v735
      %3355 = vmatmul.mubr.f32.gmra.mrb[0].mxu0 %v734
      %v3356 = vpop.f32.mrb[0].mxu0
      %v3357 = vadd.f32 %v2652, %v3356
      %v3358 = vpop.f32.mrb[0].mxu0
      %3359 = vmatprep.mubr.f32.mxu0 %v742
      %3360 = vmatmul.mubr.f32.gmra.mrb[0].mxu0 %v741
      %v3361 = vpop.f32.mrb[0].mxu0
      %v3362 = vadd.f32 %v2657, %v3361
      %v3363 = vpop.f32.mrb[0].mxu0
      %3364 = vmatprep.mubr.f32.mxu0 %v749
      %3365 = vmatmul.mubr.f32.gmra.mrb[0].mxu0 %v748
      %v3366 = vpop.f32.mrb[0].mxu0
      %v3367 = vadd.f32 %v2662, %v3366
      %v3368 = vpop.f32.mrb[0].mxu0
      %3369 = vmatprep.mubr.f32.mxu0 %v756
      %3370 = vmatmul.mubr.f32.gmra.mrb[0].mxu0 %v755
      %v3371 = vpop.f32.mrb[0].mxu0
      %v3372 = vadd.f32 %v2667, %v3371
      %v3373 = vpop.f32.mrb[0].mxu0
      %3374 = vmatprep.mubr.f32.mxu0 %v763
      %3375 = vmatmul.mubr.f32.gmra.mrb[0].mxu0 %v762
      %v3376 = vpop.f32.mrb[0].mxu0
      %v3377 = vadd.f32 %v2672, %v3376
      %v3378 = vpop.f32.mrb[0].mxu0
      %3379 = vmatprep.mubr.f32.mxu0 %v770
      %3380 = vmatmul.mubr.f32.gmra.mrb[0].mxu0 %v769
      %v3381 = vpop.f32.mrb[0].mxu0
      %v3382 = vadd.f32 %v2677, %v3381
      %v3383 = vpop.f32.mrb[0].mxu0
      %3384 = vmatprep.mubr.f32.mxu0 %v777
      %3385 = vmatmul.mubr.f32.gmra.mrb[0].mxu0 %v776
      %v3386 = vpop.f32.mrb[0].mxu0
      %v3387 = vadd.f32 %v2682, %v3386
      %v3388 = vpop.f32.mrb[0].mxu0
      %3389 = vmatprep.mubr.f32.mxu0 %v784
      %3390 = vmatmul.mubr.f32.gmra.mrb[0].mxu0 %v783
      %v3391 = vpop.f32.mrb[0].mxu0
      %v3392 = vadd.f32 %v2687, %v3391
      %v3393 = vpop.f32.mrb[0].mxu0
      %3394 = vmatprep.mubr.f32.mxu0 %v791
      %3395 = vmatmul.mubr.f32.gmra.mrb[0].mxu0 %v790
      %v3396 = vpop.f32.mrb[0].mxu0
      %v3397 = vadd.f32 %v2692, %v3396
      %v3398 = vpop.f32.mrb[0].mxu0
      %3399 = vmatprep.mubr.f32.mxu0 %v798
      %3400 = vmatmul.mubr.f32.gmra.mrb[0].mxu0 %v797
      %v3401 = vpop.f32.mrb[0].mxu0
      %v3402 = vadd.f32 %v2697, %v3401
      %v3403 = vpop.f32.mrb[0].mxu0
      %3404 = vmatprep.mubr.f32.mxu0 %v805
      %3405 = vmatmul.mubr.f32.gmra.mrb[0].mxu0 %v804
      %v3406 = vpop.f32.mrb[0].mxu0
      %v3407 = vadd.f32 %v2702, %v3406
      %v3408 = vpop.f32.mrb[0].mxu0
      %3409 = vmatprep.mubr.f32.mxu0 %v812
      %3410 = vmatmul.mubr.f32.gmra.mrb[0].mxu0 %v811
      %v3411 = vpop.f32.mrb[0].mxu0
      %v3412 = vadd.f32 %v2707, %v3411
      %v3413 = vpop.f32.mrb[0].mxu0
      %3414 = vmatprep.mubr.f32.mxu0 %v819
      %3415 = vmatmul.mubr.f32.gmra.mrb[0].mxu0 %v818
      %v3416 = vpop.f32.mrb[0].mxu0
      %v3417 = vadd.f32 %v2712, %v3416
      %v3418 = vpop.f32.mrb[0].mxu0
      %3419 = vmatprep.mubr.f32.mxu0 %v826
      %3420 = vmatmul.mubr.f32.gmra.mrb[0].mxu0 %v825
      %v3421 = vpop.f32.mrb[0].mxu0
      %v3422 = vadd.f32 %v2717, %v3421
      %v3423 = vpop.f32.mrb[0].mxu0
      %3424 = vmatprep.mubr.f32.mxu0 %v833
      %3425 = vmatmul.mubr.f32.gmra.mrb[0].mxu0 %v832
      %v3426 = vpop.f32.mrb[0].mxu0
      %v3427 = vadd.f32 %v2722, %v3426
      %v3428 = vpop.f32.mrb[0].mxu0
      %3429 = vmatprep.mubr.f32.mxu0 %v840
      %3430 = vmatmul.mubr.f32.gmra.mrb[0].mxu0 %v839
      %v3431 = vpop.f32.mrb[0].mxu0
      %v3432 = vadd.f32 %v2727, %v3431
      %v3433 = vpop.f32.mrb[0].mxu0
      %3434 = vmatprep.mubr.f32.mxu0 %v847
      %3435 = vmatmul.mubr.f32.gmra.mrb[0].mxu0 %v846
      %v3436 = vpop.f32.mrb[0].mxu0
      %v3437 = vadd.f32 %v2732, %v3436
      %v3438 = vpop.f32.mrb[0].mxu0
      %3439 = vmatprep.mubr.f32.mxu0 %v854
      %3440 = vmatmul.mubr.f32.gmra.mrb[0].mxu0 %v853
      %v3441 = vpop.f32.mrb[0].mxu0
      %v3442 = vadd.f32 %v2737, %v3441
      %v3443 = vpop.f32.mrb[0].mxu0
      %3444 = vmatprep.mubr.f32.mxu0 %v861
      %3445 = vmatmul.mubr.f32.gmra.mrb[0].mxu0 %v860
      %v3446 = vpop.f32.mrb[0].mxu0
      %v3447 = vadd.f32 %v2742, %v3446
      %v3448 = vpop.f32.mrb[0].mxu0
      %3449 = vmatprep.mubr.f32.mxu0 %v868
      %3450 = vmatmul.mubr.f32.gmra.mrb[0].mxu0 %v867
      %v3451 = vpop.f32.mrb[0].mxu0
      %v3452 = vadd.f32 %v2747, %v3451
      %v3453 = vpop.f32.mrb[0].mxu0
      %3454 = vmatprep.mubr.f32.mxu0 %v875
      %3455 = vmatmul.mubr.f32.gmra.mrb[0].mxu0 %v874
      %v3456 = vpop.f32.mrb[0].mxu0
      %v3457 = vadd.f32 %v2752, %v3456
      %v3458 = vpop.f32.mrb[0].mxu0
      %3459 = vmatprep.mubr.f32.mxu0 %v882
      %3460 = vmatmul.mubr.f32.gmra.mrb[0].mxu0 %v881
      %v3461 = vpop.f32.mrb[0].mxu0
      %v3462 = vadd.f32 %v2757, %v3461
      %v3463 = vpop.f32.mrb[0].mxu0
      %3464 = vmatprep.mubr.f32.mxu0 %v889
      %3465 = vmatmul.mubr.f32.gmra.mrb[0].mxu0 %v888
      %v3466 = vpop.f32.mrb[0].mxu0
      %v3467 = vadd.f32 %v2762, %v3466
      %v3468 = vpop.f32.mrb[0].mxu0
      %3469 = vmatprep.mubr.f32.mxu0 %v896
      %3470 = vmatmul.mubr.f32.gmra.mrb[0].mxu0 %v895
      %v3471 = vpop.f32.mrb[0].mxu0
      %v3472 = vadd.f32 %v2767, %v3471
      %v3473 = vpop.f32.mrb[0].mxu0
      %3474 = vmatprep.mubr.f32.mxu0 %v903
      %3475 = vmatmul.mubr.f32.gmra.mrb[0].mxu0 %v902
      %v3476 = vpop.f32.mrb[0].mxu0
      %v3477 = vadd.f32 %v2772, %v3476
      %v3478 = vpop.f32.mrb[0].mxu0
      %3479 = vmatprep.mubr.f32.mxu0 %v910
      %3480 = vmatmul.mubr.f32.gmra.mrb[0].mxu0 %v909
      %v3481 = vpop.f32.mrb[0].mxu0
      %v3482 = vadd.f32 %v2777, %v3481
      %v3483 = vpop.f32.mrb[0].mxu0
      %3484 = vmatprep.mubr.f32.mxu0 %v917
      %3485 = vmatmul.mubr.f32.gmra.mrb[0].mxu0 %v916
      %v3486 = vpop.f32.mrb[0].mxu0
      %v3487 = vadd.f32 %v2782, %v3486
      %v3488 = vpop.f32.mrb[0].mxu0
      %3489 = vmatprep.mubr.f32.mxu0 %v924
      %3490 = vmatmul.mubr.f32.gmra.mrb[0].mxu0 %v923
      %v3491 = vpop.f32.mrb[0].mxu0
      %v3492 = vadd.f32 %v2787, %v3491
      %v3493 = vpop.f32.mrb[0].mxu0
      %3494 = vmatprep.mubr.f32.mxu0 %v931
      %3495 = vmatmul.mubr.f32.gmra.mrb[0].mxu0 %v930
      %v3496 = vpop.f32.mrb[0].mxu0
      %v3497 = vadd.f32 %v2792, %v3496
      %v3498 = vpop.f32.mrb[0].mxu0
      %3499 = vmatprep.mubr.f32.mxu0 %v938
      %3500 = vmatmul.mubr.f32.gmra.mrb[0].mxu0 %v937
      %v3501 = vpop.f32.mrb[0].mxu0
      %v3502 = vadd.f32 %v2797, %v3501
      %v3503 = vpop.f32.mrb[0].mxu0
      %3504 = vmatprep.mubr.f32.mxu0 %v945
      %3505 = vmatmul.mubr.f32.gmra.mrb[0].mxu0 %v944
      %v3506 = vpop.f32.mrb[0].mxu0
      %v3507 = vadd.f32 %v2802, %v3506
      %v3508 = vpop.f32.mrb[0].mxu0
      %3509 = vmatprep.mubr.f32.mxu0 %v952
      %3510 = vmatmul.mubr.f32.gmra.mrb[0].mxu0 %v951
      %v3511 = vpop.f32.mrb[0].mxu0
      %v3512 = vadd.f32 %v2807, %v3511
      %v3513 = vpop.f32.mrb[0].mxu0
      %3514 = vmatprep.mubr.f32.mxu0 %v959
      %3515 = vmatmul.mubr.f32.gmra.mrb[0].mxu0 %v958
      %v3516 = vpop.f32.mrb[0].mxu0
      %v3517 = vadd.f32 %v2812, %v3516
      %v3518 = vpop.f32.mrb[0].mxu0
      %3519 = vmatprep.mubr.f32.mxu0 %v966
      %3520 = vmatmul.mubr.f32.gmra.mrb[0].mxu0 %v965
      %v3521 = vpop.f32.mrb[0].mxu0
      %v3522 = vadd.f32 %v2817, %v3521
      %v3523 = vpop.f32.mrb[0].mxu0
      %3524 = vmatprep.mubr.f32.mxu0 %v973
      %3525 = vmatmul.mubr.f32.gmra.mrb[0].mxu0 %v972
      %v3526 = vpop.f32.mrb[0].mxu0
      %v3527 = vadd.f32 %v2822, %v3526
      %v3528 = vpop.f32.mrb[0].mxu0
      %3529 = vmatprep.mubr.f32.mxu0 %v980
      %3530 = vmatmul.mubr.f32.gmra.mrb[0].mxu0 %v979
      %v3531 = vpop.f32.mrb[0].mxu0
      %v3532 = vadd.f32 %v2827, %v3531
      %v3533 = vpop.f32.mrb[0].mxu0
      %3534 = vmatprep.mubr.f32.mxu0 %v987
      %3535 = vmatmul.mubr.f32.gmra.mrb[0].mxu0 %v986
      %v3536 = vpop.f32.mrb[0].mxu0
      %v3537 = vadd.f32 %v2832, %v3536
      %v3538 = vpop.f32.mrb[0].mxu0
      %3539 = vmatprep.mubr.f32.mxu0 %v994
      %3540 = vmatmul.mubr.f32.gmra.mrb[0].mxu0 %v993
      %v3541 = vpop.f32.mrb[0].mxu0
      %v3542 = vadd.f32 %v2837, %v3541
      %v3543 = vpop.f32.mrb[0].mxu0
      %3544 = vmatprep.mubr.f32.mxu0 %v1001
      %3545 = vmatmul.mubr.f32.gmra.mrb[0].mxu0 %v1000
      %v3546 = vpop.f32.mrb[0].mxu0
      %v3547 = vadd.f32 %v2842, %v3546
      %v3548 = vpop.f32.mrb[0].mxu0
      %3549 = vmatprep.mubr.f32.mxu0 %v1008
      %3550 = vmatmul.mubr.f32.gmra.mrb[0].mxu0 %v1007
      %v3551 = vpop.f32.mrb[0].mxu0
      %v3552 = vadd.f32 %v2847, %v3551
      %v3553 = vpop.f32.mrb[0].mxu0
      %3554 = vmatprep.mubr.f32.mxu0 %v1015
      %3555 = vmatmul.mubr.f32.gmra.mrb[0].mxu0 %v1014
      %v3556 = vpop.f32.mrb[0].mxu0
      %v3557 = vadd.f32 %v2852, %v3556
      %v3558 = vpop.f32.mrb[0].mxu0
      %3559 = vmatprep.mubr.f32.mxu0 %v1022
      %3560 = vmatmul.mubr.f32.gmra.mrb[0].mxu0 %v1021
      %v3561 = vpop.f32.mrb[0].mxu0
      %v3562 = vadd.f32 %v2857, %v3561
      %v3563 = vpop.f32.mrb[0].mxu0
      %3564 = vmatprep.mubr.f32.mxu0 %v1029
      %3565 = vmatmul.mubr.f32.gmra.mrb[0].mxu0 %v1028
      %v3566 = vpop.f32.mrb[0].mxu0
      %v3567 = vadd.f32 %v2862, %v3566
      %v3568 = vpop.f32.mrb[0].mxu0
      %3569 = vmatprep.mubr.f32.mxu0 %v1036
      %3570 = vmatmul.mubr.f32.gmra.mrb[0].mxu0 %v1035
      %v3571 = vpop.f32.mrb[0].mxu0
      %v3572 = vadd.f32 %v2867, %v3571
      %v3573 = vpop.f32.mrb[0].mxu0
      %3574 = vmatprep.mubr.f32.mxu0 %v1043
      %3575 = vmatmul.mubr.f32.gmra.mrb[0].mxu0 %v1042
      %v3576 = vpop.f32.mrb[0].mxu0
      %v3577 = vadd.f32 %v2872, %v3576
      %v3578 = vpop.f32.mrb[0].mxu0
      %3579 = vmatprep.mubr.f32.mxu0 %v1050
      %3580 = vmatmul.mubr.f32.gmra.mrb[0].mxu0 %v1049
      %v3581 = vpop.f32.mrb[0].mxu0
      %v3582 = vadd.f32 %v2877, %v3581
      %v3583 = vpop.f32.mrb[0].mxu0
      %3584 = vmatprep.mubr.f32.mxu0 %v1057
      %3585 = vmatmul.mubr.f32.gmra.mrb[0].mxu0 %v1056
      %v3586 = vpop.f32.mrb[0].mxu0
      %v3587 = vadd.f32 %v2882, %v3586
      %v3588 = vpop.f32.mrb[0].mxu0
      %3589 = vmatprep.mubr.f32.mxu0 %v1064
      %3590 = vmatmul.mubr.f32.gmra.mrb[0].mxu0 %v1063
      %v3591 = vpop.f32.mrb[0].mxu0
      %v3592 = vadd.f32 %v2887, %v3591
      %v3593 = vpop.f32.mrb[0].mxu0
      %3594 = vmatprep.mubr.f32.mxu0 %v1071
      %3595 = vmatmul.mubr.f32.gmra.mrb[0].mxu0 %v1070
      %v3596 = vpop.f32.mrb[0].mxu0
      %v3597 = vadd.f32 %v2892, %v3596
      %v3598 = vpop.f32.mrb[0].mxu0
      %3599 = vdwg.mxu0
      %3600 = vmatprep.subr.mxu0 0.0
      %3601 = vmatpush1.xpose.msra.mxu0 %v1480
      %3602 = vmatprep.subr.mxu0 0.0
      %3603 = vmatpush1.xpose.msra.mxu0 %v1483
      %3604 = vmatprep.subr.mxu0 0.0
      %3605 = vmatpush1.xpose.msra.mxu0 0.0
      %3606 = vmatprep.subr.mxu0 0.0
      %3607 = vmatpush1.xpose.msra.mxu0 0.0
      %3608 = vmatprep.subr.mxu0 0.0
      %3609 = vmatpush1.xpose.msra.mxu0 0.0
      %3610 = vmatprep.subr.mxu0 0.0
      %3611 = vmatpush1.xpose.msra.mxu0 0.0
      %3612 = vmatprep.subr.mxu0 0.0
      %3613 = vmatpush1.xpose.msra.mxu0 0.0
      %3614 = vmatprep.subr.mxu0 0.0
      %3615 = vmatpush1.xpose.msra.mxu0 0.0
      %3616 = vmatprep.subr.mxu0 0.0
      %3617 = vmatpush1.xpose.msra.mxu0 0.0
      %3618 = vmatprep.subr.mxu0 0.0
      %3619 = vmatpush1.xpose.msra.mxu0 0.0
      %3620 = vmatprep.subr.mxu0 0.0
      %3621 = vmatpush1.xpose.msra.mxu0 0.0
      %3622 = vmatprep.subr.mxu0 0.0
      %3623 = vmatpush1.xpose.msra.mxu0 0.0
      %3624 = vmatprep.subr.mxu0 0.0
      %3625 = vmatpush1.xpose.msra.mxu0 0.0
      %3626 = vmatprep.subr.mxu0 0.0
      %3627 = vmatpush1.xpose.msra.mxu0 0.0
      %3628 = vmatprep.subr.mxu0 0.0
      %3629 = vmatpush1.xpose.msra.mxu0 0.0
      %3630 = vmatprep.subr.mxu0 0.0
      %3631 = vmatpush1.xpose.msra.mxu0 0.0
      %3632 = vmatprep.subr.mxu0 0.0
      %3633 = vmatpush1.xpose.msra.mxu0 0.0
      %3634 = vmatprep.subr.mxu0 0.0
      %3635 = vmatpush1.xpose.msra.mxu0 0.0
      %3636 = vmatprep.subr.mxu0 0.0
      %3637 = vmatpush1.xpose.msra.mxu0 0.0
      %3638 = vmatprep.subr.mxu0 0.0
      %3639 = vmatpush1.xpose.msra.mxu0 0.0
      %3640 = vmatprep.subr.mxu0 0.0
      %3641 = vmatpush1.xpose.msra.mxu0 0.0
      %3642 = vmatprep.subr.mxu0 0.0
      %3643 = vmatpush1.xpose.msra.mxu0 0.0
      %3644 = vmatprep.subr.mxu0 0.0
      %3645 = vmatpush1.xpose.msra.mxu0 0.0
      %3646 = vmatprep.subr.mxu0 0.0
      %3647 = vmatpush1.xpose.msra.mxu0 0.0
      %3648 = vmatprep.subr.mxu0 0.0
      %3649 = vmatpush1.xpose.msra.mxu0 0.0
      %3650 = vmatprep.subr.mxu0 0.0
      %3651 = vmatpush1.xpose.msra.mxu0 0.0
      %3652 = vmatprep.subr.mxu0 0.0
      %3653 = vmatpush1.xpose.msra.mxu0 0.0
      %3654 = vmatprep.subr.mxu0 0.0
      %3655 = vmatpush1.xpose.msra.mxu0 0.0
      %3656 = vmatprep.subr.mxu0 0.0
      %3657 = vmatpush1.xpose.msra.mxu0 0.0
      %3658 = vmatprep.subr.mxu0 0.0
      %3659 = vmatpush1.xpose.msra.mxu0 0.0
      %3660 = vmatprep.subr.mxu0 0.0
      %3661 = vmatpush1.xpose.msra.mxu0 0.0
      %3662 = vmatprep.subr.mxu0 0.0
      %3663 = vmatpush1.xpose.msra.mxu0 0.0
      %3664 = vmatprep.mubr.f32.mxu0 0.0
      %3665 = vmatmul.mubr.f32.gmra.mrb[0].mxu0 %v1096
      %v3666 = vpop.f32.mrb[0].mxu0
      %v3667 = vadd.f32 %v2962, %v3666
      %v3668 = vpop.f32.mrb[0].mxu0
      %3669 = vmatprep.mubr.f32.mxu0 0.0
      %3670 = vmatmul.mubr.f32.gmra.mrb[0].mxu0 %v1099
      %v3671 = vpop.f32.mrb[0].mxu0
      %v3672 = vadd.f32 %v2967, %v3671
      %v3673 = vpop.f32.mrb[0].mxu0
      %3674 = vmatprep.mubr.f32.mxu0 0.0
      %3675 = vmatmul.mubr.f32.gmra.mrb[0].mxu0 %v1102
      %v3676 = vpop.f32.mrb[0].mxu0
      %v3677 = vadd.f32 %v2972, %v3676
      %v3678 = vpop.f32.mrb[0].mxu0
      %3679 = vmatprep.mubr.f32.mxu0 0.0
      %3680 = vmatmul.mubr.f32.gmra.mrb[0].mxu0 %v1105
      %v3681 = vpop.f32.mrb[0].mxu0
      %v3682 = vadd.f32 %v2977, %v3681
      %v3683 = vpop.f32.mrb[0].mxu0
      %3684 = vmatprep.mubr.f32.mxu0 0.0
      %3685 = vmatmul.mubr.f32.gmra.mrb[0].mxu0 %v1108
      %v3686 = vpop.f32.mrb[0].mxu0
      %v3687 = vadd.f32 %v2982, %v3686
      %v3688 = vpop.f32.mrb[0].mxu0
      %3689 = vmatprep.mubr.f32.mxu0 0.0
      %3690 = vmatmul.mubr.f32.gmra.mrb[0].mxu0 %v1111
      %v3691 = vpop.f32.mrb[0].mxu0
      %v3692 = vadd.f32 %v2987, %v3691
      %v3693 = vpop.f32.mrb[0].mxu0
      %3694 = vmatprep.mubr.f32.mxu0 0.0
      %3695 = vmatmul.mubr.f32.gmra.mrb[0].mxu0 %v1114
      %v3696 = vpop.f32.mrb[0].mxu0
      %v3697 = vadd.f32 %v2992, %v3696
      %v3698 = vpop.f32.mrb[0].mxu0
      %3699 = vmatprep.mubr.f32.mxu0 0.0
      %3700 = vmatmul.mubr.f32.gmra.mrb[0].mxu0 %v1117
      %v3701 = vpop.f32.mrb[0].mxu0
      %v3702 = vadd.f32 %v2997, %v3701
      %v3703 = vpop.f32.mrb[0].mxu0
      %3704 = vmatprep.mubr.f32.mxu0 0.0
      %3705 = vmatmul.mubr.f32.gmra.mrb[0].mxu0 %v1120
      %v3706 = vpop.f32.mrb[0].mxu0
      %v3707 = vadd.f32 %v3002, %v3706
      %v3708 = vpop.f32.mrb[0].mxu0
      %3709 = vmatprep.mubr.f32.mxu0 0.0
      %3710 = vmatmul.mubr.f32.gmra.mrb[0].mxu0 %v1123
      %v3711 = vpop.f32.mrb[0].mxu0
      %v3712 = vadd.f32 %v3007, %v3711
      %v3713 = vpop.f32.mrb[0].mxu0
      %3714 = vmatprep.mubr.f32.mxu0 0.0
      %3715 = vmatmul.mubr.f32.gmra.mrb[0].mxu0 %v1126
      %v3716 = vpop.f32.mrb[0].mxu0
      %v3717 = vadd.f32 %v3012, %v3716
      %v3718 = vpop.f32.mrb[0].mxu0
      %3719 = vmatprep.mubr.f32.mxu0 0.0
      %3720 = vmatmul.mubr.f32.gmra.mrb[0].mxu0 %v1129
      %v3721 = vpop.f32.mrb[0].mxu0
      %v3722 = vadd.f32 %v3017, %v3721
      %v3723 = vpop.f32.mrb[0].mxu0
      %3724 = vmatprep.mubr.f32.mxu0 0.0
      %3725 = vmatmul.mubr.f32.gmra.mrb[0].mxu0 %v1132
      %v3726 = vpop.f32.mrb[0].mxu0
      %v3727 = vadd.f32 %v3022, %v3726
      %v3728 = vpop.f32.mrb[0].mxu0
      %3729 = vmatprep.mubr.f32.mxu0 0.0
      %3730 = vmatmul.mubr.f32.gmra.mrb[0].mxu0 %v1135
      %v3731 = vpop.f32.mrb[0].mxu0
      %v3732 = vadd.f32 %v3027, %v3731
      %v3733 = vpop.f32.mrb[0].mxu0
      %3734 = vmatprep.mubr.f32.mxu0 0.0
      %3735 = vmatmul.mubr.f32.gmra.mrb[0].mxu0 %v1138
      %v3736 = vpop.f32.mrb[0].mxu0
      %v3737 = vadd.f32 %v3032, %v3736
      %v3738 = vpop.f32.mrb[0].mxu0
      %3739 = vmatprep.mubr.f32.mxu0 0.0
      %3740 = vmatmul.mubr.f32.gmra.mrb[0].mxu0 %v1141
      %v3741 = vpop.f32.mrb[0].mxu0
      %v3742 = vadd.f32 %v3037, %v3741
      %v3743 = vpop.f32.mrb[0].mxu0
      %3744 = vmatprep.mubr.f32.mxu0 0.0
      %3745 = vmatmul.mubr.f32.gmra.mrb[0].mxu0 %v1144
      %v3746 = vpop.f32.mrb[0].mxu0
      %v3747 = vadd.f32 %v3042, %v3746
      %v3748 = vpop.f32.mrb[0].mxu0
      %3749 = vmatprep.mubr.f32.mxu0 0.0
      %3750 = vmatmul.mubr.f32.gmra.mrb[0].mxu0 %v1147
      %v3751 = vpop.f32.mrb[0].mxu0
      %v3752 = vadd.f32 %v3047, %v3751
      %v3753 = vpop.f32.mrb[0].mxu0
      %3754 = vmatprep.mubr.f32.mxu0 0.0
      %3755 = vmatmul.mubr.f32.gmra.mrb[0].mxu0 %v1150
      %v3756 = vpop.f32.mrb[0].mxu0
      %v3757 = vadd.f32 %v3052, %v3756
      %v3758 = vpop.f32.mrb[0].mxu0
      %3759 = vmatprep.mubr.f32.mxu0 0.0
      %3760 = vmatmul.mubr.f32.gmra.mrb[0].mxu0 %v1153
      %v3761 = vpop.f32.mrb[0].mxu0
      %v3762 = vadd.f32 %v3057, %v3761
      %v3763 = vpop.f32.mrb[0].mxu0
      %3764 = vmatprep.mubr.f32.mxu0 0.0
      %3765 = vmatmul.mubr.f32.gmra.mrb[0].mxu0 %v1156
      %v3766 = vpop.f32.mrb[0].mxu0
      %v3767 = vadd.f32 %v3062, %v3766
      %v3768 = vpop.f32.mrb[0].mxu0
      %3769 = vmatprep.mubr.f32.mxu0 0.0
      %3770 = vmatmul.mubr.f32.gmra.mrb[0].mxu0 %v1159
      %v3771 = vpop.f32.mrb[0].mxu0
      %v3772 = vadd.f32 %v3067, %v3771
      %v3773 = vpop.f32.mrb[0].mxu0
      %3774 = vmatprep.mubr.f32.mxu0 0.0
      %3775 = vmatmul.mubr.f32.gmra.mrb[0].mxu0 %v1162
      %v3776 = vpop.f32.mrb[0].mxu0
      %v3777 = vadd.f32 %v3072, %v3776
      %v3778 = vpop.f32.mrb[0].mxu0
      %3779 = vmatprep.mubr.f32.mxu0 0.0
      %3780 = vmatmul.mubr.f32.gmra.mrb[0].mxu0 %v1165
      %v3781 = vpop.f32.mrb[0].mxu0
      %v3782 = vadd.f32 %v3077, %v3781
      %v3783 = vpop.f32.mrb[0].mxu0
      %3784 = vmatprep.mubr.f32.mxu0 0.0
      %3785 = vmatmul.mubr.f32.gmra.mrb[0].mxu0 %v1168
      %v3786 = vpop.f32.mrb[0].mxu0
      %v3787 = vadd.f32 %v3082, %v3786
      %v3788 = vpop.f32.mrb[0].mxu0
      %3789 = vmatprep.mubr.f32.mxu0 0.0
      %3790 = vmatmul.mubr.f32.gmra.mrb[0].mxu0 %v1171
      %v3791 = vpop.f32.mrb[0].mxu0
      %v3792 = vadd.f32 %v3087, %v3791
      %v3793 = vpop.f32.mrb[0].mxu0
      %3794 = vmatprep.mubr.f32.mxu0 0.0
      %3795 = vmatmul.mubr.f32.gmra.mrb[0].mxu0 %v1174
      %v3796 = vpop.f32.mrb[0].mxu0
      %v3797 = vadd.f32 %v3092, %v3796
      %v3798 = vpop.f32.mrb[0].mxu0
      %3799 = vmatprep.mubr.f32.mxu0 0.0
      %3800 = vmatmul.mubr.f32.gmra.mrb[0].mxu0 %v1177
      %v3801 = vpop.f32.mrb[0].mxu0
      %v3802 = vadd.f32 %v3097, %v3801
      %v3803 = vpop.f32.mrb[0].mxu0
      %3804 = vmatprep.mubr.f32.mxu0 0.0
      %3805 = vmatmul.mubr.f32.gmra.mrb[0].mxu0 %v1180
      %v3806 = vpop.f32.mrb[0].mxu0
      %v3807 = vadd.f32 %v3102, %v3806
      %v3808 = vpop.f32.mrb[0].mxu0
      %3809 = vmatprep.mubr.f32.mxu0 0.0
      %3810 = vmatmul.mubr.f32.gmra.mrb[0].mxu0 %v1183
      %v3811 = vpop.f32.mrb[0].mxu0
      %v3812 = vadd.f32 %v3107, %v3811
      %v3813 = vpop.f32.mrb[0].mxu0
      %3814 = vmatprep.mubr.f32.mxu0 0.0
      %3815 = vmatmul.mubr.f32.gmra.mrb[0].mxu0 %v1186
      %v3816 = vpop.f32.mrb[0].mxu0
      %v3817 = vadd.f32 %v3112, %v3816
      %v3818 = vpop.f32.mrb[0].mxu0
      %3819 = vmatprep.mubr.f32.mxu0 0.0
      %3820 = vmatmul.mubr.f32.gmra.mrb[0].mxu0 %v1189
      %v3821 = vpop.f32.mrb[0].mxu0
      %v3822 = vadd.f32 %v3117, %v3821
      %v3823 = vpop.f32.mrb[0].mxu0
      %3824 = vmatprep.mubr.f32.mxu0 0.0
      %3825 = vmatmul.mubr.f32.gmra.mrb[0].mxu0 %v1192
      %v3826 = vpop.f32.mrb[0].mxu0
      %v3827 = vadd.f32 %v3122, %v3826
      %v3828 = vpop.f32.mrb[0].mxu0
      %3829 = vmatprep.mubr.f32.mxu0 0.0
      %3830 = vmatmul.mubr.f32.gmra.mrb[0].mxu0 %v1195
      %v3831 = vpop.f32.mrb[0].mxu0
      %v3832 = vadd.f32 %v3127, %v3831
      %v3833 = vpop.f32.mrb[0].mxu0
      %3834 = vmatprep.mubr.f32.mxu0 0.0
      %3835 = vmatmul.mubr.f32.gmra.mrb[0].mxu0 %v1198
      %v3836 = vpop.f32.mrb[0].mxu0
      %v3837 = vadd.f32 %v3132, %v3836
      %v3838 = vpop.f32.mrb[0].mxu0
      %3839 = vmatprep.mubr.f32.mxu0 0.0
      %3840 = vmatmul.mubr.f32.gmra.mrb[0].mxu0 %v1201
      %v3841 = vpop.f32.mrb[0].mxu0
      %v3842 = vadd.f32 %v3137, %v3841
      %v3843 = vpop.f32.mrb[0].mxu0
      %3844 = vmatprep.mubr.f32.mxu0 0.0
      %3845 = vmatmul.mubr.f32.gmra.mrb[0].mxu0 %v1204
      %v3846 = vpop.f32.mrb[0].mxu0
      %v3847 = vadd.f32 %v3142, %v3846
      %v3848 = vpop.f32.mrb[0].mxu0
      %3849 = vmatprep.mubr.f32.mxu0 0.0
      %3850 = vmatmul.mubr.f32.gmra.mrb[0].mxu0 %v1207
      %v3851 = vpop.f32.mrb[0].mxu0
      %v3852 = vadd.f32 %v3147, %v3851
      %v3853 = vpop.f32.mrb[0].mxu0
      %3854 = vmatprep.mubr.f32.mxu0 0.0
      %3855 = vmatmul.mubr.f32.gmra.mrb[0].mxu0 %v1210
      %v3856 = vpop.f32.mrb[0].mxu0
      %v3857 = vadd.f32 %v3152, %v3856
      %v3858 = vpop.f32.mrb[0].mxu0
      %3859 = vmatprep.mubr.f32.mxu0 0.0
      %3860 = vmatmul.mubr.f32.gmra.mrb[0].mxu0 %v1213
      %v3861 = vpop.f32.mrb[0].mxu0
      %v3862 = vadd.f32 %v3157, %v3861
      %v3863 = vpop.f32.mrb[0].mxu0
      %3864 = vmatprep.mubr.f32.mxu0 0.0
      %3865 = vmatmul.mubr.f32.gmra.mrb[0].mxu0 %v1216
      %v3866 = vpop.f32.mrb[0].mxu0
      %v3867 = vadd.f32 %v3162, %v3866
      %v3868 = vpop.f32.mrb[0].mxu0
      %3869 = vmatprep.mubr.f32.mxu0 0.0
      %3870 = vmatmul.mubr.f32.gmra.mrb[0].mxu0 %v1219
      %v3871 = vpop.f32.mrb[0].mxu0
      %v3872 = vadd.f32 %v3167, %v3871
      %v3873 = vpop.f32.mrb[0].mxu0
      %3874 = vmatprep.mubr.f32.mxu0 0.0
      %3875 = vmatmul.mubr.f32.gmra.mrb[0].mxu0 %v1222
      %v3876 = vpop.f32.mrb[0].mxu0
      %v3877 = vadd.f32 %v3172, %v3876
      %v3878 = vpop.f32.mrb[0].mxu0
      %3879 = vmatprep.mubr.f32.mxu0 0.0
      %3880 = vmatmul.mubr.f32.gmra.mrb[0].mxu0 %v1225
      %v3881 = vpop.f32.mrb[0].mxu0
      %v3882 = vadd.f32 %v3177, %v3881
      %v3883 = vpop.f32.mrb[0].mxu0
      %3884 = vmatprep.mubr.f32.mxu0 0.0
      %3885 = vmatmul.mubr.f32.gmra.mrb[0].mxu0 %v1228
      %v3886 = vpop.f32.mrb[0].mxu0
      %v3887 = vadd.f32 %v3182, %v3886
      %v3888 = vpop.f32.mrb[0].mxu0
      %3889 = vmatprep.mubr.f32.mxu0 0.0
      %3890 = vmatmul.mubr.f32.gmra.mrb[0].mxu0 %v1231
      %v3891 = vpop.f32.mrb[0].mxu0
      %v3892 = vadd.f32 %v3187, %v3891
      %v3893 = vpop.f32.mrb[0].mxu0
      %3894 = vmatprep.mubr.f32.mxu0 0.0
      %3895 = vmatmul.mubr.f32.gmra.mrb[0].mxu0 %v1234
      %v3896 = vpop.f32.mrb[0].mxu0
      %v3897 = vadd.f32 %v3192, %v3896
      %v3898 = vpop.f32.mrb[0].mxu0
      %3899 = vmatprep.mubr.f32.mxu0 0.0
      %3900 = vmatmul.mubr.f32.gmra.mrb[0].mxu0 %v1237
      %v3901 = vpop.f32.mrb[0].mxu0
      %v3902 = vadd.f32 %v3197, %v3901
      %v3903 = vpop.f32.mrb[0].mxu0
      %3904 = vmatprep.mubr.f32.mxu0 0.0
      %3905 = vmatmul.mubr.f32.gmra.mrb[0].mxu0 %v1240
      %v3906 = vpop.f32.mrb[0].mxu0
      %v3907 = vadd.f32 %v3202, %v3906
      %v3908 = vpop.f32.mrb[0].mxu0
      %3909 = vmatprep.mubr.f32.mxu0 0.0
      %3910 = vmatmul.mubr.f32.gmra.mrb[0].mxu0 %v1243
      %v3911 = vpop.f32.mrb[0].mxu0
      %v3912 = vadd.f32 %v3207, %v3911
      %v3913 = vpop.f32.mrb[0].mxu0
      %3914 = vmatprep.mubr.f32.mxu0 0.0
      %3915 = vmatmul.mubr.f32.gmra.mrb[0].mxu0 %v1246
      %v3916 = vpop.f32.mrb[0].mxu0
      %v3917 = vadd.f32 %v3212, %v3916
      %v3918 = vpop.f32.mrb[0].mxu0
      %3919 = vmatprep.mubr.f32.mxu0 0.0
      %3920 = vmatmul.mubr.f32.gmra.mrb[0].mxu0 %v1249
      %v3921 = vpop.f32.mrb[0].mxu0
      %v3922 = vadd.f32 %v3217, %v3921
      %v3923 = vpop.f32.mrb[0].mxu0
      %3924 = vmatprep.mubr.f32.mxu0 0.0
      %3925 = vmatmul.mubr.f32.gmra.mrb[0].mxu0 %v1252
      %v3926 = vpop.f32.mrb[0].mxu0
      %v3927 = vadd.f32 %v3222, %v3926
      %v3928 = vpop.f32.mrb[0].mxu0
      %3929 = vmatprep.mubr.f32.mxu0 0.0
      %3930 = vmatmul.mubr.f32.gmra.mrb[0].mxu0 %v1255
      %v3931 = vpop.f32.mrb[0].mxu0
      %v3932 = vadd.f32 %v3227, %v3931
      %v3933 = vpop.f32.mrb[0].mxu0
      %3934 = vmatprep.mubr.f32.mxu0 0.0
      %3935 = vmatmul.mubr.f32.gmra.mrb[0].mxu0 %v1258
      %v3936 = vpop.f32.mrb[0].mxu0
      %v3937 = vadd.f32 %v3232, %v3936
      %v3938 = vpop.f32.mrb[0].mxu0
      %3939 = vmatprep.mubr.f32.mxu0 0.0
      %3940 = vmatmul.mubr.f32.gmra.mrb[0].mxu0 %v1261
      %v3941 = vpop.f32.mrb[0].mxu0
      %v3942 = vadd.f32 %v3237, %v3941
      %v3943 = vpop.f32.mrb[0].mxu0
      %3944 = vmatprep.mubr.f32.mxu0 0.0
      %3945 = vmatmul.mubr.f32.gmra.mrb[0].mxu0 %v1264
      %v3946 = vpop.f32.mrb[0].mxu0
      %v3947 = vadd.f32 %v3242, %v3946
      %v3948 = vpop.f32.mrb[0].mxu0
      %3949 = vmatprep.mubr.f32.mxu0 0.0
      %3950 = vmatmul.mubr.f32.gmra.mrb[0].mxu0 %v1267
      %v3951 = vpop.f32.mrb[0].mxu0
      %v3952 = vadd.f32 %v3247, %v3951
      %v3953 = vpop.f32.mrb[0].mxu0
      %3954 = vmatprep.mubr.f32.mxu0 0.0
      %3955 = vmatmul.mubr.f32.gmra.mrb[0].mxu0 %v1270
      %v3956 = vpop.f32.mrb[0].mxu0
      %v3957 = vadd.f32 %v3252, %v3956
      %v3958 = vpop.f32.mrb[0].mxu0
      %3959 = vmatprep.mubr.f32.mxu0 0.0
      %3960 = vmatmul.mubr.f32.gmra.mrb[0].mxu0 %v1273
      %v3961 = vpop.f32.mrb[0].mxu0
      %v3962 = vadd.f32 %v3257, %v3961
      %v3963 = vpop.f32.mrb[0].mxu0
      %3964 = vmatprep.mubr.f32.mxu0 0.0
      %3965 = vmatmul.mubr.f32.gmra.mrb[0].mxu0 %v1276
      %v3966 = vpop.f32.mrb[0].mxu0
      %v3967 = vadd.f32 %v3262, %v3966
      %v3968 = vpop.f32.mrb[0].mxu0
      %3969 = vmatprep.mubr.f32.mxu0 0.0
      %3970 = vmatmul.mubr.f32.gmra.mrb[0].mxu0 %v1279
      %v3971 = vpop.f32.mrb[0].mxu0
      %v3972 = vadd.f32 %v3267, %v3971
      %v3973 = vpop.f32.mrb[0].mxu0
      %3974 = vmatprep.mubr.f32.mxu0 0.0
      %3975 = vmatmul.mubr.f32.gmra.mrb[0].mxu0 %v1282
      %v3976 = vpop.f32.mrb[0].mxu0
      %v3977 = vadd.f32 %v3272, %v3976
      %v3978 = vpop.f32.mrb[0].mxu0
      %3979 = vmatprep.mubr.f32.mxu0 0.0
      %3980 = vmatmul.mubr.f32.gmra.mrb[0].mxu0 %v1285
      %v3981 = vpop.f32.mrb[0].mxu0
      %v3982 = vadd.f32 %v3277, %v3981
      %v3983 = vpop.f32.mrb[0].mxu0
      %3984 = vmatprep.mubr.f32.mxu0 0.0
      %3985 = vmatmul.mubr.f32.gmra.mrb[0].mxu0 %v1288
      %v3986 = vpop.f32.mrb[0].mxu0
      %v3987 = vadd.f32 %v3282, %v3986
      %v3988 = vpop.f32.mrb[0].mxu0
      %3989 = vmatprep.mubr.f32.mxu0 0.0
      %3990 = vmatmul.mubr.f32.gmra.mrb[0].mxu0 %v1291
      %v3991 = vpop.f32.mrb[0].mxu0
      %v3992 = vadd.f32 %v3287, %v3991
      %v3993 = vpop.f32.mrb[0].mxu0
      %3994 = vmatprep.mubr.f32.mxu0 0.0
      %3995 = vmatmul.mubr.f32.gmra.mrb[0].mxu0 %v1294
      %v3996 = vpop.f32.mrb[0].mxu0
      %v3997 = vadd.f32 %v3292, %v3996
      %v3998 = vpop.f32.mrb[0].mxu0
      %3999 = vmatprep.mubr.f32.mxu0 0.0
      %4000 = vmatmul.mubr.f32.gmra.mrb[0].mxu0 %v1297
      %v4001 = vpop.f32.mrb[0].mxu0
      %v4002 = vadd.f32 %v3297, %v4001
      %v4003 = vpop.f32.mrb[0].mxu0
      %4004 = vmatprep.mubr.f32.mxu0 0.0
      %4005 = vmatmul.mubr.f32.gmra.mrb[0].mxu0 %v1300
      %v4006 = vpop.f32.mrb[0].mxu0
      %v4007 = vadd.f32 %v3302, %v4006
      %v4008 = vpop.f32.mrb[0].mxu0
      %4009 = vmatprep.mubr.f32.mxu0 0.0
      %4010 = vmatmul.mubr.f32.gmra.mrb[0].mxu0 %v1303
      %v4011 = vpop.f32.mrb[0].mxu0
      %v4012 = vadd.f32 %v3307, %v4011
      %v4013 = vpop.f32.mrb[0].mxu0
      %4014 = vmatprep.mubr.f32.mxu0 0.0
      %4015 = vmatmul.mubr.f32.gmra.mrb[0].mxu0 %v1306
      %v4016 = vpop.f32.mrb[0].mxu0
      %v4017 = vadd.f32 %v3312, %v4016
      %v4018 = vpop.f32.mrb[0].mxu0
      %4019 = vmatprep.mubr.f32.mxu0 0.0
      %4020 = vmatmul.mubr.f32.gmra.mrb[0].mxu0 %v1309
      %v4021 = vpop.f32.mrb[0].mxu0
      %v4022 = vadd.f32 %v3317, %v4021
      %v4023 = vpop.f32.mrb[0].mxu0
      %4024 = vmatprep.mubr.f32.mxu0 0.0
      %4025 = vmatmul.mubr.f32.gmra.mrb[0].mxu0 %v1312
      %v4026 = vpop.f32.mrb[0].mxu0
      %v4027 = vadd.f32 %v3322, %v4026
      %v4028 = vpop.f32.mrb[0].mxu0
      %4029 = vmatprep.mubr.f32.mxu0 0.0
      %4030 = vmatmul.mubr.f32.gmra.mrb[0].mxu0 %v1315
      %v4031 = vpop.f32.mrb[0].mxu0
      %v4032 = vadd.f32 %v3327, %v4031
      %v4033 = vpop.f32.mrb[0].mxu0
      %4034 = vmatprep.mubr.f32.mxu0 0.0
      %4035 = vmatmul.mubr.f32.gmra.mrb[0].mxu0 %v1318
      %v4036 = vpop.f32.mrb[0].mxu0
      %v4037 = vadd.f32 %v3332, %v4036
      %v4038 = vpop.f32.mrb[0].mxu0
      %4039 = vmatprep.mubr.f32.mxu0 0.0
      %4040 = vmatmul.mubr.f32.gmra.mrb[0].mxu0 %v1321
      %v4041 = vpop.f32.mrb[0].mxu0
      %v4042 = vadd.f32 %v3337, %v4041
      %v4043 = vpop.f32.mrb[0].mxu0
      %4044 = vmatprep.mubr.f32.mxu0 0.0
      %4045 = vmatmul.mubr.f32.gmra.mrb[0].mxu0 %v1324
      %v4046 = vpop.f32.mrb[0].mxu0
      %v4047 = vadd.f32 %v3342, %v4046
      %v4048 = vpop.f32.mrb[0].mxu0
      %4049 = vmatprep.mubr.f32.mxu0 0.0
      %4050 = vmatmul.mubr.f32.gmra.mrb[0].mxu0 %v1327
      %v4051 = vpop.f32.mrb[0].mxu0
      %v4052 = vadd.f32 %v3347, %v4051
      %v4053 = vpop.f32.mrb[0].mxu0
      %4054 = vmatprep.mubr.f32.mxu0 0.0
      %4055 = vmatmul.mubr.f32.gmra.mrb[0].mxu0 %v1330
      %v4056 = vpop.f32.mrb[0].mxu0
      %v4057 = vadd.f32 %v3352, %v4056
      %v4058 = vpop.f32.mrb[0].mxu0
      %4059 = vmatprep.mubr.f32.mxu0 0.0
      %4060 = vmatmul.mubr.f32.gmra.mrb[0].mxu0 %v1333
      %v4061 = vpop.f32.mrb[0].mxu0
      %v4062 = vadd.f32 %v3357, %v4061
      %v4063 = vpop.f32.mrb[0].mxu0
      %4064 = vmatprep.mubr.f32.mxu0 0.0
      %4065 = vmatmul.mubr.f32.gmra.mrb[0].mxu0 %v1336
      %v4066 = vpop.f32.mrb[0].mxu0
      %v4067 = vadd.f32 %v3362, %v4066
      %v4068 = vpop.f32.mrb[0].mxu0
      %4069 = vmatprep.mubr.f32.mxu0 0.0
      %4070 = vmatmul.mubr.f32.gmra.mrb[0].mxu0 %v1339
      %v4071 = vpop.f32.mrb[0].mxu0
      %v4072 = vadd.f32 %v3367, %v4071
      %v4073 = vpop.f32.mrb[0].mxu0
      %4074 = vmatprep.mubr.f32.mxu0 0.0
      %4075 = vmatmul.mubr.f32.gmra.mrb[0].mxu0 %v1342
      %v4076 = vpop.f32.mrb[0].mxu0
      %v4077 = vadd.f32 %v3372, %v4076
      %v4078 = vpop.f32.mrb[0].mxu0
      %4079 = vmatprep.mubr.f32.mxu0 0.0
      %4080 = vmatmul.mubr.f32.gmra.mrb[0].mxu0 %v1345
      %v4081 = vpop.f32.mrb[0].mxu0
      %v4082 = vadd.f32 %v3377, %v4081
      %v4083 = vpop.f32.mrb[0].mxu0
      %4084 = vmatprep.mubr.f32.mxu0 0.0
      %4085 = vmatmul.mubr.f32.gmra.mrb[0].mxu0 %v1348
      %v4086 = vpop.f32.mrb[0].mxu0
      %v4087 = vadd.f32 %v3382, %v4086
      %v4088 = vpop.f32.mrb[0].mxu0
      %4089 = vmatprep.mubr.f32.mxu0 0.0
      %4090 = vmatmul.mubr.f32.gmra.mrb[0].mxu0 %v1351
      %v4091 = vpop.f32.mrb[0].mxu0
      %v4092 = vadd.f32 %v3387, %v4091
      %v4093 = vpop.f32.mrb[0].mxu0
      %4094 = vmatprep.mubr.f32.mxu0 0.0
      %4095 = vmatmul.mubr.f32.gmra.mrb[0].mxu0 %v1354
      %v4096 = vpop.f32.mrb[0].mxu0
      %v4097 = vadd.f32 %v3392, %v4096
      %v4098 = vpop.f32.mrb[0].mxu0
      %4099 = vmatprep.mubr.f32.mxu0 0.0
      %4100 = vmatmul.mubr.f32.gmra.mrb[0].mxu0 %v1357
      %v4101 = vpop.f32.mrb[0].mxu0
      %v4102 = vadd.f32 %v3397, %v4101
      %v4103 = vpop.f32.mrb[0].mxu0
      %4104 = vmatprep.mubr.f32.mxu0 0.0
      %4105 = vmatmul.mubr.f32.gmra.mrb[0].mxu0 %v1360
      %v4106 = vpop.f32.mrb[0].mxu0
      %v4107 = vadd.f32 %v3402, %v4106
      %v4108 = vpop.f32.mrb[0].mxu0
      %4109 = vmatprep.mubr.f32.mxu0 0.0
      %4110 = vmatmul.mubr.f32.gmra.mrb[0].mxu0 %v1363
      %v4111 = vpop.f32.mrb[0].mxu0
      %v4112 = vadd.f32 %v3407, %v4111
      %v4113 = vpop.f32.mrb[0].mxu0
      %4114 = vmatprep.mubr.f32.mxu0 0.0
      %4115 = vmatmul.mubr.f32.gmra.mrb[0].mxu0 %v1366
      %v4116 = vpop.f32.mrb[0].mxu0
      %v4117 = vadd.f32 %v3412, %v4116
      %v4118 = vpop.f32.mrb[0].mxu0
      %4119 = vmatprep.mubr.f32.mxu0 0.0
      %4120 = vmatmul.mubr.f32.gmra.mrb[0].mxu0 %v1369
      %v4121 = vpop.f32.mrb[0].mxu0
      %v4122 = vadd.f32 %v3417, %v4121
      %v4123 = vpop.f32.mrb[0].mxu0
      %4124 = vmatprep.mubr.f32.mxu0 0.0
      %4125 = vmatmul.mubr.f32.gmra.mrb[0].mxu0 %v1372
      %v4126 = vpop.f32.mrb[0].mxu0
      %v4127 = vadd.f32 %v3422, %v4126
      %v4128 = vpop.f32.mrb[0].mxu0
      %4129 = vmatprep.mubr.f32.mxu0 0.0
      %4130 = vmatmul.mubr.f32.gmra.mrb[0].mxu0 %v1375
      %v4131 = vpop.f32.mrb[0].mxu0
      %v4132 = vadd.f32 %v3427, %v4131
      %v4133 = vpop.f32.mrb[0].mxu0
      %4134 = vmatprep.mubr.f32.mxu0 0.0
      %4135 = vmatmul.mubr.f32.gmra.mrb[0].mxu0 %v1378
      %v4136 = vpop.f32.mrb[0].mxu0
      %v4137 = vadd.f32 %v3432, %v4136
      %v4138 = vpop.f32.mrb[0].mxu0
      %4139 = vmatprep.mubr.f32.mxu0 0.0
      %4140 = vmatmul.mubr.f32.gmra.mrb[0].mxu0 %v1381
      %v4141 = vpop.f32.mrb[0].mxu0
      %v4142 = vadd.f32 %v3437, %v4141
      %v4143 = vpop.f32.mrb[0].mxu0
      %4144 = vmatprep.mubr.f32.mxu0 0.0
      %4145 = vmatmul.mubr.f32.gmra.mrb[0].mxu0 %v1384
      %v4146 = vpop.f32.mrb[0].mxu0
      %v4147 = vadd.f32 %v3442, %v4146
      %v4148 = vpop.f32.mrb[0].mxu0
      %4149 = vmatprep.mubr.f32.mxu0 0.0
      %4150 = vmatmul.mubr.f32.gmra.mrb[0].mxu0 %v1387
      %v4151 = vpop.f32.mrb[0].mxu0
      %v4152 = vadd.f32 %v3447, %v4151
      %v4153 = vpop.f32.mrb[0].mxu0
      %4154 = vmatprep.mubr.f32.mxu0 0.0
      %4155 = vmatmul.mubr.f32.gmra.mrb[0].mxu0 %v1390
      %v4156 = vpop.f32.mrb[0].mxu0
      %v4157 = vadd.f32 %v3452, %v4156
      %v4158 = vpop.f32.mrb[0].mxu0
      %4159 = vmatprep.mubr.f32.mxu0 0.0
      %4160 = vmatmul.mubr.f32.gmra.mrb[0].mxu0 %v1393
      %v4161 = vpop.f32.mrb[0].mxu0
      %v4162 = vadd.f32 %v3457, %v4161
      %v4163 = vpop.f32.mrb[0].mxu0
      %4164 = vmatprep.mubr.f32.mxu0 0.0
      %4165 = vmatmul.mubr.f32.gmra.mrb[0].mxu0 %v1396
      %v4166 = vpop.f32.mrb[0].mxu0
      %v4167 = vadd.f32 %v3462, %v4166
      %v4168 = vpop.f32.mrb[0].mxu0
      %4169 = vmatprep.mubr.f32.mxu0 0.0
      %4170 = vmatmul.mubr.f32.gmra.mrb[0].mxu0 %v1399
      %v4171 = vpop.f32.mrb[0].mxu0
      %v4172 = vadd.f32 %v3467, %v4171
      %v4173 = vpop.f32.mrb[0].mxu0
      %4174 = vmatprep.mubr.f32.mxu0 0.0
      %4175 = vmatmul.mubr.f32.gmra.mrb[0].mxu0 %v1402
      %v4176 = vpop.f32.mrb[0].mxu0
      %v4177 = vadd.f32 %v3472, %v4176
      %v4178 = vpop.f32.mrb[0].mxu0
      %4179 = vmatprep.mubr.f32.mxu0 0.0
      %4180 = vmatmul.mubr.f32.gmra.mrb[0].mxu0 %v1405
      %v4181 = vpop.f32.mrb[0].mxu0
      %v4182 = vadd.f32 %v3477, %v4181
      %v4183 = vpop.f32.mrb[0].mxu0
      %4184 = vmatprep.mubr.f32.mxu0 0.0
      %4185 = vmatmul.mubr.f32.gmra.mrb[0].mxu0 %v1408
      %v4186 = vpop.f32.mrb[0].mxu0
      %v4187 = vadd.f32 %v3482, %v4186
      %v4188 = vpop.f32.mrb[0].mxu0
      %4189 = vmatprep.mubr.f32.mxu0 0.0
      %4190 = vmatmul.mubr.f32.gmra.mrb[0].mxu0 %v1411
      %v4191 = vpop.f32.mrb[0].mxu0
      %v4192 = vadd.f32 %v3487, %v4191
      %v4193 = vpop.f32.mrb[0].mxu0
      %4194 = vmatprep.mubr.f32.mxu0 0.0
      %4195 = vmatmul.mubr.f32.gmra.mrb[0].mxu0 %v1414
      %v4196 = vpop.f32.mrb[0].mxu0
      %v4197 = vadd.f32 %v3492, %v4196
      %v4198 = vpop.f32.mrb[0].mxu0
      %4199 = vmatprep.mubr.f32.mxu0 0.0
      %4200 = vmatmul.mubr.f32.gmra.mrb[0].mxu0 %v1417
      %v4201 = vpop.f32.mrb[0].mxu0
      %v4202 = vadd.f32 %v3497, %v4201
      %v4203 = vpop.f32.mrb[0].mxu0
      %4204 = vmatprep.mubr.f32.mxu0 0.0
      %4205 = vmatmul.mubr.f32.gmra.mrb[0].mxu0 %v1420
      %v4206 = vpop.f32.mrb[0].mxu0
      %v4207 = vadd.f32 %v3502, %v4206
      %v4208 = vpop.f32.mrb[0].mxu0
      %4209 = vmatprep.mubr.f32.mxu0 0.0
      %4210 = vmatmul.mubr.f32.gmra.mrb[0].mxu0 %v1423
      %v4211 = vpop.f32.mrb[0].mxu0
      %v4212 = vadd.f32 %v3507, %v4211
      %v4213 = vpop.f32.mrb[0].mxu0
      %4214 = vmatprep.mubr.f32.mxu0 0.0
      %4215 = vmatmul.mubr.f32.gmra.mrb[0].mxu0 %v1426
      %v4216 = vpop.f32.mrb[0].mxu0
      %v4217 = vadd.f32 %v3512, %v4216
      %v4218 = vpop.f32.mrb[0].mxu0
      %4219 = vmatprep.mubr.f32.mxu0 0.0
      %4220 = vmatmul.mubr.f32.gmra.mrb[0].mxu0 %v1429
      %v4221 = vpop.f32.mrb[0].mxu0
      %v4222 = vadd.f32 %v3517, %v4221
      %v4223 = vpop.f32.mrb[0].mxu0
      %4224 = vmatprep.mubr.f32.mxu0 0.0
      %4225 = vmatmul.mubr.f32.gmra.mrb[0].mxu0 %v1432
      %v4226 = vpop.f32.mrb[0].mxu0
      %v4227 = vadd.f32 %v3522, %v4226
      %v4228 = vpop.f32.mrb[0].mxu0
      %4229 = vmatprep.mubr.f32.mxu0 0.0
      %4230 = vmatmul.mubr.f32.gmra.mrb[0].mxu0 %v1435
      %v4231 = vpop.f32.mrb[0].mxu0
      %v4232 = vadd.f32 %v3527, %v4231
      %v4233 = vpop.f32.mrb[0].mxu0
      %4234 = vmatprep.mubr.f32.mxu0 0.0
      %4235 = vmatmul.mubr.f32.gmra.mrb[0].mxu0 %v1438
      %v4236 = vpop.f32.mrb[0].mxu0
      %v4237 = vadd.f32 %v3532, %v4236
      %v4238 = vpop.f32.mrb[0].mxu0
      %4239 = vmatprep.mubr.f32.mxu0 0.0
      %4240 = vmatmul.mubr.f32.gmra.mrb[0].mxu0 %v1441
      %v4241 = vpop.f32.mrb[0].mxu0
      %v4242 = vadd.f32 %v3537, %v4241
      %v4243 = vpop.f32.mrb[0].mxu0
      %4244 = vmatprep.mubr.f32.mxu0 0.0
      %4245 = vmatmul.mubr.f32.gmra.mrb[0].mxu0 %v1444
      %v4246 = vpop.f32.mrb[0].mxu0
      %v4247 = vadd.f32 %v3542, %v4246
      %v4248 = vpop.f32.mrb[0].mxu0
      %4249 = vmatprep.mubr.f32.mxu0 0.0
      %4250 = vmatmul.mubr.f32.gmra.mrb[0].mxu0 %v1447
      %v4251 = vpop.f32.mrb[0].mxu0
      %v4252 = vadd.f32 %v3547, %v4251
      %v4253 = vpop.f32.mrb[0].mxu0
      %4254 = vmatprep.mubr.f32.mxu0 0.0
      %4255 = vmatmul.mubr.f32.gmra.mrb[0].mxu0 %v1450
      %v4256 = vpop.f32.mrb[0].mxu0
      %v4257 = vadd.f32 %v3552, %v4256
      %v4258 = vpop.f32.mrb[0].mxu0
      %4259 = vmatprep.mubr.f32.mxu0 0.0
      %4260 = vmatmul.mubr.f32.gmra.mrb[0].mxu0 %v1453
      %v4261 = vpop.f32.mrb[0].mxu0
      %v4262 = vadd.f32 %v3557, %v4261
      %v4263 = vpop.f32.mrb[0].mxu0
      %4264 = vmatprep.mubr.f32.mxu0 0.0
      %4265 = vmatmul.mubr.f32.gmra.mrb[0].mxu0 %v1456
      %v4266 = vpop.f32.mrb[0].mxu0
      %v4267 = vadd.f32 %v3562, %v4266
      %v4268 = vpop.f32.mrb[0].mxu0
      %4269 = vmatprep.mubr.f32.mxu0 0.0
      %4270 = vmatmul.mubr.f32.gmra.mrb[0].mxu0 %v1459
      %v4271 = vpop.f32.mrb[0].mxu0
      %v4272 = vadd.f32 %v3567, %v4271
      %v4273 = vpop.f32.mrb[0].mxu0
      %4274 = vmatprep.mubr.f32.mxu0 0.0
      %4275 = vmatmul.mubr.f32.gmra.mrb[0].mxu0 %v1462
      %v4276 = vpop.f32.mrb[0].mxu0
      %v4277 = vadd.f32 %v3572, %v4276
      %v4278 = vpop.f32.mrb[0].mxu0
      %4279 = vmatprep.mubr.f32.mxu0 0.0
      %4280 = vmatmul.mubr.f32.gmra.mrb[0].mxu0 %v1465
      %v4281 = vpop.f32.mrb[0].mxu0
      %v4282 = vadd.f32 %v3577, %v4281
      %v4283 = vpop.f32.mrb[0].mxu0
      %4284 = vmatprep.mubr.f32.mxu0 0.0
      %4285 = vmatmul.mubr.f32.gmra.mrb[0].mxu0 %v1468
      %v4286 = vpop.f32.mrb[0].mxu0
      %v4287 = vadd.f32 %v3582, %v4286
      %v4288 = vpop.f32.mrb[0].mxu0
      %4289 = vmatprep.mubr.f32.mxu0 0.0
      %4290 = vmatmul.mubr.f32.gmra.mrb[0].mxu0 %v1471
      %v4291 = vpop.f32.mrb[0].mxu0
      %v4292 = vadd.f32 %v3587, %v4291
      %v4293 = vpop.f32.mrb[0].mxu0
      %4294 = vmatprep.mubr.f32.mxu0 0.0
      %4295 = vmatmul.mubr.f32.gmra.mrb[0].mxu0 %v1474
      %v4296 = vpop.f32.mrb[0].mxu0
      %v4297 = vadd.f32 %v3592, %v4296
      %v4298 = vpop.f32.mrb[0].mxu0
      %4299 = vmatprep.mubr.f32.mxu0 0.0
      %4300 = vmatmul.mubr.f32.gmra.mrb[0].mxu0 %v1477
      %v4301 = vpop.f32.mrb[0].mxu0
      %v4302 = vadd.f32 %v3597, %v4301
      %v4303 = vpop.f32.mrb[0].mxu0
      %4304 = vdwg.mxu0
      %vm4305 = vcmask 80896
      %4306 = vst.msk [vmem:[%s175] sm:$0xff] %vm4305, %v3667
      %4307 = vst.msk [vmem:[%s175 + $0x8] sm:$0xff] %vm4305, %v3672
      %4308 = vst.msk [vmem:[%s175 + $0x10] sm:$0xff] %vm4305, %v3677
      %4309 = vst.msk [vmem:[%s175 + $0x18] sm:$0xff] %vm4305, %v3682
      %4310 = vst.msk [vmem:[%s175 + $0x20] sm:$0xff] %vm4305, %v3687
      %4311 = vst.msk [vmem:[%s175 + $0x28] sm:$0xff] %vm4305, %v3692
      %4312 = vst.msk [vmem:[%s175 + $0x30] sm:$0xff] %vm4305, %v3697
      %4313 = vst.msk [vmem:[%s175 + $0x38] sm:$0xff] %vm4305, %v3702
      %4314 = vst.msk [vmem:[%s175 + $0x40] sm:$0xff] %vm4305, %v3707
      %4315 = vst.msk [vmem:[%s175 + $0x48] sm:$0xff] %vm4305, %v3712
      %4316 = vst.msk [vmem:[%s175 + $0x50] sm:$0xff] %vm4305, %v3717
      %4317 = vst.msk [vmem:[%s175 + $0x58] sm:$0xff] %vm4305, %v3722
      %4318 = vst.msk [vmem:[%s175 + $0x60] sm:$0xff] %vm4305, %v3727
      %4319 = vst.msk [vmem:[%s175 + $0x68] sm:$0xff] %vm4305, %v3732
      %4320 = vst.msk [vmem:[%s175 + $0x70] sm:$0xff] %vm4305, %v3737
      %4321 = vst.msk [vmem:[%s175 + $0x78] sm:$0xff] %vm4305, %v3742
      %4322 = vst.msk [vmem:[%s175 + $0x80] sm:$0xff] %vm4305, %v3747
      %4323 = vst.msk [vmem:[%s175 + $0x88] sm:$0xff] %vm4305, %v3752
      %4324 = vst.msk [vmem:[%s175 + $0x90] sm:$0xff] %vm4305, %v3757
      %4325 = vst.msk [vmem:[%s175 + $0x98] sm:$0xff] %vm4305, %v3762
      %4326 = vst.msk [vmem:[%s175 + $0xa0] sm:$0xff] %vm4305, %v3767
      %4327 = vst.msk [vmem:[%s175 + $0xa8] sm:$0xff] %vm4305, %v3772
      %4328 = vst.msk [vmem:[%s175 + $0xb0] sm:$0xff] %vm4305, %v3777
      %4329 = vst.msk [vmem:[%s175 + $0xb8] sm:$0xff] %vm4305, %v3782
      %4330 = vst.msk [vmem:[%s175 + $0xc0] sm:$0xff] %vm4305, %v3787
      %4331 = vst.msk [vmem:[%s175 + $0xc8] sm:$0xff] %vm4305, %v3792
      %4332 = vst.msk [vmem:[%s175 + $0xd0] sm:$0xff] %vm4305, %v3797
      %4333 = vst.msk [vmem:[%s175 + $0xd8] sm:$0xff] %vm4305, %v3802
      %4334 = vst.msk [vmem:[%s175 + $0xe0] sm:$0xff] %vm4305, %v3807
      %4335 = vst.msk [vmem:[%s175 + $0xe8] sm:$0xff] %vm4305, %v3812
      %4336 = vst.msk [vmem:[%s175 + $0xf0] sm:$0xff] %vm4305, %v3817
      %4337 = vst.msk [vmem:[%s175 + $0xf8] sm:$0xff] %vm4305, %v3822
      %4338 = vst.msk [vmem:[%s175 + $0x100] sm:$0xff] %vm4305, %v3827
      %4339 = vst.msk [vmem:[%s175 + $0x108] sm:$0xff] %vm4305, %v3832
      %4340 = vst.msk [vmem:[%s175 + $0x110] sm:$0xff] %vm4305, %v3837
      %4341 = vst.msk [vmem:[%s175 + $0x118] sm:$0xff] %vm4305, %v3842
      %4342 = vst.msk [vmem:[%s175 + $0x120] sm:$0xff] %vm4305, %v3847
      %4343 = vst.msk [vmem:[%s175 + $0x128] sm:$0xff] %vm4305, %v3852
      %4344 = vst.msk [vmem:[%s175 + $0x130] sm:$0xff] %vm4305, %v3857
      %4345 = vst.msk [vmem:[%s175 + $0x138] sm:$0xff] %vm4305, %v3862
      %4346 = vst.msk [vmem:[%s175 + $0x140] sm:$0xff] %vm4305, %v3867
      %4347 = vst.msk [vmem:[%s175 + $0x148] sm:$0xff] %vm4305, %v3872
      %4348 = vst.msk [vmem:[%s175 + $0x150] sm:$0xff] %vm4305, %v3877
      %4349 = vst.msk [vmem:[%s175 + $0x158] sm:$0xff] %vm4305, %v3882
      %4350 = vst.msk [vmem:[%s175 + $0x160] sm:$0xff] %vm4305, %v3887
      %4351 = vst.msk [vmem:[%s175 + $0x168] sm:$0xff] %vm4305, %v3892
      %4352 = vst.msk [vmem:[%s175 + $0x170] sm:$0xff] %vm4305, %v3897
      %4353 = vst.msk [vmem:[%s175 + $0x178] sm:$0xff] %vm4305, %v3902
      %4354 = vst.msk [vmem:[%s175 + $0x180] sm:$0xff] %vm4305, %v3907
      %4355 = vst.msk [vmem:[%s175 + $0x188] sm:$0xff] %vm4305, %v3912
      %4356 = vst.msk [vmem:[%s175 + $0x190] sm:$0xff] %vm4305, %v3917
      %4357 = vst.msk [vmem:[%s175 + $0x198] sm:$0xff] %vm4305, %v3922
      %4358 = vst.msk [vmem:[%s175 + $0x1a0] sm:$0xff] %vm4305, %v3927
      %4359 = vst.msk [vmem:[%s175 + $0x1a8] sm:$0xff] %vm4305, %v3932
      %4360 = vst.msk [vmem:[%s175 + $0x1b0] sm:$0xff] %vm4305, %v3937
      %4361 = vst.msk [vmem:[%s175 + $0x1b8] sm:$0xff] %vm4305, %v3942
      %4362 = vst.msk [vmem:[%s175 + $0x1c0] sm:$0xff] %vm4305, %v3947
      %4363 = vst.msk [vmem:[%s175 + $0x1c8] sm:$0xff] %vm4305, %v3952
      %4364 = vst.msk [vmem:[%s175 + $0x1d0] sm:$0xff] %vm4305, %v3957
      %4365 = vst.msk [vmem:[%s175 + $0x1d8] sm:$0xff] %vm4305, %v3962
      %4366 = vst.msk [vmem:[%s175 + $0x1e0] sm:$0xff] %vm4305, %v3967
      %4367 = vst.msk [vmem:[%s175 + $0x1e8] sm:$0xff] %vm4305, %v3972
      %4368 = vst.msk [vmem:[%s175 + $0x1f0] sm:$0xff] %vm4305, %v3977
      %4369 = vst.msk [vmem:[%s175 + $0x1f8] sm:$0xff] %vm4305, %v3982
      %4370 = vst.msk [vmem:[%s175 + $0x200] sm:$0xff] %vm4305, %v3987
      %4371 = vst.msk [vmem:[%s175 + $0x208] sm:$0xff] %vm4305, %v3992
      %4372 = vst.msk [vmem:[%s175 + $0x210] sm:$0xff] %vm4305, %v3997
      %4373 = vst.msk [vmem:[%s175 + $0x218] sm:$0xff] %vm4305, %v4002
      %4374 = vst.msk [vmem:[%s175 + $0x220] sm:$0xff] %vm4305, %v4007
      %4375 = vst.msk [vmem:[%s175 + $0x228] sm:$0xff] %vm4305, %v4012
      %4376 = vst.msk [vmem:[%s175 + $0x230] sm:$0xff] %vm4305, %v4017
      %4377 = vst.msk [vmem:[%s175 + $0x238] sm:$0xff] %vm4305, %v4022
      %4378 = vst.msk [vmem:[%s175 + $0x240] sm:$0xff] %vm4305, %v4027
      %4379 = vst.msk [vmem:[%s175 + $0x248] sm:$0xff] %vm4305, %v4032
      %4380 = vst.msk [vmem:[%s175 + $0x250] sm:$0xff] %vm4305, %v4037
      %4381 = vst.msk [vmem:[%s175 + $0x258] sm:$0xff] %vm4305, %v4042
      %4382 = vst.msk [vmem:[%s175 + $0x260] sm:$0xff] %vm4305, %v4047
      %4383 = vst.msk [vmem:[%s175 + $0x268] sm:$0xff] %vm4305, %v4052
      %4384 = vst.msk [vmem:[%s175 + $0x270] sm:$0xff] %vm4305, %v4057
      %4385 = vst.msk [vmem:[%s175 + $0x278] sm:$0xff] %vm4305, %v4062
      %4386 = vst.msk [vmem:[%s175 + $0x280] sm:$0xff] %vm4305, %v4067
      %4387 = vst.msk [vmem:[%s175 + $0x288] sm:$0xff] %vm4305, %v4072
      %4388 = vst.msk [vmem:[%s175 + $0x290] sm:$0xff] %vm4305, %v4077
      %4389 = vst.msk [vmem:[%s175 + $0x298] sm:$0xff] %vm4305, %v4082
      %4390 = vst.msk [vmem:[%s175 + $0x2a0] sm:$0xff] %vm4305, %v4087
      %4391 = vst.msk [vmem:[%s175 + $0x2a8] sm:$0xff] %vm4305, %v4092
      %4392 = vst.msk [vmem:[%s175 + $0x2b0] sm:$0xff] %vm4305, %v4097
      %4393 = vst.msk [vmem:[%s175 + $0x2b8] sm:$0xff] %vm4305, %v4102
      %4394 = vst.msk [vmem:[%s175 + $0x2c0] sm:$0xff] %vm4305, %v4107
      %4395 = vst.msk [vmem:[%s175 + $0x2c8] sm:$0xff] %vm4305, %v4112
      %4396 = vst.msk [vmem:[%s175 + $0x2d0] sm:$0xff] %vm4305, %v4117
      %4397 = vst.msk [vmem:[%s175 + $0x2d8] sm:$0xff] %vm4305, %v4122
      %4398 = vst.msk [vmem:[%s175 + $0x2e0] sm:$0xff] %vm4305, %v4127
      %4399 = vst.msk [vmem:[%s175 + $0x2e8] sm:$0xff] %vm4305, %v4132
      %4400 = vst.msk [vmem:[%s175 + $0x2f0] sm:$0xff] %vm4305, %v4137
      %4401 = vst.msk [vmem:[%s175 + $0x2f8] sm:$0xff] %vm4305, %v4142
      %4402 = vst.msk [vmem:[%s175 + $0x300] sm:$0xff] %vm4305, %v4147
      %4403 = vst.msk [vmem:[%s175 + $0x308] sm:$0xff] %vm4305, %v4152
      %4404 = vst.msk [vmem:[%s175 + $0x310] sm:$0xff] %vm4305, %v4157
      %4405 = vst.msk [vmem:[%s175 + $0x318] sm:$0xff] %vm4305, %v4162
      %4406 = vst.msk [vmem:[%s175 + $0x320] sm:$0xff] %vm4305, %v4167
      %4407 = vst.msk [vmem:[%s175 + $0x328] sm:$0xff] %vm4305, %v4172
      %4408 = vst.msk [vmem:[%s175 + $0x330] sm:$0xff] %vm4305, %v4177
      %4409 = vst.msk [vmem:[%s175 + $0x338] sm:$0xff] %vm4305, %v4182
      %4410 = vst.msk [vmem:[%s175 + $0x340] sm:$0xff] %vm4305, %v4187
      %4411 = vst.msk [vmem:[%s175 + $0x348] sm:$0xff] %vm4305, %v4192
      %4412 = vst.msk [vmem:[%s175 + $0x350] sm:$0xff] %vm4305, %v4197
      %4413 = vst.msk [vmem:[%s175 + $0x358] sm:$0xff] %vm4305, %v4202
      %4414 = vst.msk [vmem:[%s175 + $0x360] sm:$0xff] %vm4305, %v4207
      %4415 = vst.msk [vmem:[%s175 + $0x368] sm:$0xff] %vm4305, %v4212
      %4416 = vst.msk [vmem:[%s175 + $0x370] sm:$0xff] %vm4305, %v4217
      %4417 = vst.msk [vmem:[%s175 + $0x378] sm:$0xff] %vm4305, %v4222
      %4418 = vst.msk [vmem:[%s175 + $0x380] sm:$0xff] %vm4305, %v4227
      %4419 = vst.msk [vmem:[%s175 + $0x388] sm:$0xff] %vm4305, %v4232
      %4420 = vst.msk [vmem:[%s175 + $0x390] sm:$0xff] %vm4305, %v4237
      %4421 = vst.msk [vmem:[%s175 + $0x398] sm:$0xff] %vm4305, %v4242
      %4422 = vst.msk [vmem:[%s175 + $0x3a0] sm:$0xff] %vm4305, %v4247
      %4423 = vst.msk [vmem:[%s175 + $0x3a8] sm:$0xff] %vm4305, %v4252
      %4424 = vst.msk [vmem:[%s175 + $0x3b0] sm:$0xff] %vm4305, %v4257
      %4425 = vst.msk [vmem:[%s175 + $0x3b8] sm:$0xff] %vm4305, %v4262
      %4426 = vst.msk [vmem:[%s175 + $0x3c0] sm:$0xff] %vm4305, %v4267
      %4427 = vst.msk [vmem:[%s175 + $0x3c8] sm:$0xff] %vm4305, %v4272
      %4428 = vst.msk [vmem:[%s175 + $0x3d0] sm:$0xff] %vm4305, %v4277
      %4429 = vst.msk [vmem:[%s175 + $0x3d8] sm:$0xff] %vm4305, %v4282
      %4430 = vst.msk [vmem:[%s175 + $0x3e0] sm:$0xff] %vm4305, %v4287
      %4431 = vst.msk [vmem:[%s175 + $0x3e8] sm:$0xff] %vm4305, %v4292
      %4432 = vst.msk [vmem:[%s175 + $0x3f0] sm:$0xff] %vm4305, %v4297
      %4433 = vst.msk [vmem:[%s175 + $0x3f8] sm:$0xff] %vm4305, %v4302
      %s4434 = smul.u32 128, %s14
      %p4435 = scmp.lt.s32.totalorder %s4434, 255
      %s4436 = scalar_select %p4435, %s4434, 255
      %s4437 = smul.addr %s4436, 8
      %s4438 = scalar_lea.vmem %s3, %s4437
      // Predicated region
      $region33: #{tpu_custom_call.1} parent=31 // pred_check
        %p4439 = pneg %p100
      $region34: #{tpu_custom_call.1} parent=31 // pred_check_branch
        %4441 = sbr.rel (%p4439) target = $region36
      $region35: #{tpu_custom_call.1} parent=31 // pred_region
        %s4442 = smul.u32 128, %s14
      $region36: #{tpu_custom_call.1} parent=31 // pred_fallthru
        _
    $region32: #{tpu_custom_call.1} parent=5 // pred_fallthru
      _
    %p4443 = scmp.le.s32.totalorder 2, %s9
    // Predicated region
    $region37: #{tpu_custom_call.1} parent=5 // pred_check
      %p4444 = pneg %p4443
    $region38: #{tpu_custom_call.1} parent=5 // pred_check_branch
      %4446 = sbr.rel (%p4444) target = $region40
    $region39: #{tpu_custom_call.1} parent=5 // pred_region
      %s4447 = ssub.s32 %s9, 2
      // Predicated region
      $region41: #{tpu_custom_call.1} parent=39 // pred_check
        %p4448 = pneg %p106
      $region42: #{tpu_custom_call.1} parent=39 // pred_check_branch
        %4450 = sbr.rel (%p4448) target = $region44
      $region43: #{tpu_custom_call.1} parent=39 // pred_region
        %s4451 = smul.u32 128, %s15
        %p4452 = scmp.lt.s32.totalorder %s4451, 255
        %s4453 = scalar_select %p4452, %s4451, 255
        %s4454 = smul.addr %s4453, 8
        %s4455 = scalar_lea.vmem %s3, %s4454
      $region44: #{tpu_custom_call.1} parent=39 // pred_fallthru
        _
    $region40: #{tpu_custom_call.1} parent=5 // pred_fallthru
      _
  $region6: #{tpu_custom_call.1} parent=0 // loop_footer
    %s13 = sadd.s32 1, %s9
  $region7: #{tpu_custom_call.1} parent=0 // loop_footer_branch
    %8 = sbr.rel target = $region3
  $region8: #{tpu_custom_call.1} parent=0 // loop_exit
    _

</llo_original>
